<compile_context>
chip_gen: v7x
topology: tpu7x:2x2x1
jax: 0.10.0
libtpu: 0.0.40
codegen_flags: <defaults>
</compile_context>

<pallas_src>
import math

import jax
import jax.numpy as jnp
import numpy as np
from jax.experimental import pallas as pl
from jax.experimental.pallas import tpu as pltpu


# ----------------------------------------------------------------------------
# In-kernel math helpers (elementwise math in f32; matmuls take bf16 operands)
# ----------------------------------------------------------------------------
def _gelu_tanh(x):
    # tanh-based GELU: the transcendental goes to the EUP tanh slot instead of
    # a ~10-multiply erf polynomial on the VALU.  Max abs deviation from the
    # exact (erf) GELU is ~1e-3, well inside the bf16-matmul error budget.
    c = 0.7978845608028654  # sqrt(2/pi)
    return 0.5 * x * (1.0 + jnp.tanh(c * (x + 0.044715 * x * x * x)))


def _layernorm(v, g_ref, b_ref, eps=1e-5):
    mu = jnp.mean(v, axis=-1, keepdims=True)
    var = jnp.mean((v - mu) * (v - mu), axis=-1, keepdims=True)
    return (v - mu) * jax.lax.rsqrt(var + eps) * g_ref[...] + b_ref[...]


# ----------------------------------------------------------------------------
# Fused encoder-layer kernel: one block of Bt sequences per grid step.
# ----------------------------------------------------------------------------
def _make_kernel(Bt, S, E, H):
    D = E // H
    f32 = jnp.float32
    bf16 = jnp.bfloat16

    def kernel(x_ref, ln1g, ln1b, wqkv, bqkv, wo_r, bo,
               ln2g, ln2b, w1, b1, w2, b2, o_ref):
        x = x_ref[...]                                     # (M, E) f32, M=Bt*S

        # ---- LayerNorm 1 (f32) ----
        xn = _layernorm(x, ln1g, ln1b)

        # ---- QKV projection: one (M,E)@(E,3E) bf16 matmul, f32 accumulate.
        #      1/sqrt(D) is already folded into the Q weight/bias on the host.
        qkv = jnp.dot(xn.astype(bf16), wqkv[...],
                      preferred_element_type=f32) + bqkv[...]     # (M,3E) f32

        # ---- Multi-head self-attention: heads batched into 3-D dot_generals.
        ctx_parts = []
        for b in range(Bt):                                # small static loop
            blk = qkv[b * S:(b + 1) * S, :]                # (S, 3E) f32
            qs = jnp.stack([blk[:,         h * D:        (h + 1) * D]
                            for h in range(H)], axis=0)    # (H, S, D)
            ks = jnp.stack([blk[:, E     + h * D:E     + (h + 1) * D]
                            for h in range(H)], axis=0)
            vs = jnp.stack([blk[:, 2 * E + h * D:2 * E + (h + 1) * D]
                            for h in range(H)], axis=0)
            # scores (H, S, S) with f32 accumulation
            s = jnp.einsum('hqd,hkd->hqk', qs.astype(bf16), ks.astype(bf16),
                           preferred_element_type=f32)
            s = s - jnp.max(s, axis=-1, keepdims=True)
            p = jnp.exp(s)
            p = p * pl.reciprocal(jnp.sum(p, axis=-1, keepdims=True),
                                  approx=True)
            ctx_parts.append(
                jnp.einsum('hqk,hkd->hqd', p.astype(bf16), vs.astype(bf16),
                           preferred_element_type=f32))    # (H, S, D) f32
        ctx = (jnp.concatenate(ctx_parts, axis=1) if Bt > 1
               else ctx_parts[0])                          # (H, M, D)

        # ---- Output projection: head-batched matmul + head-sum; result is a
        #      lane-dense (M, E) tile (no lane-axis concat of per-head slices).
        attn = jnp.einsum('hmd,hde->hme', ctx.astype(bf16), wo_r[...],
                          preferred_element_type=f32)      # (H, M, E)
        attn = jnp.sum(attn, axis=0) + bo[...]             # (M, E) f32

        # ---- residual 1 (dropout = identity at inference) ----
        x1 = x + attn

        # ---- LayerNorm 2 (f32) ----
        xn2 = _layernorm(x1, ln2g, ln2b)

        # ---- MLP: Linear -> GELU -> Linear (bf16 matmuls, f32 elementwise) --
        h1 = jnp.dot(xn2.astype(bf16), w1[...],
                     preferred_element_type=f32) + b1[...]
        h1 = _gelu_tanh(h1)
        ff = jnp.dot(h1.astype(bf16), w2[...],
                     preferred_element_type=f32) + b2[...]

        # ---- residual 2 (dropout = identity at inference) ----
        o_ref[...] = (x1 + ff).astype(o_ref.dtype)

    return kernel


# ----------------------------------------------------------------------------
# Wrapper
# ----------------------------------------------------------------------------
def _pick_block_batch(B, S, target_rows=128, max_rows=256):
    """How many sequences to process per grid step.

    Prefers the smallest batch block whose row count Bt*S reaches
    `target_rows` (fills the MXU M dimension while keeping the grid long for
    megacore sharding); otherwise the largest block under `max_rows`.  Row
    blocks keep the sublane dim a multiple of 8 unless they cover the array.
    """
    divisors = [d for d in range(1, B + 1) if B % d == 0]
    legal = [d for d in divisors if d == B or (d * S) % 8 == 0]
    for d in legal:
        if target_rows <= d * S <= max_rows:
            return d
    under = [d for d in legal if d * S <= max_rows]
    return under[-1] if under else B


def transformer_encoder_layer(x, kernel_params, num_heads, block_batch=None):
    B, S, E = x.shape
    assert E % num_heads == 0
    Bt = _pick_block_batch(B, S) if block_batch is None else block_batch
    assert B % Bt == 0
    M = Bt * S
    kernel = _make_kernel(Bt, S, E, num_heads)

    # Present the kernel with 2-D, lane-dense (rows, E) tiles.
    x2 = x.reshape(B * S, E)

    def const_spec(p):
        # Full-array block with a constant index map: the pipeline fetches the
        # weight once and keeps it resident across grid steps.
        return pl.BlockSpec(p.shape, lambda i: (0,) * p.ndim)

    out2 = pl.pallas_call(
        kernel,
        out_shape=jax.ShapeDtypeStruct((B * S, E), x.dtype),
        grid=(B // Bt,),
        in_specs=[pl.BlockSpec((M, E), lambda i: (i, 0))]
                 + [const_spec(p) for p in kernel_params],
        out_specs=pl.BlockSpec((M, E), lambda i: (i, 0)),
        compiler_params=pltpu.CompilerParams(
            dimension_semantics=("parallel",),   # v7x megacore: shard batch blocks
            vmem_limit_bytes=32 * 1024 * 1024),
    )(x2, *kernel_params)
    return out2.reshape(B, S, E)


# ----------------------------------------------------------------------------
# Parameter init (natural torch-like layout, f32) + one-time host transform
# ----------------------------------------------------------------------------
def init_params(key, emb_dim, num_heads, mlp_ratio):
    hidden = int(emb_dim * mlp_ratio)
    ks = jax.random.split(key, 8)
    scale = 0.02
    # Weight matrices stored so the math is  x @ W (+ b),
    # i.e. transposed relative to torch's (out, in) layout.
    params = [
        jnp.ones((1, emb_dim), jnp.float32),                                    # ln1 gamma
        jnp.zeros((1, emb_dim), jnp.float32),                                   # ln1 beta
        scale * jax.random.normal(ks[0], (emb_dim, 3 * emb_dim), jnp.float32),  # in_proj W^T
        scale * jax.random.normal(ks[1], (1, 3 * emb_dim), jnp.float32),        # in_proj bias
        scale * jax.random.normal(ks[2], (emb_dim, emb_dim), jnp.float32),      # out_proj W^T
        scale * jax.random.normal(ks[3], (1, emb_dim), jnp.float32),            # out_proj bias
        jnp.ones((1, emb_dim), jnp.float32),                                    # ln2 gamma
        jnp.zeros((1, emb_dim), jnp.float32),                                   # ln2 beta
        scale * jax.random.normal(ks[4], (emb_dim, hidden), jnp.float32),       # mlp W1^T
        scale * jax.random.normal(ks[5], (1, hidden), jnp.float32),             # mlp b1
        scale * jax.random.normal(ks[6], (hidden, emb_dim), jnp.float32),       # mlp W2^T
        scale * jax.random.normal(ks[7], (1, emb_dim), jnp.float32),            # mlp b2
    ]
    return params


def prepare_kernel_params(params, num_heads):
    """One-time host-side transform into the layout the kernel consumes:
      * 1/sqrt(head_dim) folded into the Q projection weight and bias,
      * out-proj weight reshaped to (H, D, E) for the head-batched matmul,
      * large weight matrices cast to bfloat16 (f32 accumulation in-kernel).
    """
    (ln1g, ln1b, wqkv, bqkv, wo, bo, ln2g, ln2b, w1, b1, w2, b2) = params
    E = wqkv.shape[0]
    D = E // num_heads
    scale = 1.0 / math.sqrt(D)
    wqkv = wqkv.at[:, :E].multiply(scale)
    bqkv = bqkv.at[:, :E].multiply(scale)
    wo_r = wo.reshape(num_heads, D, E)
    bf = jnp.bfloat16
    return [ln1g, ln1b, wqkv.astype(bf), bqkv, wo_r.astype(bf), bo,
            ln2g, ln2b, w1.astype(bf), b1, w2.astype(bf), b2]


# ----------------------------------------------------------------------------
# Plain-JAX f32 reference (mirrors the PyTorch module)
# ----------------------------------------------------------------------------
def reference(x, params, num_heads):
    (ln1g, ln1b, wqkv, bqkv, wo, bo, ln2g, ln2b, w1, b1, w2, b2) = params
    B, S, E = x.shape
    D = E // num_heads

    def ln(v, g, b):
        mu = v.mean(-1, keepdims=True)
        var = ((v - mu) ** 2).mean(-1, keepdims=True)
        return (v - mu) / jnp.sqrt(var + 1e-5) * g + b

    xn = ln(x, ln1g, ln1b)
    qkv = xn @ wqkv + bqkv
    q, k, v = jnp.split(qkv, 3, axis=-1)
    q = q.reshape(B, S, num_heads, D).transpose(0, 2, 1, 3)
    k = k.reshape(B, S, num_heads, D).transpose(0, 2, 1, 3)
    v = v.reshape(B, S, num_heads, D).transpose(0, 2, 1, 3)
    s = jnp.einsum("bhqd,bhkd->bhqk", q, k) / math.sqrt(D)
    p = jax.nn.softmax(s, axis=-1)
    a = jnp.einsum("bhqk,bhkd->bhqd", p, v).transpose(0, 2, 1, 3).reshape(B, S, E)
    a = a @ wo + bo
    x1 = x + a
    xn2 = ln(x1, ln2g, ln2b)
    ff = jax.nn.gelu(xn2 @ w1 + b1, approximate=False) @ w2 + b2
    return x1 + ff


# ----------------------------------------------------------------------------
if __name__ == "__main__":
    B, S, E = 2, 8, 128
    NUM_HEADS = 8
    MLP_RATIO = 4.0

    key = jax.random.PRNGKey(0)
    kx, kp = jax.random.split(key)
    x = jax.random.normal(kx, (B, S, E), jnp.float32)
    params = init_params(kp, E, NUM_HEADS, MLP_RATIO)
    kparams = prepare_kernel_params(params, NUM_HEADS)

    out = transformer_encoder_layer(x, kparams, NUM_HEADS)
    out = jax.block_until_ready(out)

    ref = reference(x, params, NUM_HEADS)
    # bf16 matmul operands + tanh-GELU vs the exact-f32 reference: observed
    # errors are O(1e-3); 2e-2 tolerances leave ample margin.
    np.testing.assert_allclose(np.asarray(out), np.asarray(ref),
                               rtol=2e-2, atol=2e-2)
    print("KERNEL_OK")
</pallas_src>

<mosaic_0001>
module attributes {stable_mosaic.version = 11 : i64} {
  func.func @kernel(%arg0: i32, %arg1: memref<16x128xf32, #tpu.memory_space<vmem>>, %arg2: memref<1x128xf32, #tpu.memory_space<vmem>>, %arg3: memref<1x128xf32, #tpu.memory_space<vmem>>, %arg4: memref<128x384xbf16, #tpu.memory_space<vmem>>, %arg5: memref<1x384xf32, #tpu.memory_space<vmem>>, %arg6: memref<8x16x128xbf16, #tpu.memory_space<vmem>>, %arg7: memref<1x128xf32, #tpu.memory_space<vmem>>, %arg8: memref<1x128xf32, #tpu.memory_space<vmem>>, %arg9: memref<1x128xf32, #tpu.memory_space<vmem>>, %arg10: memref<128x512xbf16, #tpu.memory_space<vmem>>, %arg11: memref<1x512xf32, #tpu.memory_space<vmem>>, %arg12: memref<512x128xbf16, #tpu.memory_space<vmem>>, %arg13: memref<1x128xf32, #tpu.memory_space<vmem>>, %arg14: memref<16x128xf32, #tpu.memory_space<vmem>>) attributes {dimension_semantics = [#tpu.dimension_semantics<parallel>], iteration_bounds = array<i64: 1>, scalar_prefetch = 0 : i64, scratch_operands = 0 : i64, tpu.core_type = #tpu.core_type<tc>, window_params = [{transform_indices = @transform_0, window_bounds = array<i64: 16, 128>}, {pipeline_mode = #tpu.pipeline_mode<synchronous>, transform_indices = @transform_1, window_bounds = array<i64: 1, 128>}, {pipeline_mode = #tpu.pipeline_mode<synchronous>, transform_indices = @transform_2, window_bounds = array<i64: 1, 128>}, {pipeline_mode = #tpu.pipeline_mode<synchronous>, transform_indices = @transform_3, window_bounds = array<i64: 128, 384>}, {pipeline_mode = #tpu.pipeline_mode<synchronous>, transform_indices = @transform_4, window_bounds = array<i64: 1, 384>}, {pipeline_mode = #tpu.pipeline_mode<synchronous>, transform_indices = @transform_5, window_bounds = array<i64: 8, 16, 128>}, {pipeline_mode = #tpu.pipeline_mode<synchronous>, transform_indices = @transform_6, window_bounds = array<i64: 1, 128>}, {pipeline_mode = #tpu.pipeline_mode<synchronous>, transform_indices = @transform_7, window_bounds = array<i64: 1, 128>}, {pipeline_mode = #tpu.pipeline_mode<synchronous>, transform_indices = @transform_8, window_bounds = array<i64: 1, 128>}, {pipeline_mode = #tpu.pipeline_mode<synchronous>, transform_indices = @transform_9, window_bounds = array<i64: 128, 512>}, {pipeline_mode = #tpu.pipeline_mode<synchronous>, transform_indices = @transform_10, window_bounds = array<i64: 1, 512>}, {pipeline_mode = #tpu.pipeline_mode<synchronous>, transform_indices = @transform_11, window_bounds = array<i64: 512, 128>}, {pipeline_mode = #tpu.pipeline_mode<synchronous>, transform_indices = @transform_12, window_bounds = array<i64: 1, 128>}, {transform_indices = @transform_13, window_bounds = array<i64: 16, 128>}]} {
    %c0 = arith.constant 0 : index
    %c0_0 = arith.constant 0 : index
    %0 = vector.load %arg1[%c0, %c0_0] : memref<16x128xf32, #tpu.memory_space<vmem>>, vector<16x128xf32>
    %cst = arith.constant dense<0.000000e+00> : vector<16xf32>
    %1 = vector.multi_reduction <add>, %0, %cst [1] : vector<16x128xf32> to vector<16xf32>
    %2 = vector.shape_cast %1 : vector<16xf32> to vector<16x1xf32>
    %cst_1 = arith.constant 1.280000e+02 : f32
    %3 = vector.broadcast %cst_1 : f32 to vector<16x1xf32>
    %4 = arith.divf %2, %3 : vector<16x1xf32>
    %5 = vector.broadcast %4 : vector<16x1xf32> to vector<16x128xf32>
    %6 = arith.subf %0, %5 : vector<16x128xf32>
    %7 = vector.broadcast %4 : vector<16x1xf32> to vector<16x128xf32>
    %8 = arith.subf %0, %7 : vector<16x128xf32>
    %9 = arith.mulf %6, %8 : vector<16x128xf32>
    %cst_2 = arith.constant dense<0.000000e+00> : vector<16xf32>
    %10 = vector.multi_reduction <add>, %9, %cst_2 [1] : vector<16x128xf32> to vector<16xf32>
    %11 = vector.shape_cast %10 : vector<16xf32> to vector<16x1xf32>
    %cst_3 = arith.constant 1.280000e+02 : f32
    %12 = vector.broadcast %cst_3 : f32 to vector<16x1xf32>
    %13 = arith.divf %11, %12 : vector<16x1xf32>
    %14 = vector.broadcast %4 : vector<16x1xf32> to vector<16x128xf32>
    %15 = arith.subf %0, %14 : vector<16x128xf32>
    %cst_4 = arith.constant 9.99999974E-6 : f32
    %16 = vector.broadcast %cst_4 : f32 to vector<16x1xf32>
    %17 = arith.addf %13, %16 : vector<16x1xf32>
    %18 = math.rsqrt %17 : vector<16x1xf32>
    %19 = vector.broadcast %18 : vector<16x1xf32> to vector<16x128xf32>
    %20 = arith.mulf %15, %19 : vector<16x128xf32>
    %c0_5 = arith.constant 0 : index
    %c0_6 = arith.constant 0 : index
    %21 = vector.load %arg2[%c0_5, %c0_6] : memref<1x128xf32, #tpu.memory_space<vmem>>, vector<1x128xf32>
    %22 = vector.broadcast %21 : vector<1x128xf32> to vector<16x128xf32>
    %23 = arith.mulf %20, %22 : vector<16x128xf32>
    %c0_7 = arith.constant 0 : index
    %c0_8 = arith.constant 0 : index
    %24 = vector.load %arg3[%c0_7, %c0_8] : memref<1x128xf32, #tpu.memory_space<vmem>>, vector<1x128xf32>
    %25 = vector.broadcast %24 : vector<1x128xf32> to vector<16x128xf32>
    %26 = arith.addf %23, %25 : vector<16x128xf32>
    %27 = arith.truncf %26 : vector<16x128xf32> to vector<16x128xbf16>
    %c0_9 = arith.constant 0 : index
    %c0_10 = arith.constant 0 : index
    %28 = vector.load %arg4[%c0_9, %c0_10] : memref<128x384xbf16, #tpu.memory_space<vmem>>, vector<128x384xbf16>
    %cst_11 = arith.constant dense<0.000000e+00> : vector<16x384xf32>
    %29 = tpu.matmul %27, %28, %cst_11 {dimension_numbers = #tpu.dot_dimension_numbers<[1], [0], [0], [1], [0, 0, 1, 1], [], []>} : vector<16x128xbf16>, vector<128x384xbf16>, vector<16x384xf32> -> vector<16x384xf32>
    %c0_12 = arith.constant 0 : index
    %c0_13 = arith.constant 0 : index
    %30 = vector.load %arg5[%c0_12, %c0_13] : memref<1x384xf32, #tpu.memory_space<vmem>>, vector<1x384xf32>
    %31 = vector.broadcast %30 : vector<1x384xf32> to vector<16x384xf32>
    %32 = arith.addf %29, %31 : vector<16x384xf32>
    %33 = vector.extract_strided_slice %32 {offsets = [0, 0], sizes = [8, 384], strides = [1, 1]} : vector<16x384xf32> to vector<8x384xf32>
    %34 = vector.extract_strided_slice %33 {offsets = [0, 0], sizes = [8, 16], strides = [1, 1]} : vector<8x384xf32> to vector<8x16xf32>
    %35 = vector.extract_strided_slice %33 {offsets = [0, 16], sizes = [8, 16], strides = [1, 1]} : vector<8x384xf32> to vector<8x16xf32>
    %36 = vector.extract_strided_slice %33 {offsets = [0, 32], sizes = [8, 16], strides = [1, 1]} : vector<8x384xf32> to vector<8x16xf32>
    %37 = vector.extract_strided_slice %33 {offsets = [0, 48], sizes = [8, 16], strides = [1, 1]} : vector<8x384xf32> to vector<8x16xf32>
    %38 = vector.extract_strided_slice %33 {offsets = [0, 64], sizes = [8, 16], strides = [1, 1]} : vector<8x384xf32> to vector<8x16xf32>
    %39 = vector.extract_strided_slice %33 {offsets = [0, 80], sizes = [8, 16], strides = [1, 1]} : vector<8x384xf32> to vector<8x16xf32>
    %40 = vector.extract_strided_slice %33 {offsets = [0, 96], sizes = [8, 16], strides = [1, 1]} : vector<8x384xf32> to vector<8x16xf32>
    %41 = vector.extract_strided_slice %33 {offsets = [0, 112], sizes = [8, 16], strides = [1, 1]} : vector<8x384xf32> to vector<8x16xf32>
    %42 = vector.shape_cast %34 : vector<8x16xf32> to vector<1x8x16xf32>
    %43 = vector.shape_cast %35 : vector<8x16xf32> to vector<1x8x16xf32>
    %44 = vector.shape_cast %36 : vector<8x16xf32> to vector<1x8x16xf32>
    %45 = vector.shape_cast %37 : vector<8x16xf32> to vector<1x8x16xf32>
    %46 = vector.shape_cast %38 : vector<8x16xf32> to vector<1x8x16xf32>
    %47 = vector.shape_cast %39 : vector<8x16xf32> to vector<1x8x16xf32>
    %48 = vector.shape_cast %40 : vector<8x16xf32> to vector<1x8x16xf32>
    %49 = vector.shape_cast %41 : vector<8x16xf32> to vector<1x8x16xf32>
    %50 = tpu.concatenate %42, %43, %44, %45, %46, %47, %48, %49 in 0 : vector<1x8x16xf32>, vector<1x8x16xf32>, vector<1x8x16xf32>, vector<1x8x16xf32>, vector<1x8x16xf32>, vector<1x8x16xf32>, vector<1x8x16xf32>, vector<1x8x16xf32> -> vector<8x8x16xf32>
    %51 = vector.extract_strided_slice %33 {offsets = [0, 128], sizes = [8, 16], strides = [1, 1]} : vector<8x384xf32> to vector<8x16xf32>
    %52 = vector.extract_strided_slice %33 {offsets = [0, 144], sizes = [8, 16], strides = [1, 1]} : vector<8x384xf32> to vector<8x16xf32>
    %53 = vector.extract_strided_slice %33 {offsets = [0, 160], sizes = [8, 16], strides = [1, 1]} : vector<8x384xf32> to vector<8x16xf32>
    %54 = vector.extract_strided_slice %33 {offsets = [0, 176], sizes = [8, 16], strides = [1, 1]} : vector<8x384xf32> to vector<8x16xf32>
    %55 = vector.extract_strided_slice %33 {offsets = [0, 192], sizes = [8, 16], strides = [1, 1]} : vector<8x384xf32> to vector<8x16xf32>
    %56 = vector.extract_strided_slice %33 {offsets = [0, 208], sizes = [8, 16], strides = [1, 1]} : vector<8x384xf32> to vector<8x16xf32>
    %57 = vector.extract_strided_slice %33 {offsets = [0, 224], sizes = [8, 16], strides = [1, 1]} : vector<8x384xf32> to vector<8x16xf32>
    %58 = vector.extract_strided_slice %33 {offsets = [0, 240], sizes = [8, 16], strides = [1, 1]} : vector<8x384xf32> to vector<8x16xf32>
    %59 = vector.shape_cast %51 : vector<8x16xf32> to vector<1x8x16xf32>
    %60 = vector.shape_cast %52 : vector<8x16xf32> to vector<1x8x16xf32>
    %61 = vector.shape_cast %53 : vector<8x16xf32> to vector<1x8x16xf32>
    %62 = vector.shape_cast %54 : vector<8x16xf32> to vector<1x8x16xf32>
    %63 = vector.shape_cast %55 : vector<8x16xf32> to vector<1x8x16xf32>
    %64 = vector.shape_cast %56 : vector<8x16xf32> to vector<1x8x16xf32>
    %65 = vector.shape_cast %57 : vector<8x16xf32> to vector<1x8x16xf32>
    %66 = vector.shape_cast %58 : vector<8x16xf32> to vector<1x8x16xf32>
    %67 = tpu.concatenate %59, %60, %61, %62, %63, %64, %65, %66 in 0 : vector<1x8x16xf32>, vector<1x8x16xf32>, vector<1x8x16xf32>, vector<1x8x16xf32>, vector<1x8x16xf32>, vector<1x8x16xf32>, vector<1x8x16xf32>, vector<1x8x16xf32> -> vector<8x8x16xf32>
    %68 = vector.extract_strided_slice %33 {offsets = [0, 256], sizes = [8, 16], strides = [1, 1]} : vector<8x384xf32> to vector<8x16xf32>
    %69 = vector.extract_strided_slice %33 {offsets = [0, 272], sizes = [8, 16], strides = [1, 1]} : vector<8x384xf32> to vector<8x16xf32>
    %70 = vector.extract_strided_slice %33 {offsets = [0, 288], sizes = [8, 16], strides = [1, 1]} : vector<8x384xf32> to vector<8x16xf32>
    %71 = vector.extract_strided_slice %33 {offsets = [0, 304], sizes = [8, 16], strides = [1, 1]} : vector<8x384xf32> to vector<8x16xf32>
    %72 = vector.extract_strided_slice %33 {offsets = [0, 320], sizes = [8, 16], strides = [1, 1]} : vector<8x384xf32> to vector<8x16xf32>
    %73 = vector.extract_strided_slice %33 {offsets = [0, 336], sizes = [8, 16], strides = [1, 1]} : vector<8x384xf32> to vector<8x16xf32>
    %74 = vector.extract_strided_slice %33 {offsets = [0, 352], sizes = [8, 16], strides = [1, 1]} : vector<8x384xf32> to vector<8x16xf32>
    %75 = vector.extract_strided_slice %33 {offsets = [0, 368], sizes = [8, 16], strides = [1, 1]} : vector<8x384xf32> to vector<8x16xf32>
    %76 = vector.shape_cast %68 : vector<8x16xf32> to vector<1x8x16xf32>
    %77 = vector.shape_cast %69 : vector<8x16xf32> to vector<1x8x16xf32>
    %78 = vector.shape_cast %70 : vector<8x16xf32> to vector<1x8x16xf32>
    %79 = vector.shape_cast %71 : vector<8x16xf32> to vector<1x8x16xf32>
    %80 = vector.shape_cast %72 : vector<8x16xf32> to vector<1x8x16xf32>
    %81 = vector.shape_cast %73 : vector<8x16xf32> to vector<1x8x16xf32>
    %82 = vector.shape_cast %74 : vector<8x16xf32> to vector<1x8x16xf32>
    %83 = vector.shape_cast %75 : vector<8x16xf32> to vector<1x8x16xf32>
    %84 = tpu.concatenate %76, %77, %78, %79, %80, %81, %82, %83 in 0 : vector<1x8x16xf32>, vector<1x8x16xf32>, vector<1x8x16xf32>, vector<1x8x16xf32>, vector<1x8x16xf32>, vector<1x8x16xf32>, vector<1x8x16xf32>, vector<1x8x16xf32> -> vector<8x8x16xf32>
    %85 = arith.truncf %50 : vector<8x8x16xf32> to vector<8x8x16xbf16>
    %86 = arith.truncf %67 : vector<8x8x16xf32> to vector<8x8x16xbf16>
    "tpu.trace_start"() <{level = 10 : i32, message = "hqd,hkd->hqk"}> : () -> ()
    %cst_14 = arith.constant dense<0.000000e+00> : vector<8x8x8xf32>
    %87 = tpu.matmul %85, %86, %cst_14 {dimension_numbers = #tpu.dot_dimension_numbers<[2], [2], [1], [1], [0, 0, 0, 1, 1, 1], [0], [0]>} : vector<8x8x16xbf16>, vector<8x8x16xbf16>, vector<8x8x8xf32> -> vector<8x8x8xf32>
    "tpu.trace_stop"() : () -> ()
    %cst_15 = arith.constant dense<0xFF800000> : vector<8x8xf32>
    %88 = vector.multi_reduction <maximumf>, %87, %cst_15 [2] : vector<8x8x8xf32> to vector<8x8xf32>
    %89 = vector.shape_cast %88 : vector<8x8xf32> to vector<8x8x1xf32>
    %90 = vector.broadcast %89 : vector<8x8x1xf32> to vector<8x8x8xf32>
    %91 = arith.subf %87, %90 : vector<8x8x8xf32>
    %92 = math.exp %91 : vector<8x8x8xf32>
    %cst_16 = arith.constant dense<0.000000e+00> : vector<8x8xf32>
    %93 = vector.multi_reduction <add>, %92, %cst_16 [2] : vector<8x8x8xf32> to vector<8x8xf32>
    %94 = vector.shape_cast %93 : vector<8x8xf32> to vector<8x8x1xf32>
    %95 = tpu.reciprocal %94 {approx = true} : vector<8x8x1xf32> -> vector<8x8x1xf32>
    %96 = vector.broadcast %95 : vector<8x8x1xf32> to vector<8x8x8xf32>
    %97 = arith.mulf %92, %96 : vector<8x8x8xf32>
    %98 = arith.truncf %97 : vector<8x8x8xf32> to vector<8x8x8xbf16>
    %99 = arith.truncf %84 : vector<8x8x16xf32> to vector<8x8x16xbf16>
    "tpu.trace_start"() <{level = 10 : i32, message = "hqk,hkd->hqd"}> : () -> ()
    %cst_17 = arith.constant dense<0.000000e+00> : vector<8x8x16xf32>
    %100 = tpu.matmul %98, %99, %cst_17 {dimension_numbers = #tpu.dot_dimension_numbers<[2], [1], [1], [2], [0, 0, 0, 1, 1, 2], [0], [0]>} : vector<8x8x8xbf16>, vector<8x8x16xbf16>, vector<8x8x16xf32> -> vector<8x8x16xf32>
    "tpu.trace_stop"() : () -> ()
    %101 = vector.extract_strided_slice %32 {offsets = [8, 0], sizes = [8, 384], strides = [1, 1]} : vector<16x384xf32> to vector<8x384xf32>
    %102 = vector.extract_strided_slice %101 {offsets = [0, 0], sizes = [8, 16], strides = [1, 1]} : vector<8x384xf32> to vector<8x16xf32>
    %103 = vector.extract_strided_slice %101 {offsets = [0, 16], sizes = [8, 16], strides = [1, 1]} : vector<8x384xf32> to vector<8x16xf32>
    %104 = vector.extract_strided_slice %101 {offsets = [0, 32], sizes = [8, 16], strides = [1, 1]} : vector<8x384xf32> to vector<8x16xf32>
    %105 = vector.extract_strided_slice %101 {offsets = [0, 48], sizes = [8, 16], strides = [1, 1]} : vector<8x384xf32> to vector<8x16xf32>
    %106 = vector.extract_strided_slice %101 {offsets = [0, 64], sizes = [8, 16], strides = [1, 1]} : vector<8x384xf32> to vector<8x16xf32>
    %107 = vector.extract_strided_slice %101 {offsets = [0, 80], sizes = [8, 16], strides = [1, 1]} : vector<8x384xf32> to vector<8x16xf32>
    %108 = vector.extract_strided_slice %101 {offsets = [0, 96], sizes = [8, 16], strides = [1, 1]} : vector<8x384xf32> to vector<8x16xf32>
    %109 = vector.extract_strided_slice %101 {offsets = [0, 112], sizes = [8, 16], strides = [1, 1]} : vector<8x384xf32> to vector<8x16xf32>
    %110 = vector.shape_cast %102 : vector<8x16xf32> to vector<1x8x16xf32>
    %111 = vector.shape_cast %103 : vector<8x16xf32> to vector<1x8x16xf32>
    %112 = vector.shape_cast %104 : vector<8x16xf32> to vector<1x8x16xf32>
    %113 = vector.shape_cast %105 : vector<8x16xf32> to vector<1x8x16xf32>
    %114 = vector.shape_cast %106 : vector<8x16xf32> to vector<1x8x16xf32>
    %115 = vector.shape_cast %107 : vector<8x16xf32> to vector<1x8x16xf32>
    %116 = vector.shape_cast %108 : vector<8x16xf32> to vector<1x8x16xf32>
    %117 = vector.shape_cast %109 : vector<8x16xf32> to vector<1x8x16xf32>
    %118 = tpu.concatenate %110, %111, %112, %113, %114, %115, %116, %117 in 0 : vector<1x8x16xf32>, vector<1x8x16xf32>, vector<1x8x16xf32>, vector<1x8x16xf32>, vector<1x8x16xf32>, vector<1x8x16xf32>, vector<1x8x16xf32>, vector<1x8x16xf32> -> vector<8x8x16xf32>
    %119 = vector.extract_strided_slice %101 {offsets = [0, 128], sizes = [8, 16], strides = [1, 1]} : vector<8x384xf32> to vector<8x16xf32>
    %120 = vector.extract_strided_slice %101 {offsets = [0, 144], sizes = [8, 16], strides = [1, 1]} : vector<8x384xf32> to vector<8x16xf32>
    %121 = vector.extract_strided_slice %101 {offsets = [0, 160], sizes = [8, 16], strides = [1, 1]} : vector<8x384xf32> to vector<8x16xf32>
    %122 = vector.extract_strided_slice %101 {offsets = [0, 176], sizes = [8, 16], strides = [1, 1]} : vector<8x384xf32> to vector<8x16xf32>
    %123 = vector.extract_strided_slice %101 {offsets = [0, 192], sizes = [8, 16], strides = [1, 1]} : vector<8x384xf32> to vector<8x16xf32>
    %124 = vector.extract_strided_slice %101 {offsets = [0, 208], sizes = [8, 16], strides = [1, 1]} : vector<8x384xf32> to vector<8x16xf32>
    %125 = vector.extract_strided_slice %101 {offsets = [0, 224], sizes = [8, 16], strides = [1, 1]} : vector<8x384xf32> to vector<8x16xf32>
    %126 = vector.extract_strided_slice %101 {offsets = [0, 240], sizes = [8, 16], strides = [1, 1]} : vector<8x384xf32> to vector<8x16xf32>
    %127 = vector.shape_cast %119 : vector<8x16xf32> to vector<1x8x16xf32>
    %128 = vector.shape_cast %120 : vector<8x16xf32> to vector<1x8x16xf32>
    %129 = vector.shape_cast %121 : vector<8x16xf32> to vector<1x8x16xf32>
    %130 = vector.shape_cast %122 : vector<8x16xf32> to vector<1x8x16xf32>
    %131 = vector.shape_cast %123 : vector<8x16xf32> to vector<1x8x16xf32>
    %132 = vector.shape_cast %124 : vector<8x16xf32> to vector<1x8x16xf32>
    %133 = vector.shape_cast %125 : vector<8x16xf32> to vector<1x8x16xf32>
    %134 = vector.shape_cast %126 : vector<8x16xf32> to vector<1x8x16xf32>
    %135 = tpu.concatenate %127, %128, %129, %130, %131, %132, %133, %134 in 0 : vector<1x8x16xf32>, vector<1x8x16xf32>, vector<1x8x16xf32>, vector<1x8x16xf32>, vector<1x8x16xf32>, vector<1x8x16xf32>, vector<1x8x16xf32>, vector<1x8x16xf32> -> vector<8x8x16xf32>
    %136 = vector.extract_strided_slice %101 {offsets = [0, 256], sizes = [8, 16], strides = [1, 1]} : vector<8x384xf32> to vector<8x16xf32>
    %137 = vector.extract_strided_slice %101 {offsets = [0, 272], sizes = [8, 16], strides = [1, 1]} : vector<8x384xf32> to vector<8x16xf32>
    %138 = vector.extract_strided_slice %101 {offsets = [0, 288], sizes = [8, 16], strides = [1, 1]} : vector<8x384xf32> to vector<8x16xf32>
    %139 = vector.extract_strided_slice %101 {offsets = [0, 304], sizes = [8, 16], strides = [1, 1]} : vector<8x384xf32> to vector<8x16xf32>
    %140 = vector.extract_strided_slice %101 {offsets = [0, 320], sizes = [8, 16], strides = [1, 1]} : vector<8x384xf32> to vector<8x16xf32>
    %141 = vector.extract_strided_slice %101 {offsets = [0, 336], sizes = [8, 16], strides = [1, 1]} : vector<8x384xf32> to vector<8x16xf32>
    %142 = vector.extract_strided_slice %101 {offsets = [0, 352], sizes = [8, 16], strides = [1, 1]} : vector<8x384xf32> to vector<8x16xf32>
    %143 = vector.extract_strided_slice %101 {offsets = [0, 368], sizes = [8, 16], strides = [1, 1]} : vector<8x384xf32> to vector<8x16xf32>
    %144 = vector.shape_cast %136 : vector<8x16xf32> to vector<1x8x16xf32>
    %145 = vector.shape_cast %137 : vector<8x16xf32> to vector<1x8x16xf32>
    %146 = vector.shape_cast %138 : vector<8x16xf32> to vector<1x8x16xf32>
    %147 = vector.shape_cast %139 : vector<8x16xf32> to vector<1x8x16xf32>
    %148 = vector.shape_cast %140 : vector<8x16xf32> to vector<1x8x16xf32>
    %149 = vector.shape_cast %141 : vector<8x16xf32> to vector<1x8x16xf32>
    %150 = vector.shape_cast %142 : vector<8x16xf32> to vector<1x8x16xf32>
    %151 = vector.shape_cast %143 : vector<8x16xf32> to vector<1x8x16xf32>
    %152 = tpu.concatenate %144, %145, %146, %147, %148, %149, %150, %151 in 0 : vector<1x8x16xf32>, vector<1x8x16xf32>, vector<1x8x16xf32>, vector<1x8x16xf32>, vector<1x8x16xf32>, vector<1x8x16xf32>, vector<1x8x16xf32>, vector<1x8x16xf32> -> vector<8x8x16xf32>
    %153 = arith.truncf %118 : vector<8x8x16xf32> to vector<8x8x16xbf16>
    %154 = arith.truncf %135 : vector<8x8x16xf32> to vector<8x8x16xbf16>
    "tpu.trace_start"() <{level = 10 : i32, message = "hqd,hkd->hqk"}> : () -> ()
    %cst_18 = arith.constant dense<0.000000e+00> : vector<8x8x8xf32>
    %155 = tpu.matmul %153, %154, %cst_18 {dimension_numbers = #tpu.dot_dimension_numbers<[2], [2], [1], [1], [0, 0, 0, 1, 1, 1], [0], [0]>} : vector<8x8x16xbf16>, vector<8x8x16xbf16>, vector<8x8x8xf32> -> vector<8x8x8xf32>
    "tpu.trace_stop"() : () -> ()
    %cst_19 = arith.constant dense<0xFF800000> : vector<8x8xf32>
    %156 = vector.multi_reduction <maximumf>, %155, %cst_19 [2] : vector<8x8x8xf32> to vector<8x8xf32>
    %157 = vector.shape_cast %156 : vector<8x8xf32> to vector<8x8x1xf32>
    %158 = vector.broadcast %157 : vector<8x8x1xf32> to vector<8x8x8xf32>
    %159 = arith.subf %155, %158 : vector<8x8x8xf32>
    %160 = math.exp %159 : vector<8x8x8xf32>
    %cst_20 = arith.constant dense<0.000000e+00> : vector<8x8xf32>
    %161 = vector.multi_reduction <add>, %160, %cst_20 [2] : vector<8x8x8xf32> to vector<8x8xf32>
    %162 = vector.shape_cast %161 : vector<8x8xf32> to vector<8x8x1xf32>
    %163 = tpu.reciprocal %162 {approx = true} : vector<8x8x1xf32> -> vector<8x8x1xf32>
    %164 = vector.broadcast %163 : vector<8x8x1xf32> to vector<8x8x8xf32>
    %165 = arith.mulf %160, %164 : vector<8x8x8xf32>
    %166 = arith.truncf %165 : vector<8x8x8xf32> to vector<8x8x8xbf16>
    %167 = arith.truncf %152 : vector<8x8x16xf32> to vector<8x8x16xbf16>
    "tpu.trace_start"() <{level = 10 : i32, message = "hqk,hkd->hqd"}> : () -> ()
    %cst_21 = arith.constant dense<0.000000e+00> : vector<8x8x16xf32>
    %168 = tpu.matmul %166, %167, %cst_21 {dimension_numbers = #tpu.dot_dimension_numbers<[2], [1], [1], [2], [0, 0, 0, 1, 1, 2], [0], [0]>} : vector<8x8x8xbf16>, vector<8x8x16xbf16>, vector<8x8x16xf32> -> vector<8x8x16xf32>
    "tpu.trace_stop"() : () -> ()
    %169 = tpu.concatenate %100, %168 in 1 : vector<8x8x16xf32>, vector<8x8x16xf32> -> vector<8x16x16xf32>
    %170 = arith.truncf %169 : vector<8x16x16xf32> to vector<8x16x16xbf16>
    %c0_22 = arith.constant 0 : index
    %c0_23 = arith.constant 0 : index
    %c0_24 = arith.constant 0 : index
    %171 = vector.load %arg6[%c0_22, %c0_23, %c0_24] : memref<8x16x128xbf16, #tpu.memory_space<vmem>>, vector<8x16x128xbf16>
    "tpu.trace_start"() <{level = 10 : i32, message = "hmd,hde->hme"}> : () -> ()
    %cst_25 = arith.constant dense<0.000000e+00> : vector<8x16x128xf32>
    %172 = tpu.matmul %170, %171, %cst_25 {dimension_numbers = #tpu.dot_dimension_numbers<[2], [1], [1], [2], [0, 0, 0, 1, 1, 2], [0], [0]>} : vector<8x16x16xbf16>, vector<8x16x128xbf16>, vector<8x16x128xf32> -> vector<8x16x128xf32>
    "tpu.trace_stop"() : () -> ()
    %cst_26 = arith.constant dense<0.000000e+00> : vector<16x128xf32>
    %173 = vector.multi_reduction <add>, %172, %cst_26 [0] : vector<8x16x128xf32> to vector<16x128xf32>
    %c0_27 = arith.constant 0 : index
    %c0_28 = arith.constant 0 : index
    %174 = vector.load %arg7[%c0_27, %c0_28] : memref<1x128xf32, #tpu.memory_space<vmem>>, vector<1x128xf32>
    %175 = vector.broadcast %174 : vector<1x128xf32> to vector<16x128xf32>
    %176 = arith.addf %173, %175 : vector<16x128xf32>
    %177 = arith.addf %0, %176 : vector<16x128xf32>
    %cst_29 = arith.constant dense<0.000000e+00> : vector<16xf32>
    %178 = vector.multi_reduction <add>, %177, %cst_29 [1] : vector<16x128xf32> to vector<16xf32>
    %179 = vector.shape_cast %178 : vector<16xf32> to vector<16x1xf32>
    %cst_30 = arith.constant 1.280000e+02 : f32
    %180 = vector.broadcast %cst_30 : f32 to vector<16x1xf32>
    %181 = arith.divf %179, %180 : vector<16x1xf32>
    %182 = vector.broadcast %181 : vector<16x1xf32> to vector<16x128xf32>
    %183 = arith.subf %177, %182 : vector<16x128xf32>
    %184 = vector.broadcast %181 : vector<16x1xf32> to vector<16x128xf32>
    %185 = arith.subf %177, %184 : vector<16x128xf32>
    %186 = arith.mulf %183, %185 : vector<16x128xf32>
    %cst_31 = arith.constant dense<0.000000e+00> : vector<16xf32>
    %187 = vector.multi_reduction <add>, %186, %cst_31 [1] : vector<16x128xf32> to vector<16xf32>
    %188 = vector.shape_cast %187 : vector<16xf32> to vector<16x1xf32>
    %cst_32 = arith.constant 1.280000e+02 : f32
    %189 = vector.broadcast %cst_32 : f32 to vector<16x1xf32>
    %190 = arith.divf %188, %189 : vector<16x1xf32>
    %191 = vector.broadcast %181 : vector<16x1xf32> to vector<16x128xf32>
    %192 = arith.subf %177, %191 : vector<16x128xf32>
    %cst_33 = arith.constant 9.99999974E-6 : f32
    %193 = vector.broadcast %cst_33 : f32 to vector<16x1xf32>
    %194 = arith.addf %190, %193 : vector<16x1xf32>
    %195 = math.rsqrt %194 : vector<16x1xf32>
    %196 = vector.broadcast %195 : vector<16x1xf32> to vector<16x128xf32>
    %197 = arith.mulf %192, %196 : vector<16x128xf32>
    %c0_34 = arith.constant 0 : index
    %c0_35 = arith.constant 0 : index
    %198 = vector.load %arg8[%c0_34, %c0_35] : memref<1x128xf32, #tpu.memory_space<vmem>>, vector<1x128xf32>
    %199 = vector.broadcast %198 : vector<1x128xf32> to vector<16x128xf32>
    %200 = arith.mulf %197, %199 : vector<16x128xf32>
    %c0_36 = arith.constant 0 : index
    %c0_37 = arith.constant 0 : index
    %201 = vector.load %arg9[%c0_36, %c0_37] : memref<1x128xf32, #tpu.memory_space<vmem>>, vector<1x128xf32>
    %202 = vector.broadcast %201 : vector<1x128xf32> to vector<16x128xf32>
    %203 = arith.addf %200, %202 : vector<16x128xf32>
    %204 = arith.truncf %203 : vector<16x128xf32> to vector<16x128xbf16>
    %c0_38 = arith.constant 0 : index
    %c0_39 = arith.constant 0 : index
    %205 = vector.load %arg10[%c0_38, %c0_39] : memref<128x512xbf16, #tpu.memory_space<vmem>>, vector<128x512xbf16>
    %cst_40 = arith.constant dense<0.000000e+00> : vector<16x512xf32>
    %206 = tpu.matmul %204, %205, %cst_40 {dimension_numbers = #tpu.dot_dimension_numbers<[1], [0], [0], [1], [0, 0, 1, 1], [], []>} : vector<16x128xbf16>, vector<128x512xbf16>, vector<16x512xf32> -> vector<16x512xf32>
    %c0_41 = arith.constant 0 : index
    %c0_42 = arith.constant 0 : index
    %207 = vector.load %arg11[%c0_41, %c0_42] : memref<1x512xf32, #tpu.memory_space<vmem>>, vector<1x512xf32>
    %208 = vector.broadcast %207 : vector<1x512xf32> to vector<16x512xf32>
    %209 = arith.addf %206, %208 : vector<16x512xf32>
    %cst_43 = arith.constant 5.000000e-01 : f32
    %210 = vector.broadcast %cst_43 : f32 to vector<16x512xf32>
    %211 = arith.mulf %210, %209 : vector<16x512xf32>
    %cst_44 = arith.constant 4.471500e-02 : f32
    %212 = vector.broadcast %cst_44 : f32 to vector<16x512xf32>
    %213 = arith.mulf %212, %209 : vector<16x512xf32>
    %214 = arith.mulf %213, %209 : vector<16x512xf32>
    %215 = arith.mulf %214, %209 : vector<16x512xf32>
    %216 = arith.addf %209, %215 : vector<16x512xf32>
    %cst_45 = arith.constant 0.797884583 : f32
    %217 = vector.broadcast %cst_45 : f32 to vector<16x512xf32>
    %218 = arith.mulf %217, %216 : vector<16x512xf32>
    %219 = math.tanh %218 : vector<16x512xf32>
    %cst_46 = arith.constant 1.000000e+00 : f32
    %220 = vector.broadcast %cst_46 : f32 to vector<16x512xf32>
    %221 = arith.addf %220, %219 : vector<16x512xf32>
    %222 = arith.mulf %211, %221 : vector<16x512xf32>
    %223 = arith.truncf %222 : vector<16x512xf32> to vector<16x512xbf16>
    %c0_47 = arith.constant 0 : index
    %c0_48 = arith.constant 0 : index
    %224 = vector.load %arg12[%c0_47, %c0_48] : memref<512x128xbf16, #tpu.memory_space<vmem>>, vector<512x128xbf16>
    %cst_49 = arith.constant dense<0.000000e+00> : vector<16x128xf32>
    %225 = tpu.matmul %223, %224, %cst_49 {dimension_numbers = #tpu.dot_dimension_numbers<[1], [0], [0], [1], [0, 0, 1, 1], [], []>} : vector<16x512xbf16>, vector<512x128xbf16>, vector<16x128xf32> -> vector<16x128xf32>
    %c0_50 = arith.constant 0 : index
    %c0_51 = arith.constant 0 : index
    %226 = vector.load %arg13[%c0_50, %c0_51] : memref<1x128xf32, #tpu.memory_space<vmem>>, vector<1x128xf32>
    %227 = vector.broadcast %226 : vector<1x128xf32> to vector<16x128xf32>
    %228 = arith.addf %225, %227 : vector<16x128xf32>
    %229 = arith.addf %177, %228 : vector<16x128xf32>
    %c0_52 = arith.constant 0 : index
    %c0_53 = arith.constant 0 : index
    %230 = vector.load %arg14[%c0_52, %c0_53] : memref<16x128xf32, #tpu.memory_space<vmem>>, vector<16x128xf32>
    tpu.vector_store %arg14[%c0_52, %c0_53], %229 {strides = array<i32>} : memref<16x128xf32, #tpu.memory_space<vmem>>, vector<16x128xf32>,
    return
  }
  func.func @transform_0(%arg0: i32) -> (i32, i32) {
    %c0_i32 = arith.constant 0 : i32
    %c0_i32_0 = arith.constant 0 : i32
    return %arg0, %c0_i32 : i32, i32
  }
  func.func @transform_1(%arg0: i32) -> (i32, i32) {
    %c0_i32 = arith.constant 0 : i32
    %c0_i32_0 = arith.constant 0 : i32
    %c0_i32_1 = arith.constant 0 : i32
    return %c0_i32, %c0_i32_0 : i32, i32
  }
  func.func @transform_2(%arg0: i32) -> (i32, i32) {
    %c0_i32 = arith.constant 0 : i32
    %c0_i32_0 = arith.constant 0 : i32
    %c0_i32_1 = arith.constant 0 : i32
    return %c0_i32, %c0_i32_0 : i32, i32
  }
  func.func @transform_3(%arg0: i32) -> (i32, i32) {
    %c0_i32 = arith.constant 0 : i32
    %c0_i32_0 = arith.constant 0 : i32
    %c0_i32_1 = arith.constant 0 : i32
    return %c0_i32, %c0_i32_0 : i32, i32
  }
  func.func @transform_4(%arg0: i32) -> (i32, i32) {
    %c0_i32 = arith.constant 0 : i32
    %c0_i32_0 = arith.constant 0 : i32
    %c0_i32_1 = arith.constant 0 : i32
    return %c0_i32, %c0_i32_0 : i32, i32
  }
  func.func @transform_5(%arg0: i32) -> (i32, i32, i32) {
    %c0_i32 = arith.constant 0 : i32
    %c0_i32_0 = arith.constant 0 : i32
    %c0_i32_1 = arith.constant 0 : i32
    %c0_i32_2 = arith.constant 0 : i32
    return %c0_i32, %c0_i32_0, %c0_i32_1 : i32, i32, i32
  }
  func.func @transform_6(%arg0: i32) -> (i32, i32) {
    %c0_i32 = arith.constant 0 : i32
    %c0_i32_0 = arith.constant 0 : i32
    %c0_i32_1 = arith.constant 0 : i32
    return %c0_i32, %c0_i32_0 : i32, i32
  }
  func.func @transform_7(%arg0: i32) -> (i32, i32) {
    %c0_i32 = arith.constant 0 : i32
    %c0_i32_0 = arith.constant 0 : i32
    %c0_i32_1 = arith.constant 0 : i32
    return %c0_i32, %c0_i32_0 : i32, i32
  }
  func.func @transform_8(%arg0: i32) -> (i32, i32) {
    %c0_i32 = arith.constant 0 : i32
    %c0_i32_0 = arith.constant 0 : i32
    %c0_i32_1 = arith.constant 0 : i32
    return %c0_i32, %c0_i32_0 : i32, i32
  }
  func.func @transform_9(%arg0: i32) -> (i32, i32) {
    %c0_i32 = arith.constant 0 : i32
    %c0_i32_0 = arith.constant 0 : i32
    %c0_i32_1 = arith.constant 0 : i32
    return %c0_i32, %c0_i32_0 : i32, i32
  }
  func.func @transform_10(%arg0: i32) -> (i32, i32) {
    %c0_i32 = arith.constant 0 : i32
    %c0_i32_0 = arith.constant 0 : i32
    %c0_i32_1 = arith.constant 0 : i32
    return %c0_i32, %c0_i32_0 : i32, i32
  }
  func.func @transform_11(%arg0: i32) -> (i32, i32) {
    %c0_i32 = arith.constant 0 : i32
    %c0_i32_0 = arith.constant 0 : i32
    %c0_i32_1 = arith.constant 0 : i32
    return %c0_i32, %c0_i32_0 : i32, i32
  }
  func.func @transform_12(%arg0: i32) -> (i32, i32) {
    %c0_i32 = arith.constant 0 : i32
    %c0_i32_0 = arith.constant 0 : i32
    %c0_i32_1 = arith.constant 0 : i32
    return %c0_i32, %c0_i32_0 : i32, i32
  }
  func.func @transform_13(%arg0: i32) -> (i32, i32) {
    %c0_i32 = arith.constant 0 : i32
    %c0_i32_0 = arith.constant 0 : i32
    return %arg0, %c0_i32 : i32, i32
  }
}

</mosaic_0001>

<llo_original>
// kernel: tpu_custom_call.1
$region0: #{tpu_custom_call.1}
  #allocation0 [shape = 'u32[]', space=smem, size = 0x4, offset = 0x4, fixed_abs, tag = 'smem constant byte address 0x4 - core index']
  #allocation1 [shape = 'u32[144,128]{1,0:T(1,128)}', space=vmem, size = 0x12000, scoped, tag = 'internal scratch']
  %s0 = inlined_call_operand.hbm [shape: f32[16,128], index: 0, kind: input, shape index: {}]
  %s1 = inlined_call_operand.hbm [shape: f32[1,128], index: 1, kind: input, shape index: {}]
  %s2 = inlined_call_operand.hbm [shape: f32[1,128], index: 2, kind: input, shape index: {}]
  %s3 = inlined_call_operand.hbm [shape: bf16[128,384], index: 3, kind: input, shape index: {}]
  %s4 = inlined_call_operand.vmem [shape: f32[1,384], index: 4, kind: input, shape index: {}]
  %s5 = inlined_call_operand.hbm [shape: bf16[8,16,128], index: 5, kind: input, shape index: {}]
  %s6 = inlined_call_operand.vmem [shape: f32[1,128], index: 6, kind: input, shape index: {}]
  %s7 = inlined_call_operand.vmem [shape: f32[1,128], index: 7, kind: input, shape index: {}]
  %s8 = inlined_call_operand.vmem [shape: f32[1,128], index: 8, kind: input, shape index: {}]
  %s9 = inlined_call_operand.hbm [shape: bf16[128,512], index: 9, kind: input, shape index: {}]
  %s10 = inlined_call_operand.vmem [shape: f32[1,512], index: 10, kind: input, shape index: {}]
  %s11 = inlined_call_operand.hbm [shape: bf16[512,128], index: 11, kind: input, shape index: {}]
  %s12 = inlined_call_operand.vmem [shape: f32[1,128], index: 12, kind: input, shape index: {}]
  %s13 = inlined_call_operand.hbm [shape: f32[16,128], index: 13, kind: output, shape index: {}]
  %s14 = sld [smem:[#allocation0]]
  $region90: #{tpu_custom_call.1} parent=0
    _
  %s16 = ssub.s32 1, %s14
  %s17 = scalar_select 0, %s16, %s14
  $region1: #{tpu_custom_call.1} parent=0
    #allocation2 [shape = 'u8[8192]{0}', space=vmem, size = 0x2000, scoped, tag = 'input window, operand 0, single buffered']
    #allocation3 [shape = 's32[1]{0}', space=sflag, size = 0x4, scoped, tag = 'scoped memory for tpu_custom_call.1']
    #allocation4 [shape = 's32[1]{0}', space=sflag, size = 0x4, scoped, tag = 'scoped memory for tpu_custom_call.1']
    #allocation5 [shape = 'u8[512]{0}', space=vmem, size = 0x400, scoped, tag = 'input window, operand 1, single buffered']
    #allocation6 [shape = 's32[1]{0}', space=sflag, size = 0x4, scoped, tag = 'scoped memory for tpu_custom_call.1']
    #allocation7 [shape = 'u8[512]{0}', space=vmem, size = 0x400, scoped, tag = 'input window, operand 2, single buffered']
    #allocation8 [shape = 'u8[98304]{0}', space=vmem, size = 0x18000, scoped, tag = 'input window, operand 3, single buffered']
    #allocation9 [shape = 's32[1]{0}', space=sflag, size = 0x4, scoped, tag = 'scoped memory for tpu_custom_call.1']
    #allocation10 [shape = 'u8[32768]{0}', space=vmem, size = 0x8000, scoped, tag = 'input window, operand 5, single buffered']
    #allocation11 [shape = 'u8[131072]{0}', space=vmem, size = 0x20000, scoped, tag = 'input window, operand 9, single buffered']
    #allocation12 [shape = 's32[1]{0}', space=sflag, size = 0x4, scoped, tag = 'scoped memory for tpu_custom_call.1']
    #allocation13 [shape = 'u8[131072]{0}', space=vmem, size = 0x20000, scoped, tag = 'input window, operand 11, single buffered']
    #allocation14 [shape = 'u8[8192]{0}', space=vmem, size = 0x2000, scoped, tag = 'output window, operand 0, single buffered']
    %18 = vsyncpa [#allocation3], 0
    %19 = vsyncpa [#allocation6], 0
    %20 = vsyncpa [#allocation9], 0
    %21 = vsyncpa [#allocation12], 0
    %22 = vsyncpa [#allocation4], 0
    // Predicated region
    $region2: #{tpu_custom_call.1} parent=1 // pred_check
      _
    $region3: #{tpu_custom_call.1} parent=1 // pred_check_branch
      %24 = sbr.rel (0) target = $region5
    $region4: #{tpu_custom_call.1} parent=1 // pred_region
      %s26 = ssub.s32 256, 256
      %27 = vsyncadd [#allocation3], %s26
      %s28 = sshll.u32 [#allocation2], 4
      %s29 = int_to_ptr.vmem [resolvable:$true] %s28
      %34 = dma.hbm_to_vmem [thread:$0]  %s0, 256, %s29, [#allocation3], 128, 128, 8
    $region5: #{tpu_custom_call.1} parent=1 // pred_fallthru
      _
    // Predicated region
    $region6: #{tpu_custom_call.1} parent=1 // pred_check
      _
    $region7: #{tpu_custom_call.1} parent=1 // pred_check_branch
      %36 = sbr.rel (0) target = $region9
    $region8: #{tpu_custom_call.1} parent=1 // pred_region
      %s38 = ssub.s32 16, 16
      %39 = vsyncadd [#allocation6], %s38
      %s41 = sshll.u32 [#allocation5], 4
      %s42 = int_to_ptr.vmem [resolvable:$true] %s41
      %44 = dma.hbm_to_vmem [thread:$0]  %s1, 16, %s42, [#allocation6]
    $region9: #{tpu_custom_call.1} parent=1 // pred_fallthru
      _
    // Predicated region
    $region10: #{tpu_custom_call.1} parent=1 // pred_check
      _
    $region11: #{tpu_custom_call.1} parent=1 // pred_check_branch
      %46 = sbr.rel (0) target = $region13
    $region12: #{tpu_custom_call.1} parent=1 // pred_region
      %s48 = ssub.s32 16, 16
      %49 = vsyncadd [#allocation6], %s48
      %s51 = sshll.u32 [#allocation7], 4
      %s52 = int_to_ptr.vmem [resolvable:$true] %s51
      %54 = dma.hbm_to_vmem [thread:$0]  %s2, 16, %s52, [#allocation6]
    $region13: #{tpu_custom_call.1} parent=1 // pred_fallthru
      _
    // Predicated region
    $region14: #{tpu_custom_call.1} parent=1 // pred_check
      _
    $region15: #{tpu_custom_call.1} parent=1 // pred_check_branch
      %56 = sbr.rel (0) target = $region17
    $region16: #{tpu_custom_call.1} parent=1 // pred_region
      %s58 = ssub.s32 3072, 3072
      %59 = vsyncadd [#allocation9], %s58
      %s60 = sshll.u32 [#allocation8], 4
      %s61 = int_to_ptr.vmem [resolvable:$true] %s60
      %66 = dma.hbm_to_vmem [thread:$0]  %s3, 3072, %s61, [#allocation9], 192, 192, 12
    $region17: #{tpu_custom_call.1} parent=1 // pred_fallthru
      _
    // Predicated region
    $region18: #{tpu_custom_call.1} parent=1 // pred_check
      _
    $region19: #{tpu_custom_call.1} parent=1 // pred_check_branch
      %68 = sbr.rel (0) target = $region21
    $region20: #{tpu_custom_call.1} parent=1 // pred_region
      _
    $region21: #{tpu_custom_call.1} parent=1 // pred_fallthru
      _
    // Predicated region
    $region22: #{tpu_custom_call.1} parent=1 // pred_check
      _
    $region23: #{tpu_custom_call.1} parent=1 // pred_check_branch
      %70 = sbr.rel (0) target = $region25
    $region24: #{tpu_custom_call.1} parent=1 // pred_region
      %s72 = ssub.s32 1024, 1024
      %73 = vsyncadd [#allocation9], %s72
      %s74 = sshll.u32 [#allocation10], 4
      %s75 = int_to_ptr.vmem [resolvable:$true] %s74
      %80 = dma.hbm_to_vmem [thread:$0]  %s5, 1024, %s75, [#allocation9], 64, 64, 4
    $region25: #{tpu_custom_call.1} parent=1 // pred_fallthru
      _
    // Predicated region
    $region26: #{tpu_custom_call.1} parent=1 // pred_check
      _
    $region27: #{tpu_custom_call.1} parent=1 // pred_check_branch
      %82 = sbr.rel (0) target = $region29
    $region28: #{tpu_custom_call.1} parent=1 // pred_region
      _
    $region29: #{tpu_custom_call.1} parent=1 // pred_fallthru
      _
    // Predicated region
    $region30: #{tpu_custom_call.1} parent=1 // pred_check
      _
    $region31: #{tpu_custom_call.1} parent=1 // pred_check_branch
      %84 = sbr.rel (0) target = $region33
    $region32: #{tpu_custom_call.1} parent=1 // pred_region
      _
    $region33: #{tpu_custom_call.1} parent=1 // pred_fallthru
      _
    // Predicated region
    $region34: #{tpu_custom_call.1} parent=1 // pred_check
      _
    $region35: #{tpu_custom_call.1} parent=1 // pred_check_branch
      %86 = sbr.rel (0) target = $region37
    $region36: #{tpu_custom_call.1} parent=1 // pred_region
      _
    $region37: #{tpu_custom_call.1} parent=1 // pred_fallthru
      _
    // Predicated region
    $region38: #{tpu_custom_call.1} parent=1 // pred_check
      _
    $region39: #{tpu_custom_call.1} parent=1 // pred_check_branch
      %88 = sbr.rel (0) target = $region41
    $region40: #{tpu_custom_call.1} parent=1 // pred_region
      %s90 = ssub.s32 4096, 4096
      %91 = vsyncadd [#allocation12], %s90
      %s92 = sshll.u32 [#allocation11], 4
      %s93 = int_to_ptr.vmem [resolvable:$true] %s92
      %98 = dma.hbm_to_vmem [thread:$0]  %s9, 4096, %s93, [#allocation12], 256, 256, 16
    $region41: #{tpu_custom_call.1} parent=1 // pred_fallthru
      _
    // Predicated region
    $region42: #{tpu_custom_call.1} parent=1 // pred_check
      _
    $region43: #{tpu_custom_call.1} parent=1 // pred_check_branch
      %100 = sbr.rel (0) target = $region45
    $region44: #{tpu_custom_call.1} parent=1 // pred_region
      _
    $region45: #{tpu_custom_call.1} parent=1 // pred_fallthru
      _
    // Predicated region
    $region46: #{tpu_custom_call.1} parent=1 // pred_check
      _
    $region47: #{tpu_custom_call.1} parent=1 // pred_check_branch
      %102 = sbr.rel (0) target = $region49
    $region48: #{tpu_custom_call.1} parent=1 // pred_region
      %s104 = ssub.s32 4096, 4096
      %105 = vsyncadd [#allocation12], %s104
      %s106 = sshll.u32 [#allocation13], 4
      %s107 = int_to_ptr.vmem [resolvable:$true] %s106
      %112 = dma.hbm_to_vmem [thread:$0]  %s11, 4096, %s107, [#allocation12], 64, 64, 4
    $region49: #{tpu_custom_call.1} parent=1 // pred_fallthru
      _
    // Predicated region
    $region50: #{tpu_custom_call.1} parent=1 // pred_check
      _
    $region51: #{tpu_custom_call.1} parent=1 // pred_check_branch
      %114 = sbr.rel (0) target = $region53
    $region52: #{tpu_custom_call.1} parent=1 // pred_region
      _
    $region53: #{tpu_custom_call.1} parent=1 // pred_fallthru
      _
    // Predicated region
    $region54: #{tpu_custom_call.1} parent=1 // pred_check
      _
    $region55: #{tpu_custom_call.1} parent=1 // pred_check_branch
      %116 = sbr.rel (0) target = $region57
    $region56: #{tpu_custom_call.1} parent=1 // pred_region
      %117 = dma.done [#allocation3], 256
    $region57: #{tpu_custom_call.1} parent=1 // pred_fallthru
      _
    // Predicated region
    $region58: #{tpu_custom_call.1} parent=1 // pred_check
      _
    $region59: #{tpu_custom_call.1} parent=1 // pred_check_branch
      %119 = sbr.rel (0) target = $region61
    $region60: #{tpu_custom_call.1} parent=1 // pred_region
      %120 = dma.done [#allocation6], 16
    $region61: #{tpu_custom_call.1} parent=1 // pred_fallthru
      _
    // Predicated region
    $region62: #{tpu_custom_call.1} parent=1 // pred_check
      _
    $region63: #{tpu_custom_call.1} parent=1 // pred_check_branch
      %122 = sbr.rel (0) target = $region65
    $region64: #{tpu_custom_call.1} parent=1 // pred_region
      %123 = dma.done [#allocation6], 16
    $region65: #{tpu_custom_call.1} parent=1 // pred_fallthru
      _
    // Predicated region
    $region66: #{tpu_custom_call.1} parent=1 // pred_check
      _
    $region67: #{tpu_custom_call.1} parent=1 // pred_check_branch
      %125 = sbr.rel (0) target = $region69
    $region68: #{tpu_custom_call.1} parent=1 // pred_region
      %126 = dma.done [#allocation9], 3072
    $region69: #{tpu_custom_call.1} parent=1 // pred_fallthru
      _
    // Predicated region
    $region70: #{tpu_custom_call.1} parent=1 // pred_check
      _
    $region71: #{tpu_custom_call.1} parent=1 // pred_check_branch
      %128 = sbr.rel (0) target = $region73
    $region72: #{tpu_custom_call.1} parent=1 // pred_region
      %129 = dma.done [#allocation9], 1024
    $region73: #{tpu_custom_call.1} parent=1 // pred_fallthru
      _
    // Predicated region
    $region74: #{tpu_custom_call.1} parent=1 // pred_check
      _
    $region75: #{tpu_custom_call.1} parent=1 // pred_check_branch
      %131 = sbr.rel (0) target = $region77
    $region76: #{tpu_custom_call.1} parent=1 // pred_region
      %132 = dma.done [#allocation12], 4096
    $region77: #{tpu_custom_call.1} parent=1 // pred_fallthru
      _
    // Predicated region
    $region78: #{tpu_custom_call.1} parent=1 // pred_check
      _
    $region79: #{tpu_custom_call.1} parent=1 // pred_check_branch
      %134 = sbr.rel (0) target = $region81
    $region80: #{tpu_custom_call.1} parent=1 // pred_region
      %135 = dma.done [#allocation12], 4096
    $region81: #{tpu_custom_call.1} parent=1 // pred_fallthru
      _
    %v137 = vld [vmem:[#allocation2] sm:$0xff]
    %v138 = vld [vmem:[#allocation2 + $0x8] sm:$0xff]
    %139 = vadd.xlane.f32.xlu0 %v137
    %v140 = vpop.xlane.xlu0 %139
    %141 = vadd.xlane.f32.xlu0 %v138
    %v142 = vpop.xlane.xlu0 %141
    %v143 = vrcp.pop 128.0
    %v144 = vmul.f32 %v140, %v143
    %v145 = vmul.f32 %v142, %v143
    %v146 = vsub.f32 %v137, %v144
    %v147 = vsub.f32 %v138, %v145
    %v148 = vmul.f32 %v146, %v146
    %v149 = vmul.f32 %v147, %v147
    %150 = vadd.xlane.f32.xlu0 %v148
    %v151 = vpop.xlane.xlu0 %150
    %152 = vadd.xlane.f32.xlu0 %v149
    %v153 = vpop.xlane.xlu0 %152
    %v154 = vmul.f32 %v151, %v143
    %v155 = vmul.f32 %v153, %v143
    %v156 = vadd.f32 %v154, 1e-05
    %v157 = vadd.f32 %v155, 1e-05
    %v158 = vrsqrt.pop %v156
    %v159 = vrsqrt.pop %v157
    %v160 = vmul.f32 %v146, %v158
    %v161 = vmul.f32 %v147, %v159
    %v162 = vld [vmem:[#allocation5] sm:$0x1]
    %v164 = vlaneseq
    %v165 = vshrl.u32 %v164, 7
    %v166 = vsub.s32 0, %v165
    %v167 = vrot.slane %v162, %v166
    %v169 = vmul.f32 %v160, %v167
    %v170 = vmul.f32 %v161, %v167
    %v171 = vld [vmem:[#allocation7] sm:$0x1]
    %v173 = vlaneseq
    %v174 = vshrl.u32 %v173, 7
    %v175 = vsub.s32 0, %v174
    %v176 = vrot.slane %v171, %v175
    %v178 = vadd.f32 %v169, %v176
    %v179 = vadd.f32 %v170, %v176
    %v180 = vpack.c.bf16 %v179, %v178
    %v181 = vld [vmem:[#allocation8] sm:$0xff]
    %v182 = vld [vmem:[#allocation8 + $0x8] sm:$0xf]
    %v183 = vld [vmem:[#allocation8 + $0xc] sm:$0xff]
    %v184 = vld [vmem:[#allocation8 + $0x14] sm:$0xf]
    %v185 = vld [vmem:[#allocation8 + $0x18] sm:$0xff]
    %v186 = vld [vmem:[#allocation8 + $0x20] sm:$0xf]
    %v187 = vld [vmem:[#allocation8 + $0x24] sm:$0xff]
    %v188 = vld [vmem:[#allocation8 + $0x2c] sm:$0xf]
    %v189 = vld [vmem:[#allocation8 + $0x30] sm:$0xff]
    %v190 = vld [vmem:[#allocation8 + $0x38] sm:$0xf]
    %v191 = vld [vmem:[#allocation8 + $0x3c] sm:$0xff]
    %v192 = vld [vmem:[#allocation8 + $0x44] sm:$0xf]
    %v193 = vld [vmem:[#allocation8 + $0x48] sm:$0xff]
    %v194 = vld [vmem:[#allocation8 + $0x50] sm:$0xf]
    %v195 = vld [vmem:[#allocation8 + $0x54] sm:$0xff]
    %v196 = vld [vmem:[#allocation8 + $0x5c] sm:$0xf]
    %v197 = vld [vmem:[#allocation8 + $0x60] sm:$0xff]
    %v198 = vld [vmem:[#allocation8 + $0x68] sm:$0xf]
    %v199 = vld [vmem:[#allocation8 + $0x6c] sm:$0xff]
    %v200 = vld [vmem:[#allocation8 + $0x74] sm:$0xf]
    %v201 = vld [vmem:[#allocation8 + $0x78] sm:$0xff]
    %v202 = vld [vmem:[#allocation8 + $0x80] sm:$0xf]
    %v203 = vld [vmem:[#allocation8 + $0x84] sm:$0xff]
    %v204 = vld [vmem:[#allocation8 + $0x8c] sm:$0xf]
    %v205 = vld [vmem:[#allocation8 + $0x90] sm:$0xff]
    %v206 = vld [vmem:[#allocation8 + $0x98] sm:$0xf]
    %v207 = vld [vmem:[#allocation8 + $0x9c] sm:$0xff]
    %v208 = vld [vmem:[#allocation8 + $0xa4] sm:$0xf]
    %v209 = vld [vmem:[#allocation8 + $0xa8] sm:$0xff]
    %v210 = vld [vmem:[#allocation8 + $0xb0] sm:$0xf]
    %v211 = vld [vmem:[#allocation8 + $0xb4] sm:$0xff]
    %v212 = vld [vmem:[#allocation8 + $0xbc] sm:$0xf]
    %v213 = vld [vmem:[%s4] sm:$0x7]
    %v215 = vlaneseq
    %v216 = vshrl.u32 %v215, 7
    %v217 = vsub.s32 0, %v216
    %v218 = vrot.slane %v213, %v217
    %v219 = vlaneseq
    %v220 = vshrl.u32 %v219, 7
    %v221 = vsub.s32 1, %v220
    %v222 = vrot.slane %v213, %v221
    %v223 = vlaneseq
    %v224 = vshrl.u32 %v223, 7
    %v225 = vsub.s32 2, %v224
    %v226 = vrot.slane %v213, %v225
    %v262 = vunpack.c.l.b16 %v181
    %v263 = vunpack.c.h.b16 %v181
    %v264 = vunpack.c.l.b16 %v182
    %v265 = vunpack.c.l.b16 %v183
    %v266 = vunpack.c.h.b16 %v183
    %v267 = vunpack.c.l.b16 %v184
    %v268 = vunpack.c.l.b16 %v185
    %v269 = vunpack.c.h.b16 %v185
    %v270 = vunpack.c.l.b16 %v186
    %v271 = vunpack.c.l.b16 %v187
    %v272 = vunpack.c.h.b16 %v187
    %v273 = vunpack.c.l.b16 %v188
    %v274 = vunpack.c.l.b16 %v189
    %v275 = vunpack.c.h.b16 %v189
    %v276 = vunpack.c.l.b16 %v190
    %v277 = vunpack.c.l.b16 %v191
    %v278 = vunpack.c.h.b16 %v191
    %v279 = vunpack.c.l.b16 %v192
    %v280 = vunpack.c.l.b16 %v193
    %v281 = vunpack.c.h.b16 %v193
    %v282 = vunpack.c.l.b16 %v194
    %v283 = vunpack.c.l.b16 %v195
    %v284 = vunpack.c.h.b16 %v195
    %v285 = vunpack.c.l.b16 %v196
    %v286 = vunpack.c.l.b16 %v197
    %v287 = vunpack.c.h.b16 %v197
    %v288 = vunpack.c.l.b16 %v198
    %v289 = vunpack.c.l.b16 %v199
    %v290 = vunpack.c.h.b16 %v199
    %v291 = vunpack.c.l.b16 %v200
    %v292 = vunpack.c.l.b16 %v201
    %v293 = vunpack.c.h.b16 %v201
    %v294 = vunpack.c.l.b16 %v202
    %v295 = vunpack.c.l.b16 %v203
    %v296 = vunpack.c.h.b16 %v203
    %v297 = vunpack.c.l.b16 %v204
    %v298 = vunpack.c.l.b16 %v205
    %v299 = vunpack.c.h.b16 %v205
    %v300 = vunpack.c.l.b16 %v206
    %v301 = vunpack.c.l.b16 %v207
    %v302 = vunpack.c.h.b16 %v207
    %v303 = vunpack.c.l.b16 %v208
    %v304 = vunpack.c.l.b16 %v209
    %v305 = vunpack.c.h.b16 %v209
    %v306 = vunpack.c.l.b16 %v210
    %v307 = vunpack.c.l.b16 %v211
    %v308 = vunpack.c.h.b16 %v211
    %v309 = vunpack.c.l.b16 %v212
    %v310 = vpack.c.b16 %v265, %v262
    %v311 = vpack.c.b16 %v266, %v263
    %v312 = vpack.c.b16 %v267, %v264
    %v313 = vpack.c.b16 %v271, %v268
    %v314 = vpack.c.b16 %v272, %v269
    %v315 = vpack.c.b16 %v273, %v270
    %v316 = vpack.c.b16 %v277, %v274
    %v317 = vpack.c.b16 %v278, %v275
    %v318 = vpack.c.b16 %v279, %v276
    %v319 = vpack.c.b16 %v283, %v280
    %v320 = vpack.c.b16 %v284, %v281
    %v321 = vpack.c.b16 %v285, %v282
    %v322 = vpack.c.b16 %v289, %v286
    %v323 = vpack.c.b16 %v290, %v287
    %v324 = vpack.c.b16 %v291, %v288
    %v325 = vpack.c.b16 %v295, %v292
    %v326 = vpack.c.b16 %v296, %v293
    %v327 = vpack.c.b16 %v297, %v294
    %v328 = vpack.c.b16 %v301, %v298
    %v329 = vpack.c.b16 %v302, %v299
    %v330 = vpack.c.b16 %v303, %v300
    %v331 = vpack.c.b16 %v307, %v304
    %v332 = vpack.c.b16 %v308, %v305
    %v333 = vpack.c.b16 %v309, %v306
    %358 = vmatprep.subr.bf16.mxu0 %v311
    %359 = vmatpush1.bf16.msra.mxu0 %v310
    %360 = vmatprep.subr.bf16.mxu0 %v314
    %361 = vmatpush1.bf16.msra.mxu0 %v313
    %362 = vmatprep.subr.bf16.mxu0 %v317
    %363 = vmatpush1.bf16.msra.mxu0 %v316
    %364 = vmatprep.subr.bf16.mxu0 %v320
    %365 = vmatpush1.bf16.msra.mxu0 %v319
    %366 = vmatprep.subr.bf16.mxu0 %v323
    %367 = vmatpush1.bf16.msra.mxu0 %v322
    %368 = vmatprep.subr.bf16.mxu0 %v326
    %369 = vmatpush1.bf16.msra.mxu0 %v325
    %370 = vmatprep.subr.bf16.mxu0 %v329
    %371 = vmatpush1.bf16.msra.mxu0 %v328
    %372 = vmatprep.subr.bf16.mxu0 %v332
    %373 = vmatpush1.bf16.msra.mxu0 %v331
    %374 = vmatprep.subr.bf16.mxu0 0
    %375 = vmatpush1.bf16.msra.mxu0 0
    %376 = vmatprep.subr.bf16.mxu0 0
    %377 = vmatpush1.bf16.msra.mxu0 0
    %378 = vmatprep.subr.bf16.mxu0 0
    %379 = vmatpush1.bf16.msra.mxu0 0
    %380 = vmatprep.subr.bf16.mxu0 0
    %381 = vmatpush1.bf16.msra.mxu0 0
    %382 = vmatprep.subr.bf16.mxu0 0
    %383 = vmatpush1.bf16.msra.mxu0 0
    %384 = vmatprep.subr.bf16.mxu0 0
    %385 = vmatpush1.bf16.msra.mxu0 0
    %386 = vmatprep.subr.bf16.mxu0 0
    %387 = vmatpush1.bf16.msra.mxu0 0
    %388 = vmatprep.subr.bf16.mxu0 0
    %389 = vmatpush1.bf16.msra.mxu0 0
    %390 = vmatprep.mubr.bf16.mxu0 0
    %391 = vmatmul.mubr.bf16.gmra.mrb[0].mxu0 %v180
    %v392 = vpop.f32.mrb[0].mxu0
    %v393 = vadd.f32 %v218, %v392
    %v394 = vpop.f32.mrb[0].mxu0
    %v395 = vadd.f32 %v222, %v394
    %v396 = vpop.f32.mrb[0].mxu0
    %v397 = vadd.f32 %v218, %v396
    %v398 = vpop.f32.mrb[0].mxu0
    %v399 = vadd.f32 %v222, %v398
    %400 = vdwg.mxu0
    %401 = vmatprep.subr.bf16.mxu0 0
    %402 = vmatpush1.bf16.msra.mxu0 %v312
    %403 = vmatprep.subr.bf16.mxu0 0
    %404 = vmatpush1.bf16.msra.mxu0 %v315
    %405 = vmatprep.subr.bf16.mxu0 0
    %406 = vmatpush1.bf16.msra.mxu0 %v318
    %407 = vmatprep.subr.bf16.mxu0 0
    %408 = vmatpush1.bf16.msra.mxu0 %v321
    %409 = vmatprep.subr.bf16.mxu0 0
    %410 = vmatpush1.bf16.msra.mxu0 %v324
    %411 = vmatprep.subr.bf16.mxu0 0
    %412 = vmatpush1.bf16.msra.mxu0 %v327
    %413 = vmatprep.subr.bf16.mxu0 0
    %414 = vmatpush1.bf16.msra.mxu0 %v330
    %415 = vmatprep.subr.bf16.mxu0 0
    %416 = vmatpush1.bf16.msra.mxu0 %v333
    %417 = vmatprep.subr.bf16.mxu0 0
    %418 = vmatpush1.bf16.msra.mxu0 0
    %419 = vmatprep.subr.bf16.mxu0 0
    %420 = vmatpush1.bf16.msra.mxu0 0
    %421 = vmatprep.subr.bf16.mxu0 0
    %422 = vmatpush1.bf16.msra.mxu0 0
    %423 = vmatprep.subr.bf16.mxu0 0
    %424 = vmatpush1.bf16.msra.mxu0 0
    %425 = vmatprep.subr.bf16.mxu0 0
    %426 = vmatpush1.bf16.msra.mxu0 0
    %427 = vmatprep.subr.bf16.mxu0 0
    %428 = vmatpush1.bf16.msra.mxu0 0
    %429 = vmatprep.subr.bf16.mxu0 0
    %430 = vmatpush1.bf16.msra.mxu0 0
    %431 = vmatprep.subr.bf16.mxu0 0
    %432 = vmatpush1.bf16.msra.mxu0 0
    %433 = vmatprep.mubr.bf16.mxu0 0
    %434 = vmatmul.mubr.bf16.gmra.mrb[0].mxu0 %v180
    %v435 = vpop.f32.mrb[0].mxu0
    %v436 = vadd.f32 %v226, %v435
    %v437 = vpop.f32.mrb[0].mxu0
    %v438 = vpop.f32.mrb[0].mxu0
    %v439 = vadd.f32 %v226, %v438
    %v440 = vpop.f32.mrb[0].mxu0
    %441 = vdwg.mxu0
    %443 = vrot.lane.b32.xlu0 %v393, 112
    %v444 = vpop.permute.xlu0 %443
    %446 = vrot.lane.b32.xlu0 %v393, 96
    %v447 = vpop.permute.xlu0 %446
    %449 = vrot.lane.b32.xlu0 %v393, 80
    %v450 = vpop.permute.xlu0 %449
    %452 = vrot.lane.b32.xlu0 %v393, 64
    %v453 = vpop.permute.xlu0 %452
    %455 = vrot.lane.b32.xlu0 %v393, 48
    %v456 = vpop.permute.xlu0 %455
    %458 = vrot.lane.b32.xlu0 %v393, 32
    %v459 = vpop.permute.xlu0 %458
    %461 = vrot.lane.b32.xlu0 %v393, 16
    %v462 = vpop.permute.xlu0 %461
    %465 = vrot.lane.b32.xlu0 %v395, 112
    %v466 = vpop.permute.xlu0 %465
    %468 = vrot.lane.b32.xlu0 %v395, 96
    %v469 = vpop.permute.xlu0 %468
    %471 = vrot.lane.b32.xlu0 %v395, 80
    %v472 = vpop.permute.xlu0 %471
    %474 = vrot.lane.b32.xlu0 %v395, 64
    %v475 = vpop.permute.xlu0 %474
    %477 = vrot.lane.b32.xlu0 %v395, 48
    %v478 = vpop.permute.xlu0 %477
    %480 = vrot.lane.b32.xlu0 %v395, 32
    %v481 = vpop.permute.xlu0 %480
    %483 = vrot.lane.b32.xlu0 %v395, 16
    %v484 = vpop.permute.xlu0 %483
    %487 = vrot.lane.b32.xlu0 %v436, 112
    %v488 = vpop.permute.xlu0 %487
    %490 = vrot.lane.b32.xlu0 %v436, 96
    %v491 = vpop.permute.xlu0 %490
    %493 = vrot.lane.b32.xlu0 %v436, 80
    %v494 = vpop.permute.xlu0 %493
    %496 = vrot.lane.b32.xlu0 %v436, 64
    %v497 = vpop.permute.xlu0 %496
    %499 = vrot.lane.b32.xlu0 %v436, 48
    %v500 = vpop.permute.xlu0 %499
    %502 = vrot.lane.b32.xlu0 %v436, 32
    %v503 = vpop.permute.xlu0 %502
    %505 = vrot.lane.b32.xlu0 %v436, 16
    %v506 = vpop.permute.xlu0 %505
    %v508 = vpack.c.bf16 %v393, %v393
    %v509 = vpack.c.bf16 %v444, %v444
    %v510 = vpack.c.bf16 %v447, %v447
    %v511 = vpack.c.bf16 %v450, %v450
    %v512 = vpack.c.bf16 %v453, %v453
    %v513 = vpack.c.bf16 %v456, %v456
    %v514 = vpack.c.bf16 %v459, %v459
    %v515 = vpack.c.bf16 %v462, %v462
    %v516 = vpack.c.bf16 %v395, %v395
    %v517 = vpack.c.bf16 %v466, %v466
    %v518 = vpack.c.bf16 %v469, %v469
    %v519 = vpack.c.bf16 %v472, %v472
    %v520 = vpack.c.bf16 %v475, %v475
    %v521 = vpack.c.bf16 %v478, %v478
    %v522 = vpack.c.bf16 %v481, %v481
    %v523 = vpack.c.bf16 %v484, %v484
    %vm524 = vcmask 130048
    %v526 = vsel %vm524, %v508, 0
    %v529 = vsel %vm524, %v516, 0
    %531 = vmatprep.subr.bf16.mxu0 0
    %532 = vmatpush1.bf16.xpose.msra.mxu0 %v529
    %533 = vmatprep.subr.bf16.mxu0 0
    %534 = vmatpush1.bf16.xpose.msra.mxu0 0
    %535 = vmatprep.subr.bf16.mxu0 0
    %536 = vmatpush1.bf16.xpose.msra.mxu0 0
    %537 = vmatprep.subr.bf16.mxu0 0
    %538 = vmatpush1.bf16.xpose.msra.mxu0 0
    %539 = vmatprep.subr.bf16.mxu0 0
    %540 = vmatpush1.bf16.xpose.msra.mxu0 0
    %541 = vmatprep.subr.bf16.mxu0 0
    %542 = vmatpush1.bf16.xpose.msra.mxu0 0
    %543 = vmatprep.subr.bf16.mxu0 0
    %544 = vmatpush1.bf16.xpose.msra.mxu0 0
    %545 = vmatprep.subr.bf16.mxu0 0
    %546 = vmatpush1.bf16.xpose.msra.mxu0 0
    %547 = vmatprep.subr.bf16.mxu0 0
    %548 = vmatpush1.bf16.xpose.msra.mxu0 0
    %549 = vmatprep.subr.bf16.mxu0 0
    %550 = vmatpush1.bf16.xpose.msra.mxu0 0
    %551 = vmatprep.subr.bf16.mxu0 0
    %552 = vmatpush1.bf16.xpose.msra.mxu0 0
    %553 = vmatprep.subr.bf16.mxu0 0
    %554 = vmatpush1.bf16.xpose.msra.mxu0 0
    %555 = vmatprep.subr.bf16.mxu0 0
    %556 = vmatpush1.bf16.xpose.msra.mxu0 0
    %557 = vmatprep.subr.bf16.mxu0 0
    %558 = vmatpush1.bf16.xpose.msra.mxu0 0
    %559 = vmatprep.subr.bf16.mxu0 0
    %560 = vmatpush1.bf16.xpose.msra.mxu0 0
    %561 = vmatprep.subr.bf16.mxu0 0
    %562 = vmatpush1.bf16.xpose.msra.mxu0 0
    %563 = vmatprep.mubr.bf16.mxu0 0
    %564 = vmatmul.mubr.bf16.gmra.mrb[0].mxu0 %v526
    %v565 = vpop.f32.mrb[0].mxu0
    %v566 = vadd.f32 0.0, %v565
    %v567 = vpop.f32.mrb[0].mxu0
    %v568 = vpop.f32.mrb[0].mxu0
    %v569 = vpop.f32.mrb[0].mxu0
    %570 = vdwg.mxu0
    %v572 = vsel %vm524, %v509, 0
    %v575 = vsel %vm524, %v517, 0
    %577 = vmatprep.subr.bf16.mxu0 0
    %578 = vmatpush1.bf16.xpose.msra.mxu0 %v575
    %579 = vmatprep.subr.bf16.mxu0 0
    %580 = vmatpush1.bf16.xpose.msra.mxu0 0
    %581 = vmatprep.subr.bf16.mxu0 0
    %582 = vmatpush1.bf16.xpose.msra.mxu0 0
    %583 = vmatprep.subr.bf16.mxu0 0
    %584 = vmatpush1.bf16.xpose.msra.mxu0 0
    %585 = vmatprep.subr.bf16.mxu0 0
    %586 = vmatpush1.bf16.xpose.msra.mxu0 0
    %587 = vmatprep.subr.bf16.mxu0 0
    %588 = vmatpush1.bf16.xpose.msra.mxu0 0
    %589 = vmatprep.subr.bf16.mxu0 0
    %590 = vmatpush1.bf16.xpose.msra.mxu0 0
    %591 = vmatprep.subr.bf16.mxu0 0
    %592 = vmatpush1.bf16.xpose.msra.mxu0 0
    %593 = vmatprep.subr.bf16.mxu0 0
    %594 = vmatpush1.bf16.xpose.msra.mxu0 0
    %595 = vmatprep.subr.bf16.mxu0 0
    %596 = vmatpush1.bf16.xpose.msra.mxu0 0
    %597 = vmatprep.subr.bf16.mxu0 0
    %598 = vmatpush1.bf16.xpose.msra.mxu0 0
    %599 = vmatprep.subr.bf16.mxu0 0
    %600 = vmatpush1.bf16.xpose.msra.mxu0 0
    %601 = vmatprep.subr.bf16.mxu0 0
    %602 = vmatpush1.bf16.xpose.msra.mxu0 0
    %603 = vmatprep.subr.bf16.mxu0 0
    %604 = vmatpush1.bf16.xpose.msra.mxu0 0
    %605 = vmatprep.subr.bf16.mxu0 0
    %606 = vmatpush1.bf16.xpose.msra.mxu0 0
    %607 = vmatprep.subr.bf16.mxu0 0
    %608 = vmatpush1.bf16.xpose.msra.mxu0 0
    %609 = vmatprep.mubr.bf16.mxu0 0
    %610 = vmatmul.mubr.bf16.gmra.mrb[0].mxu0 %v572
    %v611 = vpop.f32.mrb[0].mxu0
    %v612 = vadd.f32 0.0, %v611
    %v613 = vpop.f32.mrb[0].mxu0
    %v614 = vpop.f32.mrb[0].mxu0
    %v615 = vpop.f32.mrb[0].mxu0
    %616 = vdwg.mxu0
    %v618 = vsel %vm524, %v510, 0
    %v621 = vsel %vm524, %v518, 0
    %623 = vmatprep.subr.bf16.mxu0 0
    %624 = vmatpush1.bf16.xpose.msra.mxu0 %v621
    %625 = vmatprep.subr.bf16.mxu0 0
    %626 = vmatpush1.bf16.xpose.msra.mxu0 0
    %627 = vmatprep.subr.bf16.mxu0 0
    %628 = vmatpush1.bf16.xpose.msra.mxu0 0
    %629 = vmatprep.subr.bf16.mxu0 0
    %630 = vmatpush1.bf16.xpose.msra.mxu0 0
    %631 = vmatprep.subr.bf16.mxu0 0
    %632 = vmatpush1.bf16.xpose.msra.mxu0 0
    %633 = vmatprep.subr.bf16.mxu0 0
    %634 = vmatpush1.bf16.xpose.msra.mxu0 0
    %635 = vmatprep.subr.bf16.mxu0 0
    %636 = vmatpush1.bf16.xpose.msra.mxu0 0
    %637 = vmatprep.subr.bf16.mxu0 0
    %638 = vmatpush1.bf16.xpose.msra.mxu0 0
    %639 = vmatprep.subr.bf16.mxu0 0
    %640 = vmatpush1.bf16.xpose.msra.mxu0 0
    %641 = vmatprep.subr.bf16.mxu0 0
    %642 = vmatpush1.bf16.xpose.msra.mxu0 0
    %643 = vmatprep.subr.bf16.mxu0 0
    %644 = vmatpush1.bf16.xpose.msra.mxu0 0
    %645 = vmatprep.subr.bf16.mxu0 0
    %646 = vmatpush1.bf16.xpose.msra.mxu0 0
    %647 = vmatprep.subr.bf16.mxu0 0
    %648 = vmatpush1.bf16.xpose.msra.mxu0 0
    %649 = vmatprep.subr.bf16.mxu0 0
    %650 = vmatpush1.bf16.xpose.msra.mxu0 0
    %651 = vmatprep.subr.bf16.mxu0 0
    %652 = vmatpush1.bf16.xpose.msra.mxu0 0
    %653 = vmatprep.subr.bf16.mxu0 0
    %654 = vmatpush1.bf16.xpose.msra.mxu0 0
    %655 = vmatprep.mubr.bf16.mxu0 0
    %656 = vmatmul.mubr.bf16.gmra.mrb[0].mxu0 %v618
    %v657 = vpop.f32.mrb[0].mxu0
    %v658 = vadd.f32 0.0, %v657
    %v659 = vpop.f32.mrb[0].mxu0
    %v660 = vpop.f32.mrb[0].mxu0
    %v661 = vpop.f32.mrb[0].mxu0
    %662 = vdwg.mxu0
    %v664 = vsel %vm524, %v511, 0
    %v667 = vsel %vm524, %v519, 0
    %669 = vmatprep.subr.bf16.mxu0 0
    %670 = vmatpush1.bf16.xpose.msra.mxu0 %v667
    %671 = vmatprep.subr.bf16.mxu0 0
    %672 = vmatpush1.bf16.xpose.msra.mxu0 0
    %673 = vmatprep.subr.bf16.mxu0 0
    %674 = vmatpush1.bf16.xpose.msra.mxu0 0
    %675 = vmatprep.subr.bf16.mxu0 0
    %676 = vmatpush1.bf16.xpose.msra.mxu0 0
    %677 = vmatprep.subr.bf16.mxu0 0
    %678 = vmatpush1.bf16.xpose.msra.mxu0 0
    %679 = vmatprep.subr.bf16.mxu0 0
    %680 = vmatpush1.bf16.xpose.msra.mxu0 0
    %681 = vmatprep.subr.bf16.mxu0 0
    %682 = vmatpush1.bf16.xpose.msra.mxu0 0
    %683 = vmatprep.subr.bf16.mxu0 0
    %684 = vmatpush1.bf16.xpose.msra.mxu0 0
    %685 = vmatprep.subr.bf16.mxu0 0
    %686 = vmatpush1.bf16.xpose.msra.mxu0 0
    %687 = vmatprep.subr.bf16.mxu0 0
    %688 = vmatpush1.bf16.xpose.msra.mxu0 0
    %689 = vmatprep.subr.bf16.mxu0 0
    %690 = vmatpush1.bf16.xpose.msra.mxu0 0
    %691 = vmatprep.subr.bf16.mxu0 0
    %692 = vmatpush1.bf16.xpose.msra.mxu0 0
    %693 = vmatprep.subr.bf16.mxu0 0
    %694 = vmatpush1.bf16.xpose.msra.mxu0 0
    %695 = vmatprep.subr.bf16.mxu0 0
    %696 = vmatpush1.bf16.xpose.msra.mxu0 0
    %697 = vmatprep.subr.bf16.mxu0 0
    %698 = vmatpush1.bf16.xpose.msra.mxu0 0
    %699 = vmatprep.subr.bf16.mxu0 0
    %700 = vmatpush1.bf16.xpose.msra.mxu0 0
    %701 = vmatprep.mubr.bf16.mxu0 0
    %702 = vmatmul.mubr.bf16.gmra.mrb[0].mxu0 %v664
    %v703 = vpop.f32.mrb[0].mxu0
    %v704 = vadd.f32 0.0, %v703
    %v705 = vpop.f32.mrb[0].mxu0
    %v706 = vpop.f32.mrb[0].mxu0
    %v707 = vpop.f32.mrb[0].mxu0
    %708 = vdwg.mxu0
    %v710 = vsel %vm524, %v512, 0
    %v713 = vsel %vm524, %v520, 0
    %715 = vmatprep.subr.bf16.mxu0 0
    %716 = vmatpush1.bf16.xpose.msra.mxu0 %v713
    %717 = vmatprep.subr.bf16.mxu0 0
    %718 = vmatpush1.bf16.xpose.msra.mxu0 0
    %719 = vmatprep.subr.bf16.mxu0 0
    %720 = vmatpush1.bf16.xpose.msra.mxu0 0
    %721 = vmatprep.subr.bf16.mxu0 0
    %722 = vmatpush1.bf16.xpose.msra.mxu0 0
    %723 = vmatprep.subr.bf16.mxu0 0
    %724 = vmatpush1.bf16.xpose.msra.mxu0 0
    %725 = vmatprep.subr.bf16.mxu0 0
    %726 = vmatpush1.bf16.xpose.msra.mxu0 0
    %727 = vmatprep.subr.bf16.mxu0 0
    %728 = vmatpush1.bf16.xpose.msra.mxu0 0
    %729 = vmatprep.subr.bf16.mxu0 0
    %730 = vmatpush1.bf16.xpose.msra.mxu0 0
    %731 = vmatprep.subr.bf16.mxu0 0
    %732 = vmatpush1.bf16.xpose.msra.mxu0 0
    %733 = vmatprep.subr.bf16.mxu0 0
    %734 = vmatpush1.bf16.xpose.msra.mxu0 0
    %735 = vmatprep.subr.bf16.mxu0 0
    %736 = vmatpush1.bf16.xpose.msra.mxu0 0
    %737 = vmatprep.subr.bf16.mxu0 0
    %738 = vmatpush1.bf16.xpose.msra.mxu0 0
    %739 = vmatprep.subr.bf16.mxu0 0
    %740 = vmatpush1.bf16.xpose.msra.mxu0 0
    %741 = vmatprep.subr.bf16.mxu0 0
    %742 = vmatpush1.bf16.xpose.msra.mxu0 0
    %743 = vmatprep.subr.bf16.mxu0 0
    %744 = vmatpush1.bf16.xpose.msra.mxu0 0
    %745 = vmatprep.subr.bf16.mxu0 0
    %746 = vmatpush1.bf16.xpose.msra.mxu0 0
    %747 = vmatprep.mubr.bf16.mxu0 0
    %748 = vmatmul.mubr.bf16.gmra.mrb[0].mxu0 %v710
    %v749 = vpop.f32.mrb[0].mxu0
    %v750 = vadd.f32 0.0, %v749
    %v751 = vpop.f32.mrb[0].mxu0
    %v752 = vpop.f32.mrb[0].mxu0
    %v753 = vpop.f32.mrb[0].mxu0
    %754 = vdwg.mxu0
    %v756 = vsel %vm524, %v513, 0
    %v759 = vsel %vm524, %v521, 0
    %761 = vmatprep.subr.bf16.mxu0 0
    %762 = vmatpush1.bf16.xpose.msra.mxu0 %v759
    %763 = vmatprep.subr.bf16.mxu0 0
    %764 = vmatpush1.bf16.xpose.msra.mxu0 0
    %765 = vmatprep.subr.bf16.mxu0 0
    %766 = vmatpush1.bf16.xpose.msra.mxu0 0
    %767 = vmatprep.subr.bf16.mxu0 0
    %768 = vmatpush1.bf16.xpose.msra.mxu0 0
    %769 = vmatprep.subr.bf16.mxu0 0
    %770 = vmatpush1.bf16.xpose.msra.mxu0 0
    %771 = vmatprep.subr.bf16.mxu0 0
    %772 = vmatpush1.bf16.xpose.msra.mxu0 0
    %773 = vmatprep.subr.bf16.mxu0 0
    %774 = vmatpush1.bf16.xpose.msra.mxu0 0
    %775 = vmatprep.subr.bf16.mxu0 0
    %776 = vmatpush1.bf16.xpose.msra.mxu0 0
    %777 = vmatprep.subr.bf16.mxu0 0
    %778 = vmatpush1.bf16.xpose.msra.mxu0 0
    %779 = vmatprep.subr.bf16.mxu0 0
    %780 = vmatpush1.bf16.xpose.msra.mxu0 0
    %781 = vmatprep.subr.bf16.mxu0 0
    %782 = vmatpush1.bf16.xpose.msra.mxu0 0
    %783 = vmatprep.subr.bf16.mxu0 0
    %784 = vmatpush1.bf16.xpose.msra.mxu0 0
    %785 = vmatprep.subr.bf16.mxu0 0
    %786 = vmatpush1.bf16.xpose.msra.mxu0 0
    %787 = vmatprep.subr.bf16.mxu0 0
    %788 = vmatpush1.bf16.xpose.msra.mxu0 0
    %789 = vmatprep.subr.bf16.mxu0 0
    %790 = vmatpush1.bf16.xpose.msra.mxu0 0
    %791 = vmatprep.subr.bf16.mxu0 0
    %792 = vmatpush1.bf16.xpose.msra.mxu0 0
    %793 = vmatprep.mubr.bf16.mxu0 0
    %794 = vmatmul.mubr.bf16.gmra.mrb[0].mxu0 %v756
    %v795 = vpop.f32.mrb[0].mxu0
    %v796 = vadd.f32 0.0, %v795
    %v797 = vpop.f32.mrb[0].mxu0
    %v798 = vpop.f32.mrb[0].mxu0
    %v799 = vpop.f32.mrb[0].mxu0
    %800 = vdwg.mxu0
    %v802 = vsel %vm524, %v514, 0
    %v805 = vsel %vm524, %v522, 0
    %807 = vmatprep.subr.bf16.mxu0 0
    %808 = vmatpush1.bf16.xpose.msra.mxu0 %v805
    %809 = vmatprep.subr.bf16.mxu0 0
    %810 = vmatpush1.bf16.xpose.msra.mxu0 0
    %811 = vmatprep.subr.bf16.mxu0 0
    %812 = vmatpush1.bf16.xpose.msra.mxu0 0
    %813 = vmatprep.subr.bf16.mxu0 0
    %814 = vmatpush1.bf16.xpose.msra.mxu0 0
    %815 = vmatprep.subr.bf16.mxu0 0
    %816 = vmatpush1.bf16.xpose.msra.mxu0 0
    %817 = vmatprep.subr.bf16.mxu0 0
    %818 = vmatpush1.bf16.xpose.msra.mxu0 0
    %819 = vmatprep.subr.bf16.mxu0 0
    %820 = vmatpush1.bf16.xpose.msra.mxu0 0
    %821 = vmatprep.subr.bf16.mxu0 0
    %822 = vmatpush1.bf16.xpose.msra.mxu0 0
    %823 = vmatprep.subr.bf16.mxu0 0
    %824 = vmatpush1.bf16.xpose.msra.mxu0 0
    %825 = vmatprep.subr.bf16.mxu0 0
    %826 = vmatpush1.bf16.xpose.msra.mxu0 0
    %827 = vmatprep.subr.bf16.mxu0 0
    %828 = vmatpush1.bf16.xpose.msra.mxu0 0
    %829 = vmatprep.subr.bf16.mxu0 0
    %830 = vmatpush1.bf16.xpose.msra.mxu0 0
    %831 = vmatprep.subr.bf16.mxu0 0
    %832 = vmatpush1.bf16.xpose.msra.mxu0 0
    %833 = vmatprep.subr.bf16.mxu0 0
    %834 = vmatpush1.bf16.xpose.msra.mxu0 0
    %835 = vmatprep.subr.bf16.mxu0 0
    %836 = vmatpush1.bf16.xpose.msra.mxu0 0
    %837 = vmatprep.subr.bf16.mxu0 0
    %838 = vmatpush1.bf16.xpose.msra.mxu0 0
    %839 = vmatprep.mubr.bf16.mxu0 0
    %840 = vmatmul.mubr.bf16.gmra.mrb[0].mxu0 %v802
    %v841 = vpop.f32.mrb[0].mxu0
    %v842 = vadd.f32 0.0, %v841
    %v843 = vpop.f32.mrb[0].mxu0
    %v844 = vpop.f32.mrb[0].mxu0
    %v845 = vpop.f32.mrb[0].mxu0
    %846 = vdwg.mxu0
    %v848 = vsel %vm524, %v515, 0
    %v851 = vsel %vm524, %v523, 0
    %853 = vmatprep.subr.bf16.mxu0 0
    %854 = vmatpush1.bf16.xpose.msra.mxu0 %v851
    %855 = vmatprep.subr.bf16.mxu0 0
    %856 = vmatpush1.bf16.xpose.msra.mxu0 0
    %857 = vmatprep.subr.bf16.mxu0 0
    %858 = vmatpush1.bf16.xpose.msra.mxu0 0
    %859 = vmatprep.subr.bf16.mxu0 0
    %860 = vmatpush1.bf16.xpose.msra.mxu0 0
    %861 = vmatprep.subr.bf16.mxu0 0
    %862 = vmatpush1.bf16.xpose.msra.mxu0 0
    %863 = vmatprep.subr.bf16.mxu0 0
    %864 = vmatpush1.bf16.xpose.msra.mxu0 0
    %865 = vmatprep.subr.bf16.mxu0 0
    %866 = vmatpush1.bf16.xpose.msra.mxu0 0
    %867 = vmatprep.subr.bf16.mxu0 0
    %868 = vmatpush1.bf16.xpose.msra.mxu0 0
    %869 = vmatprep.subr.bf16.mxu0 0
    %870 = vmatpush1.bf16.xpose.msra.mxu0 0
    %871 = vmatprep.subr.bf16.mxu0 0
    %872 = vmatpush1.bf16.xpose.msra.mxu0 0
    %873 = vmatprep.subr.bf16.mxu0 0
    %874 = vmatpush1.bf16.xpose.msra.mxu0 0
    %875 = vmatprep.subr.bf16.mxu0 0
    %876 = vmatpush1.bf16.xpose.msra.mxu0 0
    %877 = vmatprep.subr.bf16.mxu0 0
    %878 = vmatpush1.bf16.xpose.msra.mxu0 0
    %879 = vmatprep.subr.bf16.mxu0 0
    %880 = vmatpush1.bf16.xpose.msra.mxu0 0
    %881 = vmatprep.subr.bf16.mxu0 0
    %882 = vmatpush1.bf16.xpose.msra.mxu0 0
    %883 = vmatprep.subr.bf16.mxu0 0
    %884 = vmatpush1.bf16.xpose.msra.mxu0 0
    %885 = vmatprep.mubr.bf16.mxu0 0
    %886 = vmatmul.mubr.bf16.gmra.mrb[0].mxu0 %v848
    %v887 = vpop.f32.mrb[0].mxu0
    %v888 = vadd.f32 0.0, %v887
    %v889 = vpop.f32.mrb[0].mxu0
    %v890 = vpop.f32.mrb[0].mxu0
    %v891 = vpop.f32.mrb[0].mxu0
    %892 = vdwg.mxu0
    %vm893 = vcmask 64512
    %v894 = vsel %vm893, %v566, -inf
    %895 = vmax.xlane.f32.xlu0 %v894
    %v896 = vpop.xlane.xlu0 %895
    %v897 = vsel %vm893, %v612, -inf
    %898 = vmax.xlane.f32.xlu0 %v897
    %v899 = vpop.xlane.xlu0 %898
    %v900 = vsel %vm893, %v658, -inf
    %901 = vmax.xlane.f32.xlu0 %v900
    %v902 = vpop.xlane.xlu0 %901
    %v903 = vsel %vm893, %v704, -inf
    %904 = vmax.xlane.f32.xlu0 %v903
    %v905 = vpop.xlane.xlu0 %904
    %v906 = vsel %vm893, %v750, -inf
    %907 = vmax.xlane.f32.xlu0 %v906
    %v908 = vpop.xlane.xlu0 %907
    %v909 = vsel %vm893, %v796, -inf
    %910 = vmax.xlane.f32.xlu0 %v909
    %v911 = vpop.xlane.xlu0 %910
    %v912 = vsel %vm893, %v842, -inf
    %913 = vmax.xlane.f32.xlu0 %v912
    %v914 = vpop.xlane.xlu0 %913
    %v915 = vsel %vm893, %v888, -inf
    %916 = vmax.xlane.f32.xlu0 %v915
    %v917 = vpop.xlane.xlu0 %916
    %v918 = vsub.f32 %v566, %v896
    %v919 = vsub.f32 %v612, %v899
    %v920 = vsub.f32 %v658, %v902
    %v921 = vsub.f32 %v704, %v905
    %v922 = vsub.f32 %v750, %v908
    %v923 = vsub.f32 %v796, %v911
    %v924 = vsub.f32 %v842, %v914
    %v925 = vsub.f32 %v888, %v917
    %v926 = vmul.f32 %v918, 1.442695
    %v927 = vpow.pop %v926
    %v928 = vmul.f32 %v919, 1.442695
    %v929 = vpow.pop %v928
    %v930 = vmul.f32 %v920, 1.442695
    %v931 = vpow.pop %v930
    %v932 = vmul.f32 %v921, 1.442695
    %v933 = vpow.pop %v932
    %v934 = vmul.f32 %v922, 1.442695
    %v935 = vpow.pop %v934
    %v936 = vmul.f32 %v923, 1.442695
    %v937 = vpow.pop %v936
    %v938 = vmul.f32 %v924, 1.442695
    %v939 = vpow.pop %v938
    %v940 = vmul.f32 %v925, 1.442695
    %v941 = vpow.pop %v940
    %v942 = vsel %vm893, %v927, 0.0
    %943 = vadd.xlane.f32.xlu0 %v942
    %v944 = vpop.xlane.xlu0 %943
    %v945 = vsel %vm893, %v929, 0.0
    %946 = vadd.xlane.f32.xlu0 %v945
    %v947 = vpop.xlane.xlu0 %946
    %v948 = vsel %vm893, %v931, 0.0
    %949 = vadd.xlane.f32.xlu0 %v948
    %v950 = vpop.xlane.xlu0 %949
    %v951 = vsel %vm893, %v933, 0.0
    %952 = vadd.xlane.f32.xlu0 %v951
    %v953 = vpop.xlane.xlu0 %952
    %v954 = vsel %vm893, %v935, 0.0
    %955 = vadd.xlane.f32.xlu0 %v954
    %v956 = vpop.xlane.xlu0 %955
    %v957 = vsel %vm893, %v937, 0.0
    %958 = vadd.xlane.f32.xlu0 %v957
    %v959 = vpop.xlane.xlu0 %958
    %v960 = vsel %vm893, %v939, 0.0
    %961 = vadd.xlane.f32.xlu0 %v960
    %v962 = vpop.xlane.xlu0 %961
    %v963 = vsel %vm893, %v941, 0.0
    %964 = vadd.xlane.f32.xlu0 %v963
    %v965 = vpop.xlane.xlu0 %964
    %v966 = vrcp.pop %v944
    %v967 = vrcp.pop %v947
    %v968 = vrcp.pop %v950
    %v969 = vrcp.pop %v953
    %v970 = vrcp.pop %v956
    %v971 = vrcp.pop %v959
    %v972 = vrcp.pop %v962
    %v973 = vrcp.pop %v965
    %v974 = vmul.f32 %v927, %v966
    %v975 = vmul.f32 %v929, %v967
    %v976 = vmul.f32 %v931, %v968
    %v977 = vmul.f32 %v933, %v969
    %v978 = vmul.f32 %v935, %v970
    %v979 = vmul.f32 %v937, %v971
    %v980 = vmul.f32 %v939, %v972
    %v981 = vmul.f32 %v941, %v973
    %v982 = vpack.c.bf16 %v974, %v974
    %v983 = vpack.c.bf16 %v975, %v975
    %v984 = vpack.c.bf16 %v976, %v976
    %v985 = vpack.c.bf16 %v977, %v977
    %v986 = vpack.c.bf16 %v978, %v978
    %v987 = vpack.c.bf16 %v979, %v979
    %v988 = vpack.c.bf16 %v980, %v980
    %v989 = vpack.c.bf16 %v981, %v981
    %v990 = vpack.c.bf16 %v436, %v436
    %v991 = vpack.c.bf16 %v488, %v488
    %v992 = vpack.c.bf16 %v491, %v491
    %v993 = vpack.c.bf16 %v494, %v494
    %v994 = vpack.c.bf16 %v497, %v497
    %v995 = vpack.c.bf16 %v500, %v500
    %v996 = vpack.c.bf16 %v503, %v503
    %v997 = vpack.c.bf16 %v506, %v506
    %v999 = vsel %vm893, %v982, 0
    %vm1001 = vcmask 1043456
    %v1003 = vsel %vm1001, %v990, 0
    %1005 = vmatprep.subr.bf16.mxu0 0
    %1006 = vmatpush1.bf16.msra.mxu0 %v1003
    %1007 = vmatprep.subr.bf16.mxu0 0
    %1008 = vmatpush1.bf16.msra.mxu0 0
    %1009 = vmatprep.subr.bf16.mxu0 0
    %1010 = vmatpush1.bf16.msra.mxu0 0
    %1011 = vmatprep.subr.bf16.mxu0 0
    %1012 = vmatpush1.bf16.msra.mxu0 0
    %1013 = vmatprep.subr.bf16.mxu0 0
    %1014 = vmatpush1.bf16.msra.mxu0 0
    %1015 = vmatprep.subr.bf16.mxu0 0
    %1016 = vmatpush1.bf16.msra.mxu0 0
    %1017 = vmatprep.subr.bf16.mxu0 0
    %1018 = vmatpush1.bf16.msra.mxu0 0
    %1019 = vmatprep.subr.bf16.mxu0 0
    %1020 = vmatpush1.bf16.msra.mxu0 0
    %1021 = vmatprep.subr.bf16.mxu0 0
    %1022 = vmatpush1.bf16.msra.mxu0 0
    %1023 = vmatprep.subr.bf16.mxu0 0
    %1024 = vmatpush1.bf16.msra.mxu0 0
    %1025 = vmatprep.subr.bf16.mxu0 0
    %1026 = vmatpush1.bf16.msra.mxu0 0
    %1027 = vmatprep.subr.bf16.mxu0 0
    %1028 = vmatpush1.bf16.msra.mxu0 0
    %1029 = vmatprep.subr.bf16.mxu0 0
    %1030 = vmatpush1.bf16.msra.mxu0 0
    %1031 = vmatprep.subr.bf16.mxu0 0
    %1032 = vmatpush1.bf16.msra.mxu0 0
    %1033 = vmatprep.subr.bf16.mxu0 0
    %1034 = vmatpush1.bf16.msra.mxu0 0
    %1035 = vmatprep.subr.bf16.mxu0 0
    %1036 = vmatpush1.bf16.msra.mxu0 0
    %1037 = vmatprep.mubr.bf16.mxu0 0
    %1038 = vmatmul.mubr.bf16.gmra.mrb[0].mxu0 %v999
    %v1039 = vpop.f32.mrb[0].mxu0
    %v1040 = vadd.f32 0.0, %v1039
    %v1041 = vpop.f32.mrb[0].mxu0
    %v1042 = vpop.f32.mrb[0].mxu0
    %v1043 = vpop.f32.mrb[0].mxu0
    %1044 = vdwg.mxu0
    %v1046 = vsel %vm893, %v983, 0
    %v1049 = vsel %vm1001, %v991, 0
    %1051 = vmatprep.subr.bf16.mxu0 0
    %1052 = vmatpush1.bf16.msra.mxu0 %v1049
    %1053 = vmatprep.subr.bf16.mxu0 0
    %1054 = vmatpush1.bf16.msra.mxu0 0
    %1055 = vmatprep.subr.bf16.mxu0 0
    %1056 = vmatpush1.bf16.msra.mxu0 0
    %1057 = vmatprep.subr.bf16.mxu0 0
    %1058 = vmatpush1.bf16.msra.mxu0 0
    %1059 = vmatprep.subr.bf16.mxu0 0
    %1060 = vmatpush1.bf16.msra.mxu0 0
    %1061 = vmatprep.subr.bf16.mxu0 0
    %1062 = vmatpush1.bf16.msra.mxu0 0
    %1063 = vmatprep.subr.bf16.mxu0 0
    %1064 = vmatpush1.bf16.msra.mxu0 0
    %1065 = vmatprep.subr.bf16.mxu0 0
    %1066 = vmatpush1.bf16.msra.mxu0 0
    %1067 = vmatprep.subr.bf16.mxu0 0
    %1068 = vmatpush1.bf16.msra.mxu0 0
    %1069 = vmatprep.subr.bf16.mxu0 0
    %1070 = vmatpush1.bf16.msra.mxu0 0
    %1071 = vmatprep.subr.bf16.mxu0 0
    %1072 = vmatpush1.bf16.msra.mxu0 0
    %1073 = vmatprep.subr.bf16.mxu0 0
    %1074 = vmatpush1.bf16.msra.mxu0 0
    %1075 = vmatprep.subr.bf16.mxu0 0
    %1076 = vmatpush1.bf16.msra.mxu0 0
    %1077 = vmatprep.subr.bf16.mxu0 0
    %1078 = vmatpush1.bf16.msra.mxu0 0
    %1079 = vmatprep.subr.bf16.mxu0 0
    %1080 = vmatpush1.bf16.msra.mxu0 0
    %1081 = vmatprep.subr.bf16.mxu0 0
    %1082 = vmatpush1.bf16.msra.mxu0 0
    %1083 = vmatprep.mubr.bf16.mxu0 0
    %1084 = vmatmul.mubr.bf16.gmra.mrb[0].mxu0 %v1046
    %v1085 = vpop.f32.mrb[0].mxu0
    %v1086 = vadd.f32 0.0, %v1085
    %v1087 = vpop.f32.mrb[0].mxu0
    %v1088 = vpop.f32.mrb[0].mxu0
    %v1089 = vpop.f32.mrb[0].mxu0
    %1090 = vdwg.mxu0
    %v1092 = vsel %vm893, %v984, 0
    %v1095 = vsel %vm1001, %v992, 0
    %1097 = vmatprep.subr.bf16.mxu0 0
    %1098 = vmatpush1.bf16.msra.mxu0 %v1095
    %1099 = vmatprep.subr.bf16.mxu0 0
    %1100 = vmatpush1.bf16.msra.mxu0 0
    %1101 = vmatprep.subr.bf16.mxu0 0
    %1102 = vmatpush1.bf16.msra.mxu0 0
    %1103 = vmatprep.subr.bf16.mxu0 0
    %1104 = vmatpush1.bf16.msra.mxu0 0
    %1105 = vmatprep.subr.bf16.mxu0 0
    %1106 = vmatpush1.bf16.msra.mxu0 0
    %1107 = vmatprep.subr.bf16.mxu0 0
    %1108 = vmatpush1.bf16.msra.mxu0 0
    %1109 = vmatprep.subr.bf16.mxu0 0
    %1110 = vmatpush1.bf16.msra.mxu0 0
    %1111 = vmatprep.subr.bf16.mxu0 0
    %1112 = vmatpush1.bf16.msra.mxu0 0
    %1113 = vmatprep.subr.bf16.mxu0 0
    %1114 = vmatpush1.bf16.msra.mxu0 0
    %1115 = vmatprep.subr.bf16.mxu0 0
    %1116 = vmatpush1.bf16.msra.mxu0 0
    %1117 = vmatprep.subr.bf16.mxu0 0
    %1118 = vmatpush1.bf16.msra.mxu0 0
    %1119 = vmatprep.subr.bf16.mxu0 0
    %1120 = vmatpush1.bf16.msra.mxu0 0
    %1121 = vmatprep.subr.bf16.mxu0 0
    %1122 = vmatpush1.bf16.msra.mxu0 0
    %1123 = vmatprep.subr.bf16.mxu0 0
    %1124 = vmatpush1.bf16.msra.mxu0 0
    %1125 = vmatprep.subr.bf16.mxu0 0
    %1126 = vmatpush1.bf16.msra.mxu0 0
    %1127 = vmatprep.subr.bf16.mxu0 0
    %1128 = vmatpush1.bf16.msra.mxu0 0
    %1129 = vmatprep.mubr.bf16.mxu0 0
    %1130 = vmatmul.mubr.bf16.gmra.mrb[0].mxu0 %v1092
    %v1131 = vpop.f32.mrb[0].mxu0
    %v1132 = vadd.f32 0.0, %v1131
    %v1133 = vpop.f32.mrb[0].mxu0
    %v1134 = vpop.f32.mrb[0].mxu0
    %v1135 = vpop.f32.mrb[0].mxu0
    %1136 = vdwg.mxu0
    %v1138 = vsel %vm893, %v985, 0
    %v1141 = vsel %vm1001, %v993, 0
    %1143 = vmatprep.subr.bf16.mxu0 0
    %1144 = vmatpush1.bf16.msra.mxu0 %v1141
    %1145 = vmatprep.subr.bf16.mxu0 0
    %1146 = vmatpush1.bf16.msra.mxu0 0
    %1147 = vmatprep.subr.bf16.mxu0 0
    %1148 = vmatpush1.bf16.msra.mxu0 0
    %1149 = vmatprep.subr.bf16.mxu0 0
    %1150 = vmatpush1.bf16.msra.mxu0 0
    %1151 = vmatprep.subr.bf16.mxu0 0
    %1152 = vmatpush1.bf16.msra.mxu0 0
    %1153 = vmatprep.subr.bf16.mxu0 0
    %1154 = vmatpush1.bf16.msra.mxu0 0
    %1155 = vmatprep.subr.bf16.mxu0 0
    %1156 = vmatpush1.bf16.msra.mxu0 0
    %1157 = vmatprep.subr.bf16.mxu0 0
    %1158 = vmatpush1.bf16.msra.mxu0 0
    %1159 = vmatprep.subr.bf16.mxu0 0
    %1160 = vmatpush1.bf16.msra.mxu0 0
    %1161 = vmatprep.subr.bf16.mxu0 0
    %1162 = vmatpush1.bf16.msra.mxu0 0
    %1163 = vmatprep.subr.bf16.mxu0 0
    %1164 = vmatpush1.bf16.msra.mxu0 0
    %1165 = vmatprep.subr.bf16.mxu0 0
    %1166 = vmatpush1.bf16.msra.mxu0 0
    %1167 = vmatprep.subr.bf16.mxu0 0
    %1168 = vmatpush1.bf16.msra.mxu0 0
    %1169 = vmatprep.subr.bf16.mxu0 0
    %1170 = vmatpush1.bf16.msra.mxu0 0
    %1171 = vmatprep.subr.bf16.mxu0 0
    %1172 = vmatpush1.bf16.msra.mxu0 0
    %1173 = vmatprep.subr.bf16.mxu0 0
    %1174 = vmatpush1.bf16.msra.mxu0 0
    %1175 = vmatprep.mubr.bf16.mxu0 0
    %1176 = vmatmul.mubr.bf16.gmra.mrb[0].mxu0 %v1138
    %v1177 = vpop.f32.mrb[0].mxu0
    %v1178 = vadd.f32 0.0, %v1177
    %v1179 = vpop.f32.mrb[0].mxu0
    %v1180 = vpop.f32.mrb[0].mxu0
    %v1181 = vpop.f32.mrb[0].mxu0
    %1182 = vdwg.mxu0
    %v1184 = vsel %vm893, %v986, 0
    %v1187 = vsel %vm1001, %v994, 0
    %1189 = vmatprep.subr.bf16.mxu0 0
    %1190 = vmatpush1.bf16.msra.mxu0 %v1187
    %1191 = vmatprep.subr.bf16.mxu0 0
    %1192 = vmatpush1.bf16.msra.mxu0 0
    %1193 = vmatprep.subr.bf16.mxu0 0
    %1194 = vmatpush1.bf16.msra.mxu0 0
    %1195 = vmatprep.subr.bf16.mxu0 0
    %1196 = vmatpush1.bf16.msra.mxu0 0
    %1197 = vmatprep.subr.bf16.mxu0 0
    %1198 = vmatpush1.bf16.msra.mxu0 0
    %1199 = vmatprep.subr.bf16.mxu0 0
    %1200 = vmatpush1.bf16.msra.mxu0 0
    %1201 = vmatprep.subr.bf16.mxu0 0
    %1202 = vmatpush1.bf16.msra.mxu0 0
    %1203 = vmatprep.subr.bf16.mxu0 0
    %1204 = vmatpush1.bf16.msra.mxu0 0
    %1205 = vmatprep.subr.bf16.mxu0 0
    %1206 = vmatpush1.bf16.msra.mxu0 0
    %1207 = vmatprep.subr.bf16.mxu0 0
    %1208 = vmatpush1.bf16.msra.mxu0 0
    %1209 = vmatprep.subr.bf16.mxu0 0
    %1210 = vmatpush1.bf16.msra.mxu0 0
    %1211 = vmatprep.subr.bf16.mxu0 0
    %1212 = vmatpush1.bf16.msra.mxu0 0
    %1213 = vmatprep.subr.bf16.mxu0 0
    %1214 = vmatpush1.bf16.msra.mxu0 0
    %1215 = vmatprep.subr.bf16.mxu0 0
    %1216 = vmatpush1.bf16.msra.mxu0 0
    %1217 = vmatprep.subr.bf16.mxu0 0
    %1218 = vmatpush1.bf16.msra.mxu0 0
    %1219 = vmatprep.subr.bf16.mxu0 0
    %1220 = vmatpush1.bf16.msra.mxu0 0
    %1221 = vmatprep.mubr.bf16.mxu0 0
    %1222 = vmatmul.mubr.bf16.gmra.mrb[0].mxu0 %v1184
    %v1223 = vpop.f32.mrb[0].mxu0
    %v1224 = vadd.f32 0.0, %v1223
    %v1225 = vpop.f32.mrb[0].mxu0
    %v1226 = vpop.f32.mrb[0].mxu0
    %v1227 = vpop.f32.mrb[0].mxu0
    %1228 = vdwg.mxu0
    %v1230 = vsel %vm893, %v987, 0
    %v1233 = vsel %vm1001, %v995, 0
    %1235 = vmatprep.subr.bf16.mxu0 0
    %1236 = vmatpush1.bf16.msra.mxu0 %v1233
    %1237 = vmatprep.subr.bf16.mxu0 0
    %1238 = vmatpush1.bf16.msra.mxu0 0
    %1239 = vmatprep.subr.bf16.mxu0 0
    %1240 = vmatpush1.bf16.msra.mxu0 0
    %1241 = vmatprep.subr.bf16.mxu0 0
    %1242 = vmatpush1.bf16.msra.mxu0 0
    %1243 = vmatprep.subr.bf16.mxu0 0
    %1244 = vmatpush1.bf16.msra.mxu0 0
    %1245 = vmatprep.subr.bf16.mxu0 0
    %1246 = vmatpush1.bf16.msra.mxu0 0
    %1247 = vmatprep.subr.bf16.mxu0 0
    %1248 = vmatpush1.bf16.msra.mxu0 0
    %1249 = vmatprep.subr.bf16.mxu0 0
    %1250 = vmatpush1.bf16.msra.mxu0 0
    %1251 = vmatprep.subr.bf16.mxu0 0
    %1252 = vmatpush1.bf16.msra.mxu0 0
    %1253 = vmatprep.subr.bf16.mxu0 0
    %1254 = vmatpush1.bf16.msra.mxu0 0
    %1255 = vmatprep.subr.bf16.mxu0 0
    %1256 = vmatpush1.bf16.msra.mxu0 0
    %1257 = vmatprep.subr.bf16.mxu0 0
    %1258 = vmatpush1.bf16.msra.mxu0 0
    %1259 = vmatprep.subr.bf16.mxu0 0
    %1260 = vmatpush1.bf16.msra.mxu0 0
    %1261 = vmatprep.subr.bf16.mxu0 0
    %1262 = vmatpush1.bf16.msra.mxu0 0
    %1263 = vmatprep.subr.bf16.mxu0 0
    %1264 = vmatpush1.bf16.msra.mxu0 0
    %1265 = vmatprep.subr.bf16.mxu0 0
    %1266 = vmatpush1.bf16.msra.mxu0 0
    %1267 = vmatprep.mubr.bf16.mxu0 0
    %1268 = vmatmul.mubr.bf16.gmra.mrb[0].mxu0 %v1230
    %v1269 = vpop.f32.mrb[0].mxu0
    %v1270 = vadd.f32 0.0, %v1269
    %v1271 = vpop.f32.mrb[0].mxu0
    %v1272 = vpop.f32.mrb[0].mxu0
    %v1273 = vpop.f32.mrb[0].mxu0
    %1274 = vdwg.mxu0
    %v1276 = vsel %vm893, %v988, 0
    %v1279 = vsel %vm1001, %v996, 0
    %1281 = vmatprep.subr.bf16.mxu0 0
    %1282 = vmatpush1.bf16.msra.mxu0 %v1279
    %1283 = vmatprep.subr.bf16.mxu0 0
    %1284 = vmatpush1.bf16.msra.mxu0 0
    %1285 = vmatprep.subr.bf16.mxu0 0
    %1286 = vmatpush1.bf16.msra.mxu0 0
    %1287 = vmatprep.subr.bf16.mxu0 0
    %1288 = vmatpush1.bf16.msra.mxu0 0
    %1289 = vmatprep.subr.bf16.mxu0 0
    %1290 = vmatpush1.bf16.msra.mxu0 0
    %1291 = vmatprep.subr.bf16.mxu0 0
    %1292 = vmatpush1.bf16.msra.mxu0 0
    %1293 = vmatprep.subr.bf16.mxu0 0
    %1294 = vmatpush1.bf16.msra.mxu0 0
    %1295 = vmatprep.subr.bf16.mxu0 0
    %1296 = vmatpush1.bf16.msra.mxu0 0
    %1297 = vmatprep.subr.bf16.mxu0 0
    %1298 = vmatpush1.bf16.msra.mxu0 0
    %1299 = vmatprep.subr.bf16.mxu0 0
    %1300 = vmatpush1.bf16.msra.mxu0 0
    %1301 = vmatprep.subr.bf16.mxu0 0
    %1302 = vmatpush1.bf16.msra.mxu0 0
    %1303 = vmatprep.subr.bf16.mxu0 0
    %1304 = vmatpush1.bf16.msra.mxu0 0
    %1305 = vmatprep.subr.bf16.mxu0 0
    %1306 = vmatpush1.bf16.msra.mxu0 0
    %1307 = vmatprep.subr.bf16.mxu0 0
    %1308 = vmatpush1.bf16.msra.mxu0 0
    %1309 = vmatprep.subr.bf16.mxu0 0
    %1310 = vmatpush1.bf16.msra.mxu0 0
    %1311 = vmatprep.subr.bf16.mxu0 0
    %1312 = vmatpush1.bf16.msra.mxu0 0
    %1313 = vmatprep.mubr.bf16.mxu0 0
    %1314 = vmatmul.mubr.bf16.gmra.mrb[0].mxu0 %v1276
    %v1315 = vpop.f32.mrb[0].mxu0
    %v1316 = vadd.f32 0.0, %v1315
    %v1317 = vpop.f32.mrb[0].mxu0
    %v1318 = vpop.f32.mrb[0].mxu0
    %v1319 = vpop.f32.mrb[0].mxu0
    %1320 = vdwg.mxu0
    %v1322 = vsel %vm893, %v989, 0
    %v1325 = vsel %vm1001, %v997, 0
    %1327 = vmatprep.subr.bf16.mxu0 0
    %1328 = vmatpush1.bf16.msra.mxu0 %v1325
    %1329 = vmatprep.subr.bf16.mxu0 0
    %1330 = vmatpush1.bf16.msra.mxu0 0
    %1331 = vmatprep.subr.bf16.mxu0 0
    %1332 = vmatpush1.bf16.msra.mxu0 0
    %1333 = vmatprep.subr.bf16.mxu0 0
    %1334 = vmatpush1.bf16.msra.mxu0 0
    %1335 = vmatprep.subr.bf16.mxu0 0
    %1336 = vmatpush1.bf16.msra.mxu0 0
    %1337 = vmatprep.subr.bf16.mxu0 0
    %1338 = vmatpush1.bf16.msra.mxu0 0
    %1339 = vmatprep.subr.bf16.mxu0 0
    %1340 = vmatpush1.bf16.msra.mxu0 0
    %1341 = vmatprep.subr.bf16.mxu0 0
    %1342 = vmatpush1.bf16.msra.mxu0 0
    %1343 = vmatprep.subr.bf16.mxu0 0
    %1344 = vmatpush1.bf16.msra.mxu0 0
    %1345 = vmatprep.subr.bf16.mxu0 0
    %1346 = vmatpush1.bf16.msra.mxu0 0
    %1347 = vmatprep.subr.bf16.mxu0 0
    %1348 = vmatpush1.bf16.msra.mxu0 0
    %1349 = vmatprep.subr.bf16.mxu0 0
    %1350 = vmatpush1.bf16.msra.mxu0 0
    %1351 = vmatprep.subr.bf16.mxu0 0
    %1352 = vmatpush1.bf16.msra.mxu0 0
    %1353 = vmatprep.subr.bf16.mxu0 0
    %1354 = vmatpush1.bf16.msra.mxu0 0
    %1355 = vmatprep.subr.bf16.mxu0 0
    %1356 = vmatpush1.bf16.msra.mxu0 0
    %1357 = vmatprep.subr.bf16.mxu0 0
    %1358 = vmatpush1.bf16.msra.mxu0 0
    %1359 = vmatprep.mubr.bf16.mxu0 0
    %1360 = vmatmul.mubr.bf16.gmra.mrb[0].mxu0 %v1322
    %v1361 = vpop.f32.mrb[0].mxu0
    %v1362 = vadd.f32 0.0, %v1361
    %v1363 = vpop.f32.mrb[0].mxu0
    %v1364 = vpop.f32.mrb[0].mxu0
    %v1365 = vpop.f32.mrb[0].mxu0
    %1366 = vdwg.mxu0
    %1368 = vrot.lane.b32.xlu0 %v397, 112
    %v1369 = vpop.permute.xlu0 %1368
    %1371 = vrot.lane.b32.xlu0 %v397, 96
    %v1372 = vpop.permute.xlu0 %1371
    %1374 = vrot.lane.b32.xlu0 %v397, 80
    %v1375 = vpop.permute.xlu0 %1374
    %1377 = vrot.lane.b32.xlu0 %v397, 64
    %v1378 = vpop.permute.xlu0 %1377
    %1380 = vrot.lane.b32.xlu0 %v397, 48
    %v1381 = vpop.permute.xlu0 %1380
    %1383 = vrot.lane.b32.xlu0 %v397, 32
    %v1384 = vpop.permute.xlu0 %1383
    %1386 = vrot.lane.b32.xlu0 %v397, 16
    %v1387 = vpop.permute.xlu0 %1386
    %1390 = vrot.lane.b32.xlu0 %v399, 112
    %v1391 = vpop.permute.xlu0 %1390
    %1393 = vrot.lane.b32.xlu0 %v399, 96
    %v1394 = vpop.permute.xlu0 %1393
    %1396 = vrot.lane.b32.xlu0 %v399, 80
    %v1397 = vpop.permute.xlu0 %1396
    %1399 = vrot.lane.b32.xlu0 %v399, 64
    %v1400 = vpop.permute.xlu0 %1399
    %1402 = vrot.lane.b32.xlu0 %v399, 48
    %v1403 = vpop.permute.xlu0 %1402
    %1405 = vrot.lane.b32.xlu0 %v399, 32
    %v1406 = vpop.permute.xlu0 %1405
    %1408 = vrot.lane.b32.xlu0 %v399, 16
    %v1409 = vpop.permute.xlu0 %1408
    %1412 = vrot.lane.b32.xlu0 %v439, 112
    %v1413 = vpop.permute.xlu0 %1412
    %1415 = vrot.lane.b32.xlu0 %v439, 96
    %v1416 = vpop.permute.xlu0 %1415
    %1418 = vrot.lane.b32.xlu0 %v439, 80
    %v1419 = vpop.permute.xlu0 %1418
    %1421 = vrot.lane.b32.xlu0 %v439, 64
    %v1422 = vpop.permute.xlu0 %1421
    %1424 = vrot.lane.b32.xlu0 %v439, 48
    %v1425 = vpop.permute.xlu0 %1424
    %1427 = vrot.lane.b32.xlu0 %v439, 32
    %v1428 = vpop.permute.xlu0 %1427
    %1430 = vrot.lane.b32.xlu0 %v439, 16
    %v1431 = vpop.permute.xlu0 %1430
    %v1433 = vpack.c.bf16 %v397, %v397
    %v1434 = vpack.c.bf16 %v1369, %v1369
    %v1435 = vpack.c.bf16 %v1372, %v1372
    %v1436 = vpack.c.bf16 %v1375, %v1375
    %v1437 = vpack.c.bf16 %v1378, %v1378
    %v1438 = vpack.c.bf16 %v1381, %v1381
    %v1439 = vpack.c.bf16 %v1384, %v1384
    %v1440 = vpack.c.bf16 %v1387, %v1387
    %v1441 = vpack.c.bf16 %v399, %v399
    %v1442 = vpack.c.bf16 %v1391, %v1391
    %v1443 = vpack.c.bf16 %v1394, %v1394
    %v1444 = vpack.c.bf16 %v1397, %v1397
    %v1445 = vpack.c.bf16 %v1400, %v1400
    %v1446 = vpack.c.bf16 %v1403, %v1403
    %v1447 = vpack.c.bf16 %v1406, %v1406
    %v1448 = vpack.c.bf16 %v1409, %v1409
    %v1450 = vsel %vm524, %v1433, 0
    %v1453 = vsel %vm524, %v1441, 0
    %1455 = vmatprep.subr.bf16.mxu0 0
    %1456 = vmatpush1.bf16.xpose.msra.mxu0 %v1453
    %1457 = vmatprep.subr.bf16.mxu0 0
    %1458 = vmatpush1.bf16.xpose.msra.mxu0 0
    %1459 = vmatprep.subr.bf16.mxu0 0
    %1460 = vmatpush1.bf16.xpose.msra.mxu0 0
    %1461 = vmatprep.subr.bf16.mxu0 0
    %1462 = vmatpush1.bf16.xpose.msra.mxu0 0
    %1463 = vmatprep.subr.bf16.mxu0 0
    %1464 = vmatpush1.bf16.xpose.msra.mxu0 0
    %1465 = vmatprep.subr.bf16.mxu0 0
    %1466 = vmatpush1.bf16.xpose.msra.mxu0 0
    %1467 = vmatprep.subr.bf16.mxu0 0
    %1468 = vmatpush1.bf16.xpose.msra.mxu0 0
    %1469 = vmatprep.subr.bf16.mxu0 0
    %1470 = vmatpush1.bf16.xpose.msra.mxu0 0
    %1471 = vmatprep.subr.bf16.mxu0 0
    %1472 = vmatpush1.bf16.xpose.msra.mxu0 0
    %1473 = vmatprep.subr.bf16.mxu0 0
    %1474 = vmatpush1.bf16.xpose.msra.mxu0 0
    %1475 = vmatprep.subr.bf16.mxu0 0
    %1476 = vmatpush1.bf16.xpose.msra.mxu0 0
    %1477 = vmatprep.subr.bf16.mxu0 0
    %1478 = vmatpush1.bf16.xpose.msra.mxu0 0
    %1479 = vmatprep.subr.bf16.mxu0 0
    %1480 = vmatpush1.bf16.xpose.msra.mxu0 0
    %1481 = vmatprep.subr.bf16.mxu0 0
    %1482 = vmatpush1.bf16.xpose.msra.mxu0 0
    %1483 = vmatprep.subr.bf16.mxu0 0
    %1484 = vmatpush1.bf16.xpose.msra.mxu0 0
    %1485 = vmatprep.subr.bf16.mxu0 0
    %1486 = vmatpush1.bf16.xpose.msra.mxu0 0
    %1487 = vmatprep.mubr.bf16.mxu0 0
    %1488 = vmatmul.mubr.bf16.gmra.mrb[0].mxu0 %v1450
    %v1489 = vpop.f32.mrb[0].mxu0
    %v1490 = vadd.f32 0.0, %v1489
    %v1491 = vpop.f32.mrb[0].mxu0
    %v1492 = vpop.f32.mrb[0].mxu0
    %v1493 = vpop.f32.mrb[0].mxu0
    %1494 = vdwg.mxu0
    %v1496 = vsel %vm524, %v1434, 0
    %v1499 = vsel %vm524, %v1442, 0
    %1501 = vmatprep.subr.bf16.mxu0 0
    %1502 = vmatpush1.bf16.xpose.msra.mxu0 %v1499
    %1503 = vmatprep.subr.bf16.mxu0 0
    %1504 = vmatpush1.bf16.xpose.msra.mxu0 0
    %1505 = vmatprep.subr.bf16.mxu0 0
    %1506 = vmatpush1.bf16.xpose.msra.mxu0 0
    %1507 = vmatprep.subr.bf16.mxu0 0
    %1508 = vmatpush1.bf16.xpose.msra.mxu0 0
    %1509 = vmatprep.subr.bf16.mxu0 0
    %1510 = vmatpush1.bf16.xpose.msra.mxu0 0
    %1511 = vmatprep.subr.bf16.mxu0 0
    %1512 = vmatpush1.bf16.xpose.msra.mxu0 0
    %1513 = vmatprep.subr.bf16.mxu0 0
    %1514 = vmatpush1.bf16.xpose.msra.mxu0 0
    %1515 = vmatprep.subr.bf16.mxu0 0
    %1516 = vmatpush1.bf16.xpose.msra.mxu0 0
    %1517 = vmatprep.subr.bf16.mxu0 0
    %1518 = vmatpush1.bf16.xpose.msra.mxu0 0
    %1519 = vmatprep.subr.bf16.mxu0 0
    %1520 = vmatpush1.bf16.xpose.msra.mxu0 0
    %1521 = vmatprep.subr.bf16.mxu0 0
    %1522 = vmatpush1.bf16.xpose.msra.mxu0 0
    %1523 = vmatprep.subr.bf16.mxu0 0
    %1524 = vmatpush1.bf16.xpose.msra.mxu0 0
    %1525 = vmatprep.subr.bf16.mxu0 0
    %1526 = vmatpush1.bf16.xpose.msra.mxu0 0
    %1527 = vmatprep.subr.bf16.mxu0 0
    %1528 = vmatpush1.bf16.xpose.msra.mxu0 0
    %1529 = vmatprep.subr.bf16.mxu0 0
    %1530 = vmatpush1.bf16.xpose.msra.mxu0 0
    %1531 = vmatprep.subr.bf16.mxu0 0
    %1532 = vmatpush1.bf16.xpose.msra.mxu0 0
    %1533 = vmatprep.mubr.bf16.mxu0 0
    %1534 = vmatmul.mubr.bf16.gmra.mrb[0].mxu0 %v1496
    %v1535 = vpop.f32.mrb[0].mxu0
    %v1536 = vadd.f32 0.0, %v1535
    %v1537 = vpop.f32.mrb[0].mxu0
    %v1538 = vpop.f32.mrb[0].mxu0
    %v1539 = vpop.f32.mrb[0].mxu0
    %1540 = vdwg.mxu0
    %v1542 = vsel %vm524, %v1435, 0
    %v1545 = vsel %vm524, %v1443, 0
    %1547 = vmatprep.subr.bf16.mxu0 0
    %1548 = vmatpush1.bf16.xpose.msra.mxu0 %v1545
    %1549 = vmatprep.subr.bf16.mxu0 0
    %1550 = vmatpush1.bf16.xpose.msra.mxu0 0
    %1551 = vmatprep.subr.bf16.mxu0 0
    %1552 = vmatpush1.bf16.xpose.msra.mxu0 0
    %1553 = vmatprep.subr.bf16.mxu0 0
    %1554 = vmatpush1.bf16.xpose.msra.mxu0 0
    %1555 = vmatprep.subr.bf16.mxu0 0
    %1556 = vmatpush1.bf16.xpose.msra.mxu0 0
    %1557 = vmatprep.subr.bf16.mxu0 0
    %1558 = vmatpush1.bf16.xpose.msra.mxu0 0
    %1559 = vmatprep.subr.bf16.mxu0 0
    %1560 = vmatpush1.bf16.xpose.msra.mxu0 0
    %1561 = vmatprep.subr.bf16.mxu0 0
    %1562 = vmatpush1.bf16.xpose.msra.mxu0 0
    %1563 = vmatprep.subr.bf16.mxu0 0
    %1564 = vmatpush1.bf16.xpose.msra.mxu0 0
    %1565 = vmatprep.subr.bf16.mxu0 0
    %1566 = vmatpush1.bf16.xpose.msra.mxu0 0
    %1567 = vmatprep.subr.bf16.mxu0 0
    %1568 = vmatpush1.bf16.xpose.msra.mxu0 0
    %1569 = vmatprep.subr.bf16.mxu0 0
    %1570 = vmatpush1.bf16.xpose.msra.mxu0 0
    %1571 = vmatprep.subr.bf16.mxu0 0
    %1572 = vmatpush1.bf16.xpose.msra.mxu0 0
    %1573 = vmatprep.subr.bf16.mxu0 0
    %1574 = vmatpush1.bf16.xpose.msra.mxu0 0
    %1575 = vmatprep.subr.bf16.mxu0 0
    %1576 = vmatpush1.bf16.xpose.msra.mxu0 0
    %1577 = vmatprep.subr.bf16.mxu0 0
    %1578 = vmatpush1.bf16.xpose.msra.mxu0 0
    %1579 = vmatprep.mubr.bf16.mxu0 0
    %1580 = vmatmul.mubr.bf16.gmra.mrb[0].mxu0 %v1542
    %v1581 = vpop.f32.mrb[0].mxu0
    %v1582 = vadd.f32 0.0, %v1581
    %v1583 = vpop.f32.mrb[0].mxu0
    %v1584 = vpop.f32.mrb[0].mxu0
    %v1585 = vpop.f32.mrb[0].mxu0
    %1586 = vdwg.mxu0
    %v1588 = vsel %vm524, %v1436, 0
    %v1591 = vsel %vm524, %v1444, 0
    %1593 = vmatprep.subr.bf16.mxu0 0
    %1594 = vmatpush1.bf16.xpose.msra.mxu0 %v1591
    %1595 = vmatprep.subr.bf16.mxu0 0
    %1596 = vmatpush1.bf16.xpose.msra.mxu0 0
    %1597 = vmatprep.subr.bf16.mxu0 0
    %1598 = vmatpush1.bf16.xpose.msra.mxu0 0
    %1599 = vmatprep.subr.bf16.mxu0 0
    %1600 = vmatpush1.bf16.xpose.msra.mxu0 0
    %1601 = vmatprep.subr.bf16.mxu0 0
    %1602 = vmatpush1.bf16.xpose.msra.mxu0 0
    %1603 = vmatprep.subr.bf16.mxu0 0
    %1604 = vmatpush1.bf16.xpose.msra.mxu0 0
    %1605 = vmatprep.subr.bf16.mxu0 0
    %1606 = vmatpush1.bf16.xpose.msra.mxu0 0
    %1607 = vmatprep.subr.bf16.mxu0 0
    %1608 = vmatpush1.bf16.xpose.msra.mxu0 0
    %1609 = vmatprep.subr.bf16.mxu0 0
    %1610 = vmatpush1.bf16.xpose.msra.mxu0 0
    %1611 = vmatprep.subr.bf16.mxu0 0
    %1612 = vmatpush1.bf16.xpose.msra.mxu0 0
    %1613 = vmatprep.subr.bf16.mxu0 0
    %1614 = vmatpush1.bf16.xpose.msra.mxu0 0
    %1615 = vmatprep.subr.bf16.mxu0 0
    %1616 = vmatpush1.bf16.xpose.msra.mxu0 0
    %1617 = vmatprep.subr.bf16.mxu0 0
    %1618 = vmatpush1.bf16.xpose.msra.mxu0 0
    %1619 = vmatprep.subr.bf16.mxu0 0
    %1620 = vmatpush1.bf16.xpose.msra.mxu0 0
    %1621 = vmatprep.subr.bf16.mxu0 0
    %1622 = vmatpush1.bf16.xpose.msra.mxu0 0
    %1623 = vmatprep.subr.bf16.mxu0 0
    %1624 = vmatpush1.bf16.xpose.msra.mxu0 0
    %1625 = vmatprep.mubr.bf16.mxu0 0
    %1626 = vmatmul.mubr.bf16.gmra.mrb[0].mxu0 %v1588
    %v1627 = vpop.f32.mrb[0].mxu0
    %v1628 = vadd.f32 0.0, %v1627
    %v1629 = vpop.f32.mrb[0].mxu0
    %v1630 = vpop.f32.mrb[0].mxu0
    %v1631 = vpop.f32.mrb[0].mxu0
    %1632 = vdwg.mxu0
    %v1634 = vsel %vm524, %v1437, 0
    %v1637 = vsel %vm524, %v1445, 0
    %1639 = vmatprep.subr.bf16.mxu0 0
    %1640 = vmatpush1.bf16.xpose.msra.mxu0 %v1637
    %1641 = vmatprep.subr.bf16.mxu0 0
    %1642 = vmatpush1.bf16.xpose.msra.mxu0 0
    %1643 = vmatprep.subr.bf16.mxu0 0
    %1644 = vmatpush1.bf16.xpose.msra.mxu0 0
    %1645 = vmatprep.subr.bf16.mxu0 0
    %1646 = vmatpush1.bf16.xpose.msra.mxu0 0
    %1647 = vmatprep.subr.bf16.mxu0 0
    %1648 = vmatpush1.bf16.xpose.msra.mxu0 0
    %1649 = vmatprep.subr.bf16.mxu0 0
    %1650 = vmatpush1.bf16.xpose.msra.mxu0 0
    %1651 = vmatprep.subr.bf16.mxu0 0
    %1652 = vmatpush1.bf16.xpose.msra.mxu0 0
    %1653 = vmatprep.subr.bf16.mxu0 0
    %1654 = vmatpush1.bf16.xpose.msra.mxu0 0
    %1655 = vmatprep.subr.bf16.mxu0 0
    %1656 = vmatpush1.bf16.xpose.msra.mxu0 0
    %1657 = vmatprep.subr.bf16.mxu0 0
    %1658 = vmatpush1.bf16.xpose.msra.mxu0 0
    %1659 = vmatprep.subr.bf16.mxu0 0
    %1660 = vmatpush1.bf16.xpose.msra.mxu0 0
    %1661 = vmatprep.subr.bf16.mxu0 0
    %1662 = vmatpush1.bf16.xpose.msra.mxu0 0
    %1663 = vmatprep.subr.bf16.mxu0 0
    %1664 = vmatpush1.bf16.xpose.msra.mxu0 0
    %1665 = vmatprep.subr.bf16.mxu0 0
    %1666 = vmatpush1.bf16.xpose.msra.mxu0 0
    %1667 = vmatprep.subr.bf16.mxu0 0
    %1668 = vmatpush1.bf16.xpose.msra.mxu0 0
    %1669 = vmatprep.subr.bf16.mxu0 0
    %1670 = vmatpush1.bf16.xpose.msra.mxu0 0
    %1671 = vmatprep.mubr.bf16.mxu0 0
    %1672 = vmatmul.mubr.bf16.gmra.mrb[0].mxu0 %v1634
    %v1673 = vpop.f32.mrb[0].mxu0
    %v1674 = vadd.f32 0.0, %v1673
    %v1675 = vpop.f32.mrb[0].mxu0
    %v1676 = vpop.f32.mrb[0].mxu0
    %v1677 = vpop.f32.mrb[0].mxu0
    %1678 = vdwg.mxu0
    %v1680 = vsel %vm524, %v1438, 0
    %v1683 = vsel %vm524, %v1446, 0
    %1685 = vmatprep.subr.bf16.mxu0 0
    %1686 = vmatpush1.bf16.xpose.msra.mxu0 %v1683
    %1687 = vmatprep.subr.bf16.mxu0 0
    %1688 = vmatpush1.bf16.xpose.msra.mxu0 0
    %1689 = vmatprep.subr.bf16.mxu0 0
    %1690 = vmatpush1.bf16.xpose.msra.mxu0 0
    %1691 = vmatprep.subr.bf16.mxu0 0
    %1692 = vmatpush1.bf16.xpose.msra.mxu0 0
    %1693 = vmatprep.subr.bf16.mxu0 0
    %1694 = vmatpush1.bf16.xpose.msra.mxu0 0
    %1695 = vmatprep.subr.bf16.mxu0 0
    %1696 = vmatpush1.bf16.xpose.msra.mxu0 0
    %1697 = vmatprep.subr.bf16.mxu0 0
    %1698 = vmatpush1.bf16.xpose.msra.mxu0 0
    %1699 = vmatprep.subr.bf16.mxu0 0
    %1700 = vmatpush1.bf16.xpose.msra.mxu0 0
    %1701 = vmatprep.subr.bf16.mxu0 0
    %1702 = vmatpush1.bf16.xpose.msra.mxu0 0
    %1703 = vmatprep.subr.bf16.mxu0 0
    %1704 = vmatpush1.bf16.xpose.msra.mxu0 0
    %1705 = vmatprep.subr.bf16.mxu0 0
    %1706 = vmatpush1.bf16.xpose.msra.mxu0 0
    %1707 = vmatprep.subr.bf16.mxu0 0
    %1708 = vmatpush1.bf16.xpose.msra.mxu0 0
    %1709 = vmatprep.subr.bf16.mxu0 0
    %1710 = vmatpush1.bf16.xpose.msra.mxu0 0
    %1711 = vmatprep.subr.bf16.mxu0 0
    %1712 = vmatpush1.bf16.xpose.msra.mxu0 0
    %1713 = vmatprep.subr.bf16.mxu0 0
    %1714 = vmatpush1.bf16.xpose.msra.mxu0 0
    %1715 = vmatprep.subr.bf16.mxu0 0
    %1716 = vmatpush1.bf16.xpose.msra.mxu0 0
    %1717 = vmatprep.mubr.bf16.mxu0 0
    %1718 = vmatmul.mubr.bf16.gmra.mrb[0].mxu0 %v1680
    %v1719 = vpop.f32.mrb[0].mxu0
    %v1720 = vadd.f32 0.0, %v1719
    %v1721 = vpop.f32.mrb[0].mxu0
    %v1722 = vpop.f32.mrb[0].mxu0
    %v1723 = vpop.f32.mrb[0].mxu0
    %1724 = vdwg.mxu0
    %v1726 = vsel %vm524, %v1439, 0
    %v1729 = vsel %vm524, %v1447, 0
    %1731 = vmatprep.subr.bf16.mxu0 0
    %1732 = vmatpush1.bf16.xpose.msra.mxu0 %v1729
    %1733 = vmatprep.subr.bf16.mxu0 0
    %1734 = vmatpush1.bf16.xpose.msra.mxu0 0
    %1735 = vmatprep.subr.bf16.mxu0 0
    %1736 = vmatpush1.bf16.xpose.msra.mxu0 0
    %1737 = vmatprep.subr.bf16.mxu0 0
    %1738 = vmatpush1.bf16.xpose.msra.mxu0 0
    %1739 = vmatprep.subr.bf16.mxu0 0
    %1740 = vmatpush1.bf16.xpose.msra.mxu0 0
    %1741 = vmatprep.subr.bf16.mxu0 0
    %1742 = vmatpush1.bf16.xpose.msra.mxu0 0
    %1743 = vmatprep.subr.bf16.mxu0 0
    %1744 = vmatpush1.bf16.xpose.msra.mxu0 0
    %1745 = vmatprep.subr.bf16.mxu0 0
    %1746 = vmatpush1.bf16.xpose.msra.mxu0 0
    %1747 = vmatprep.subr.bf16.mxu0 0
    %1748 = vmatpush1.bf16.xpose.msra.mxu0 0
    %1749 = vmatprep.subr.bf16.mxu0 0
    %1750 = vmatpush1.bf16.xpose.msra.mxu0 0
    %1751 = vmatprep.subr.bf16.mxu0 0
    %1752 = vmatpush1.bf16.xpose.msra.mxu0 0
    %1753 = vmatprep.subr.bf16.mxu0 0
    %1754 = vmatpush1.bf16.xpose.msra.mxu0 0
    %1755 = vmatprep.subr.bf16.mxu0 0
    %1756 = vmatpush1.bf16.xpose.msra.mxu0 0
    %1757 = vmatprep.subr.bf16.mxu0 0
    %1758 = vmatpush1.bf16.xpose.msra.mxu0 0
    %1759 = vmatprep.subr.bf16.mxu0 0
    %1760 = vmatpush1.bf16.xpose.msra.mxu0 0
    %1761 = vmatprep.subr.bf16.mxu0 0
    %1762 = vmatpush1.bf16.xpose.msra.mxu0 0
    %1763 = vmatprep.mubr.bf16.mxu0 0
    %1764 = vmatmul.mubr.bf16.gmra.mrb[0].mxu0 %v1726
    %v1765 = vpop.f32.mrb[0].mxu0
    %v1766 = vadd.f32 0.0, %v1765
    %v1767 = vpop.f32.mrb[0].mxu0
    %v1768 = vpop.f32.mrb[0].mxu0
    %v1769 = vpop.f32.mrb[0].mxu0
    %1770 = vdwg.mxu0
    %v1772 = vsel %vm524, %v1440, 0
    %v1775 = vsel %vm524, %v1448, 0
    %1777 = vmatprep.subr.bf16.mxu0 0
    %1778 = vmatpush1.bf16.xpose.msra.mxu0 %v1775
    %1779 = vmatprep.subr.bf16.mxu0 0
    %1780 = vmatpush1.bf16.xpose.msra.mxu0 0
    %1781 = vmatprep.subr.bf16.mxu0 0
    %1782 = vmatpush1.bf16.xpose.msra.mxu0 0
    %1783 = vmatprep.subr.bf16.mxu0 0
    %1784 = vmatpush1.bf16.xpose.msra.mxu0 0
    %1785 = vmatprep.subr.bf16.mxu0 0
    %1786 = vmatpush1.bf16.xpose.msra.mxu0 0
    %1787 = vmatprep.subr.bf16.mxu0 0
    %1788 = vmatpush1.bf16.xpose.msra.mxu0 0
    %1789 = vmatprep.subr.bf16.mxu0 0
    %1790 = vmatpush1.bf16.xpose.msra.mxu0 0
    %1791 = vmatprep.subr.bf16.mxu0 0
    %1792 = vmatpush1.bf16.xpose.msra.mxu0 0
    %1793 = vmatprep.subr.bf16.mxu0 0
    %1794 = vmatpush1.bf16.xpose.msra.mxu0 0
    %1795 = vmatprep.subr.bf16.mxu0 0
    %1796 = vmatpush1.bf16.xpose.msra.mxu0 0
    %1797 = vmatprep.subr.bf16.mxu0 0
    %1798 = vmatpush1.bf16.xpose.msra.mxu0 0
    %1799 = vmatprep.subr.bf16.mxu0 0
    %1800 = vmatpush1.bf16.xpose.msra.mxu0 0
    %1801 = vmatprep.subr.bf16.mxu0 0
    %1802 = vmatpush1.bf16.xpose.msra.mxu0 0
    %1803 = vmatprep.subr.bf16.mxu0 0
    %1804 = vmatpush1.bf16.xpose.msra.mxu0 0
    %1805 = vmatprep.subr.bf16.mxu0 0
    %1806 = vmatpush1.bf16.xpose.msra.mxu0 0
    %1807 = vmatprep.subr.bf16.mxu0 0
    %1808 = vmatpush1.bf16.xpose.msra.mxu0 0
    %1809 = vmatprep.mubr.bf16.mxu0 0
    %1810 = vmatmul.mubr.bf16.gmra.mrb[0].mxu0 %v1772
    %v1811 = vpop.f32.mrb[0].mxu0
    %v1812 = vadd.f32 0.0, %v1811
    %v1813 = vpop.f32.mrb[0].mxu0
    %v1814 = vpop.f32.mrb[0].mxu0
    %v1815 = vpop.f32.mrb[0].mxu0
    %1816 = vdwg.mxu0
    %v1817 = vsel %vm893, %v1490, -inf
    %1818 = vmax.xlane.f32.xlu0 %v1817
    %v1819 = vpop.xlane.xlu0 %1818
    %v1820 = vsel %vm893, %v1536, -inf
    %1821 = vmax.xlane.f32.xlu0 %v1820
    %v1822 = vpop.xlane.xlu0 %1821
    %v1823 = vsel %vm893, %v1582, -inf
    %1824 = vmax.xlane.f32.xlu0 %v1823
    %v1825 = vpop.xlane.xlu0 %1824
    %v1826 = vsel %vm893, %v1628, -inf
    %1827 = vmax.xlane.f32.xlu0 %v1826
    %v1828 = vpop.xlane.xlu0 %1827
    %v1829 = vsel %vm893, %v1674, -inf
    %1830 = vmax.xlane.f32.xlu0 %v1829
    %v1831 = vpop.xlane.xlu0 %1830
    %v1832 = vsel %vm893, %v1720, -inf
    %1833 = vmax.xlane.f32.xlu0 %v1832
    %v1834 = vpop.xlane.xlu0 %1833
    %v1835 = vsel %vm893, %v1766, -inf
    %1836 = vmax.xlane.f32.xlu0 %v1835
    %v1837 = vpop.xlane.xlu0 %1836
    %v1838 = vsel %vm893, %v1812, -inf
    %1839 = vmax.xlane.f32.xlu0 %v1838
    %v1840 = vpop.xlane.xlu0 %1839
    %v1841 = vsub.f32 %v1490, %v1819
    %v1842 = vsub.f32 %v1536, %v1822
    %v1843 = vsub.f32 %v1582, %v1825
    %v1844 = vsub.f32 %v1628, %v1828
    %v1845 = vsub.f32 %v1674, %v1831
    %v1846 = vsub.f32 %v1720, %v1834
    %v1847 = vsub.f32 %v1766, %v1837
    %v1848 = vsub.f32 %v1812, %v1840
    %v1849 = vmul.f32 %v1841, 1.442695
    %v1850 = vpow.pop %v1849
    %v1851 = vmul.f32 %v1842, 1.442695
    %v1852 = vpow.pop %v1851
    %v1853 = vmul.f32 %v1843, 1.442695
    %v1854 = vpow.pop %v1853
    %v1855 = vmul.f32 %v1844, 1.442695
    %v1856 = vpow.pop %v1855
    %v1857 = vmul.f32 %v1845, 1.442695
    %v1858 = vpow.pop %v1857
    %v1859 = vmul.f32 %v1846, 1.442695
    %v1860 = vpow.pop %v1859
    %v1861 = vmul.f32 %v1847, 1.442695
    %v1862 = vpow.pop %v1861
    %v1863 = vmul.f32 %v1848, 1.442695
    %v1864 = vpow.pop %v1863
    %v1865 = vsel %vm893, %v1850, 0.0
    %1866 = vadd.xlane.f32.xlu0 %v1865
    %v1867 = vpop.xlane.xlu0 %1866
    %v1868 = vsel %vm893, %v1852, 0.0
    %1869 = vadd.xlane.f32.xlu0 %v1868
    %v1870 = vpop.xlane.xlu0 %1869
    %v1871 = vsel %vm893, %v1854, 0.0
    %1872 = vadd.xlane.f32.xlu0 %v1871
    %v1873 = vpop.xlane.xlu0 %1872
    %v1874 = vsel %vm893, %v1856, 0.0
    %1875 = vadd.xlane.f32.xlu0 %v1874
    %v1876 = vpop.xlane.xlu0 %1875
    %v1877 = vsel %vm893, %v1858, 0.0
    %1878 = vadd.xlane.f32.xlu0 %v1877
    %v1879 = vpop.xlane.xlu0 %1878
    %v1880 = vsel %vm893, %v1860, 0.0
    %1881 = vadd.xlane.f32.xlu0 %v1880
    %v1882 = vpop.xlane.xlu0 %1881
    %v1883 = vsel %vm893, %v1862, 0.0
    %1884 = vadd.xlane.f32.xlu0 %v1883
    %v1885 = vpop.xlane.xlu0 %1884
    %v1886 = vsel %vm893, %v1864, 0.0
    %1887 = vadd.xlane.f32.xlu0 %v1886
    %v1888 = vpop.xlane.xlu0 %1887
    %v1889 = vrcp.pop %v1867
    %v1890 = vrcp.pop %v1870
    %v1891 = vrcp.pop %v1873
    %v1892 = vrcp.pop %v1876
    %v1893 = vrcp.pop %v1879
    %v1894 = vrcp.pop %v1882
    %v1895 = vrcp.pop %v1885
    %v1896 = vrcp.pop %v1888
    %v1897 = vmul.f32 %v1850, %v1889
    %v1898 = vmul.f32 %v1852, %v1890
    %v1899 = vmul.f32 %v1854, %v1891
    %v1900 = vmul.f32 %v1856, %v1892
    %v1901 = vmul.f32 %v1858, %v1893
    %v1902 = vmul.f32 %v1860, %v1894
    %v1903 = vmul.f32 %v1862, %v1895
    %v1904 = vmul.f32 %v1864, %v1896
    %v1905 = vpack.c.bf16 %v1897, %v1897
    %v1906 = vpack.c.bf16 %v1898, %v1898
    %v1907 = vpack.c.bf16 %v1899, %v1899
    %v1908 = vpack.c.bf16 %v1900, %v1900
    %v1909 = vpack.c.bf16 %v1901, %v1901
    %v1910 = vpack.c.bf16 %v1902, %v1902
    %v1911 = vpack.c.bf16 %v1903, %v1903
    %v1912 = vpack.c.bf16 %v1904, %v1904
    %v1913 = vpack.c.bf16 %v439, %v439
    %v1914 = vpack.c.bf16 %v1413, %v1413
    %v1915 = vpack.c.bf16 %v1416, %v1416
    %v1916 = vpack.c.bf16 %v1419, %v1419
    %v1917 = vpack.c.bf16 %v1422, %v1422
    %v1918 = vpack.c.bf16 %v1425, %v1425
    %v1919 = vpack.c.bf16 %v1428, %v1428
    %v1920 = vpack.c.bf16 %v1431, %v1431
    %v1922 = vsel %vm893, %v1905, 0
    %v1925 = vsel %vm1001, %v1913, 0
    %1927 = vmatprep.subr.bf16.mxu0 0
    %1928 = vmatpush1.bf16.msra.mxu0 %v1925
    %1929 = vmatprep.subr.bf16.mxu0 0
    %1930 = vmatpush1.bf16.msra.mxu0 0
    %1931 = vmatprep.subr.bf16.mxu0 0
    %1932 = vmatpush1.bf16.msra.mxu0 0
    %1933 = vmatprep.subr.bf16.mxu0 0
    %1934 = vmatpush1.bf16.msra.mxu0 0
    %1935 = vmatprep.subr.bf16.mxu0 0
    %1936 = vmatpush1.bf16.msra.mxu0 0
    %1937 = vmatprep.subr.bf16.mxu0 0
    %1938 = vmatpush1.bf16.msra.mxu0 0
    %1939 = vmatprep.subr.bf16.mxu0 0
    %1940 = vmatpush1.bf16.msra.mxu0 0
    %1941 = vmatprep.subr.bf16.mxu0 0
    %1942 = vmatpush1.bf16.msra.mxu0 0
    %1943 = vmatprep.subr.bf16.mxu0 0
    %1944 = vmatpush1.bf16.msra.mxu0 0
    %1945 = vmatprep.subr.bf16.mxu0 0
    %1946 = vmatpush1.bf16.msra.mxu0 0
    %1947 = vmatprep.subr.bf16.mxu0 0
    %1948 = vmatpush1.bf16.msra.mxu0 0
    %1949 = vmatprep.subr.bf16.mxu0 0
    %1950 = vmatpush1.bf16.msra.mxu0 0
    %1951 = vmatprep.subr.bf16.mxu0 0
    %1952 = vmatpush1.bf16.msra.mxu0 0
    %1953 = vmatprep.subr.bf16.mxu0 0
    %1954 = vmatpush1.bf16.msra.mxu0 0
    %1955 = vmatprep.subr.bf16.mxu0 0
    %1956 = vmatpush1.bf16.msra.mxu0 0
    %1957 = vmatprep.subr.bf16.mxu0 0
    %1958 = vmatpush1.bf16.msra.mxu0 0
    %1959 = vmatprep.mubr.bf16.mxu0 0
    %1960 = vmatmul.mubr.bf16.gmra.mrb[0].mxu0 %v1922
    %v1961 = vpop.f32.mrb[0].mxu0
    %v1962 = vadd.f32 0.0, %v1961
    %v1963 = vpop.f32.mrb[0].mxu0
    %v1964 = vpop.f32.mrb[0].mxu0
    %v1965 = vpop.f32.mrb[0].mxu0
    %1966 = vdwg.mxu0
    %v1968 = vsel %vm893, %v1906, 0
    %v1971 = vsel %vm1001, %v1914, 0
    %1973 = vmatprep.subr.bf16.mxu0 0
    %1974 = vmatpush1.bf16.msra.mxu0 %v1971
    %1975 = vmatprep.subr.bf16.mxu0 0
    %1976 = vmatpush1.bf16.msra.mxu0 0
    %1977 = vmatprep.subr.bf16.mxu0 0
    %1978 = vmatpush1.bf16.msra.mxu0 0
    %1979 = vmatprep.subr.bf16.mxu0 0
    %1980 = vmatpush1.bf16.msra.mxu0 0
    %1981 = vmatprep.subr.bf16.mxu0 0
    %1982 = vmatpush1.bf16.msra.mxu0 0
    %1983 = vmatprep.subr.bf16.mxu0 0
    %1984 = vmatpush1.bf16.msra.mxu0 0
    %1985 = vmatprep.subr.bf16.mxu0 0
    %1986 = vmatpush1.bf16.msra.mxu0 0
    %1987 = vmatprep.subr.bf16.mxu0 0
    %1988 = vmatpush1.bf16.msra.mxu0 0
    %1989 = vmatprep.subr.bf16.mxu0 0
    %1990 = vmatpush1.bf16.msra.mxu0 0
    %1991 = vmatprep.subr.bf16.mxu0 0
    %1992 = vmatpush1.bf16.msra.mxu0 0
    %1993 = vmatprep.subr.bf16.mxu0 0
    %1994 = vmatpush1.bf16.msra.mxu0 0
    %1995 = vmatprep.subr.bf16.mxu0 0
    %1996 = vmatpush1.bf16.msra.mxu0 0
    %1997 = vmatprep.subr.bf16.mxu0 0
    %1998 = vmatpush1.bf16.msra.mxu0 0
    %1999 = vmatprep.subr.bf16.mxu0 0
    %2000 = vmatpush1.bf16.msra.mxu0 0
    %2001 = vmatprep.subr.bf16.mxu0 0
    %2002 = vmatpush1.bf16.msra.mxu0 0
    %2003 = vmatprep.subr.bf16.mxu0 0
    %2004 = vmatpush1.bf16.msra.mxu0 0
    %2005 = vmatprep.mubr.bf16.mxu0 0
    %2006 = vmatmul.mubr.bf16.gmra.mrb[0].mxu0 %v1968
    %v2007 = vpop.f32.mrb[0].mxu0
    %v2008 = vadd.f32 0.0, %v2007
    %v2009 = vpop.f32.mrb[0].mxu0
    %v2010 = vpop.f32.mrb[0].mxu0
    %v2011 = vpop.f32.mrb[0].mxu0
    %2012 = vdwg.mxu0
    %v2014 = vsel %vm893, %v1907, 0
    %v2017 = vsel %vm1001, %v1915, 0
    %2019 = vmatprep.subr.bf16.mxu0 0
    %2020 = vmatpush1.bf16.msra.mxu0 %v2017
    %2021 = vmatprep.subr.bf16.mxu0 0
    %2022 = vmatpush1.bf16.msra.mxu0 0
    %2023 = vmatprep.subr.bf16.mxu0 0
    %2024 = vmatpush1.bf16.msra.mxu0 0
    %2025 = vmatprep.subr.bf16.mxu0 0
    %2026 = vmatpush1.bf16.msra.mxu0 0
    %2027 = vmatprep.subr.bf16.mxu0 0
    %2028 = vmatpush1.bf16.msra.mxu0 0
    %2029 = vmatprep.subr.bf16.mxu0 0
    %2030 = vmatpush1.bf16.msra.mxu0 0
    %2031 = vmatprep.subr.bf16.mxu0 0
    %2032 = vmatpush1.bf16.msra.mxu0 0
    %2033 = vmatprep.subr.bf16.mxu0 0
    %2034 = vmatpush1.bf16.msra.mxu0 0
    %2035 = vmatprep.subr.bf16.mxu0 0
    %2036 = vmatpush1.bf16.msra.mxu0 0
    %2037 = vmatprep.subr.bf16.mxu0 0
    %2038 = vmatpush1.bf16.msra.mxu0 0
    %2039 = vmatprep.subr.bf16.mxu0 0
    %2040 = vmatpush1.bf16.msra.mxu0 0
    %2041 = vmatprep.subr.bf16.mxu0 0
    %2042 = vmatpush1.bf16.msra.mxu0 0
    %2043 = vmatprep.subr.bf16.mxu0 0
    %2044 = vmatpush1.bf16.msra.mxu0 0
    %2045 = vmatprep.subr.bf16.mxu0 0
    %2046 = vmatpush1.bf16.msra.mxu0 0
    %2047 = vmatprep.subr.bf16.mxu0 0
    %2048 = vmatpush1.bf16.msra.mxu0 0
    %2049 = vmatprep.subr.bf16.mxu0 0
    %2050 = vmatpush1.bf16.msra.mxu0 0
    %2051 = vmatprep.mubr.bf16.mxu0 0
    %2052 = vmatmul.mubr.bf16.gmra.mrb[0].mxu0 %v2014
    %v2053 = vpop.f32.mrb[0].mxu0
    %v2054 = vadd.f32 0.0, %v2053
    %v2055 = vpop.f32.mrb[0].mxu0
    %v2056 = vpop.f32.mrb[0].mxu0
    %v2057 = vpop.f32.mrb[0].mxu0
    %2058 = vdwg.mxu0
    %v2060 = vsel %vm893, %v1908, 0
    %v2063 = vsel %vm1001, %v1916, 0
    %2065 = vmatprep.subr.bf16.mxu0 0
    %2066 = vmatpush1.bf16.msra.mxu0 %v2063
    %2067 = vmatprep.subr.bf16.mxu0 0
    %2068 = vmatpush1.bf16.msra.mxu0 0
    %2069 = vmatprep.subr.bf16.mxu0 0
    %2070 = vmatpush1.bf16.msra.mxu0 0
    %2071 = vmatprep.subr.bf16.mxu0 0
    %2072 = vmatpush1.bf16.msra.mxu0 0
    %2073 = vmatprep.subr.bf16.mxu0 0
    %2074 = vmatpush1.bf16.msra.mxu0 0
    %2075 = vmatprep.subr.bf16.mxu0 0
    %2076 = vmatpush1.bf16.msra.mxu0 0
    %2077 = vmatprep.subr.bf16.mxu0 0
    %2078 = vmatpush1.bf16.msra.mxu0 0
    %2079 = vmatprep.subr.bf16.mxu0 0
    %2080 = vmatpush1.bf16.msra.mxu0 0
    %2081 = vmatprep.subr.bf16.mxu0 0
    %2082 = vmatpush1.bf16.msra.mxu0 0
    %2083 = vmatprep.subr.bf16.mxu0 0
    %2084 = vmatpush1.bf16.msra.mxu0 0
    %2085 = vmatprep.subr.bf16.mxu0 0
    %2086 = vmatpush1.bf16.msra.mxu0 0
    %2087 = vmatprep.subr.bf16.mxu0 0
    %2088 = vmatpush1.bf16.msra.mxu0 0
    %2089 = vmatprep.subr.bf16.mxu0 0
    %2090 = vmatpush1.bf16.msra.mxu0 0
    %2091 = vmatprep.subr.bf16.mxu0 0
    %2092 = vmatpush1.bf16.msra.mxu0 0
    %2093 = vmatprep.subr.bf16.mxu0 0
    %2094 = vmatpush1.bf16.msra.mxu0 0
    %2095 = vmatprep.subr.bf16.mxu0 0
    %2096 = vmatpush1.bf16.msra.mxu0 0
    %2097 = vmatprep.mubr.bf16.mxu0 0
    %2098 = vmatmul.mubr.bf16.gmra.mrb[0].mxu0 %v2060
    %v2099 = vpop.f32.mrb[0].mxu0
    %v2100 = vadd.f32 0.0, %v2099
    %v2101 = vpop.f32.mrb[0].mxu0
    %v2102 = vpop.f32.mrb[0].mxu0
    %v2103 = vpop.f32.mrb[0].mxu0
    %2104 = vdwg.mxu0
    %v2106 = vsel %vm893, %v1909, 0
    %v2109 = vsel %vm1001, %v1917, 0
    %2111 = vmatprep.subr.bf16.mxu0 0
    %2112 = vmatpush1.bf16.msra.mxu0 %v2109
    %2113 = vmatprep.subr.bf16.mxu0 0
    %2114 = vmatpush1.bf16.msra.mxu0 0
    %2115 = vmatprep.subr.bf16.mxu0 0
    %2116 = vmatpush1.bf16.msra.mxu0 0
    %2117 = vmatprep.subr.bf16.mxu0 0
    %2118 = vmatpush1.bf16.msra.mxu0 0
    %2119 = vmatprep.subr.bf16.mxu0 0
    %2120 = vmatpush1.bf16.msra.mxu0 0
    %2121 = vmatprep.subr.bf16.mxu0 0
    %2122 = vmatpush1.bf16.msra.mxu0 0
    %2123 = vmatprep.subr.bf16.mxu0 0
    %2124 = vmatpush1.bf16.msra.mxu0 0
    %2125 = vmatprep.subr.bf16.mxu0 0
    %2126 = vmatpush1.bf16.msra.mxu0 0
    %2127 = vmatprep.subr.bf16.mxu0 0
    %2128 = vmatpush1.bf16.msra.mxu0 0
    %2129 = vmatprep.subr.bf16.mxu0 0
    %2130 = vmatpush1.bf16.msra.mxu0 0
    %2131 = vmatprep.subr.bf16.mxu0 0
    %2132 = vmatpush1.bf16.msra.mxu0 0
    %2133 = vmatprep.subr.bf16.mxu0 0
    %2134 = vmatpush1.bf16.msra.mxu0 0
    %2135 = vmatprep.subr.bf16.mxu0 0
    %2136 = vmatpush1.bf16.msra.mxu0 0
    %2137 = vmatprep.subr.bf16.mxu0 0
    %2138 = vmatpush1.bf16.msra.mxu0 0
    %2139 = vmatprep.subr.bf16.mxu0 0
    %2140 = vmatpush1.bf16.msra.mxu0 0
    %2141 = vmatprep.subr.bf16.mxu0 0
    %2142 = vmatpush1.bf16.msra.mxu0 0
    %2143 = vmatprep.mubr.bf16.mxu0 0
    %2144 = vmatmul.mubr.bf16.gmra.mrb[0].mxu0 %v2106
    %v2145 = vpop.f32.mrb[0].mxu0
    %v2146 = vadd.f32 0.0, %v2145
    %v2147 = vpop.f32.mrb[0].mxu0
    %v2148 = vpop.f32.mrb[0].mxu0
    %v2149 = vpop.f32.mrb[0].mxu0
    %2150 = vdwg.mxu0
    %v2152 = vsel %vm893, %v1910, 0
    %v2155 = vsel %vm1001, %v1918, 0
    %2157 = vmatprep.subr.bf16.mxu0 0
    %2158 = vmatpush1.bf16.msra.mxu0 %v2155
    %2159 = vmatprep.subr.bf16.mxu0 0
    %2160 = vmatpush1.bf16.msra.mxu0 0
    %2161 = vmatprep.subr.bf16.mxu0 0
    %2162 = vmatpush1.bf16.msra.mxu0 0
    %2163 = vmatprep.subr.bf16.mxu0 0
    %2164 = vmatpush1.bf16.msra.mxu0 0
    %2165 = vmatprep.subr.bf16.mxu0 0
    %2166 = vmatpush1.bf16.msra.mxu0 0
    %2167 = vmatprep.subr.bf16.mxu0 0
    %2168 = vmatpush1.bf16.msra.mxu0 0
    %2169 = vmatprep.subr.bf16.mxu0 0
    %2170 = vmatpush1.bf16.msra.mxu0 0
    %2171 = vmatprep.subr.bf16.mxu0 0
    %2172 = vmatpush1.bf16.msra.mxu0 0
    %2173 = vmatprep.subr.bf16.mxu0 0
    %2174 = vmatpush1.bf16.msra.mxu0 0
    %2175 = vmatprep.subr.bf16.mxu0 0
    %2176 = vmatpush1.bf16.msra.mxu0 0
    %2177 = vmatprep.subr.bf16.mxu0 0
    %2178 = vmatpush1.bf16.msra.mxu0 0
    %2179 = vmatprep.subr.bf16.mxu0 0
    %2180 = vmatpush1.bf16.msra.mxu0 0
    %2181 = vmatprep.subr.bf16.mxu0 0
    %2182 = vmatpush1.bf16.msra.mxu0 0
    %2183 = vmatprep.subr.bf16.mxu0 0
    %2184 = vmatpush1.bf16.msra.mxu0 0
    %2185 = vmatprep.subr.bf16.mxu0 0
    %2186 = vmatpush1.bf16.msra.mxu0 0
    %2187 = vmatprep.subr.bf16.mxu0 0
    %2188 = vmatpush1.bf16.msra.mxu0 0
    %2189 = vmatprep.mubr.bf16.mxu0 0
    %2190 = vmatmul.mubr.bf16.gmra.mrb[0].mxu0 %v2152
    %v2191 = vpop.f32.mrb[0].mxu0
    %v2192 = vadd.f32 0.0, %v2191
    %v2193 = vpop.f32.mrb[0].mxu0
    %v2194 = vpop.f32.mrb[0].mxu0
    %v2195 = vpop.f32.mrb[0].mxu0
    %2196 = vdwg.mxu0
    %v2198 = vsel %vm893, %v1911, 0
    %v2201 = vsel %vm1001, %v1919, 0
    %2203 = vmatprep.subr.bf16.mxu0 0
    %2204 = vmatpush1.bf16.msra.mxu0 %v2201
    %2205 = vmatprep.subr.bf16.mxu0 0
    %2206 = vmatpush1.bf16.msra.mxu0 0
    %2207 = vmatprep.subr.bf16.mxu0 0
    %2208 = vmatpush1.bf16.msra.mxu0 0
    %2209 = vmatprep.subr.bf16.mxu0 0
    %2210 = vmatpush1.bf16.msra.mxu0 0
    %2211 = vmatprep.subr.bf16.mxu0 0
    %2212 = vmatpush1.bf16.msra.mxu0 0
    %2213 = vmatprep.subr.bf16.mxu0 0
    %2214 = vmatpush1.bf16.msra.mxu0 0
    %2215 = vmatprep.subr.bf16.mxu0 0
    %2216 = vmatpush1.bf16.msra.mxu0 0
    %2217 = vmatprep.subr.bf16.mxu0 0
    %2218 = vmatpush1.bf16.msra.mxu0 0
    %2219 = vmatprep.subr.bf16.mxu0 0
    %2220 = vmatpush1.bf16.msra.mxu0 0
    %2221 = vmatprep.subr.bf16.mxu0 0
    %2222 = vmatpush1.bf16.msra.mxu0 0
    %2223 = vmatprep.subr.bf16.mxu0 0
    %2224 = vmatpush1.bf16.msra.mxu0 0
    %2225 = vmatprep.subr.bf16.mxu0 0
    %2226 = vmatpush1.bf16.msra.mxu0 0
    %2227 = vmatprep.subr.bf16.mxu0 0
    %2228 = vmatpush1.bf16.msra.mxu0 0
    %2229 = vmatprep.subr.bf16.mxu0 0
    %2230 = vmatpush1.bf16.msra.mxu0 0
    %2231 = vmatprep.subr.bf16.mxu0 0
    %2232 = vmatpush1.bf16.msra.mxu0 0
    %2233 = vmatprep.subr.bf16.mxu0 0
    %2234 = vmatpush1.bf16.msra.mxu0 0
    %2235 = vmatprep.mubr.bf16.mxu0 0
    %2236 = vmatmul.mubr.bf16.gmra.mrb[0].mxu0 %v2198
    %v2237 = vpop.f32.mrb[0].mxu0
    %v2238 = vadd.f32 0.0, %v2237
    %v2239 = vpop.f32.mrb[0].mxu0
    %v2240 = vpop.f32.mrb[0].mxu0
    %v2241 = vpop.f32.mrb[0].mxu0
    %2242 = vdwg.mxu0
    %v2244 = vsel %vm893, %v1912, 0
    %v2247 = vsel %vm1001, %v1920, 0
    %2249 = vmatprep.subr.bf16.mxu0 0
    %2250 = vmatpush1.bf16.msra.mxu0 %v2247
    %2251 = vmatprep.subr.bf16.mxu0 0
    %2252 = vmatpush1.bf16.msra.mxu0 0
    %2253 = vmatprep.subr.bf16.mxu0 0
    %2254 = vmatpush1.bf16.msra.mxu0 0
    %2255 = vmatprep.subr.bf16.mxu0 0
    %2256 = vmatpush1.bf16.msra.mxu0 0
    %2257 = vmatprep.subr.bf16.mxu0 0
    %2258 = vmatpush1.bf16.msra.mxu0 0
    %2259 = vmatprep.subr.bf16.mxu0 0
    %2260 = vmatpush1.bf16.msra.mxu0 0
    %2261 = vmatprep.subr.bf16.mxu0 0
    %2262 = vmatpush1.bf16.msra.mxu0 0
    %2263 = vmatprep.subr.bf16.mxu0 0
    %2264 = vmatpush1.bf16.msra.mxu0 0
    %2265 = vmatprep.subr.bf16.mxu0 0
    %2266 = vmatpush1.bf16.msra.mxu0 0
    %2267 = vmatprep.subr.bf16.mxu0 0
    %2268 = vmatpush1.bf16.msra.mxu0 0
    %2269 = vmatprep.subr.bf16.mxu0 0
    %2270 = vmatpush1.bf16.msra.mxu0 0
    %2271 = vmatprep.subr.bf16.mxu0 0
    %2272 = vmatpush1.bf16.msra.mxu0 0
    %2273 = vmatprep.subr.bf16.mxu0 0
    %2274 = vmatpush1.bf16.msra.mxu0 0
    %2275 = vmatprep.subr.bf16.mxu0 0
    %2276 = vmatpush1.bf16.msra.mxu0 0
    %2277 = vmatprep.subr.bf16.mxu0 0
    %2278 = vmatpush1.bf16.msra.mxu0 0
    %2279 = vmatprep.subr.bf16.mxu0 0
    %2280 = vmatpush1.bf16.msra.mxu0 0
    %2281 = vmatprep.mubr.bf16.mxu0 0
    %2282 = vmatmul.mubr.bf16.gmra.mrb[0].mxu0 %v2244
    %v2283 = vpop.f32.mrb[0].mxu0
    %v2284 = vadd.f32 0.0, %v2283
    %v2285 = vpop.f32.mrb[0].mxu0
    %v2286 = vpop.f32.mrb[0].mxu0
    %v2287 = vpop.f32.mrb[0].mxu0
    %2288 = vdwg.mxu0
    %v2289 = vpack.c.bf16 %v1962, %v1040
    %v2290 = vpack.c.bf16 %v2008, %v1086
    %v2291 = vpack.c.bf16 %v2054, %v1132
    %v2292 = vpack.c.bf16 %v2100, %v1178
    %v2293 = vpack.c.bf16 %v2146, %v1224
    %v2294 = vpack.c.bf16 %v2192, %v1270
    %v2295 = vpack.c.bf16 %v2238, %v1316
    %v2296 = vpack.c.bf16 %v2284, %v1362
    %v2297 = vld [vmem:[#allocation10] sm:$0xf]
    %v2298 = vld [vmem:[#allocation10 + $0x4] sm:$0xf]
    %v2299 = vld [vmem:[#allocation10 + $0x8] sm:$0xf]
    %v2300 = vld [vmem:[#allocation10 + $0xc] sm:$0xf]
    %v2301 = vld [vmem:[#allocation10 + $0x10] sm:$0xf]
    %v2302 = vld [vmem:[#allocation10 + $0x14] sm:$0xf]
    %v2303 = vld [vmem:[#allocation10 + $0x18] sm:$0xf]
    %v2304 = vld [vmem:[#allocation10 + $0x1c] sm:$0xf]
    %v2305 = vld [vmem:[#allocation10 + $0x20] sm:$0xf]
    %v2306 = vld [vmem:[#allocation10 + $0x24] sm:$0xf]
    %v2307 = vld [vmem:[#allocation10 + $0x28] sm:$0xf]
    %v2308 = vld [vmem:[#allocation10 + $0x2c] sm:$0xf]
    %v2309 = vld [vmem:[#allocation10 + $0x30] sm:$0xf]
    %v2310 = vld [vmem:[#allocation10 + $0x34] sm:$0xf]
    %v2311 = vld [vmem:[#allocation10 + $0x38] sm:$0xf]
    %v2312 = vld [vmem:[#allocation10 + $0x3c] sm:$0xf]
    %v2315 = vunpack.c.l.b16 %v2297
    %v2316 = vunpack.c.l.b16 %v2298
    %v2317 = vpack.c.b16 %v2316, %v2315
    %v2320 = vsel %vm524, %v2289, 0
    %2322 = vmatprep.subr.bf16.mxu0 0
    %2323 = vmatpush1.bf16.msra.mxu0 %v2317
    %2324 = vmatprep.subr.bf16.mxu0 0
    %2325 = vmatpush1.bf16.msra.mxu0 0
    %2326 = vmatprep.subr.bf16.mxu0 0
    %2327 = vmatpush1.bf16.msra.mxu0 0
    %2328 = vmatprep.subr.bf16.mxu0 0
    %2329 = vmatpush1.bf16.msra.mxu0 0
    %2330 = vmatprep.subr.bf16.mxu0 0
    %2331 = vmatpush1.bf16.msra.mxu0 0
    %2332 = vmatprep.subr.bf16.mxu0 0
    %2333 = vmatpush1.bf16.msra.mxu0 0
    %2334 = vmatprep.subr.bf16.mxu0 0
    %2335 = vmatpush1.bf16.msra.mxu0 0
    %2336 = vmatprep.subr.bf16.mxu0 0
    %2337 = vmatpush1.bf16.msra.mxu0 0
    %2338 = vmatprep.subr.bf16.mxu0 0
    %2339 = vmatpush1.bf16.msra.mxu0 0
    %2340 = vmatprep.subr.bf16.mxu0 0
    %2341 = vmatpush1.bf16.msra.mxu0 0
    %2342 = vmatprep.subr.bf16.mxu0 0
    %2343 = vmatpush1.bf16.msra.mxu0 0
    %2344 = vmatprep.subr.bf16.mxu0 0
    %2345 = vmatpush1.bf16.msra.mxu0 0
    %2346 = vmatprep.subr.bf16.mxu0 0
    %2347 = vmatpush1.bf16.msra.mxu0 0
    %2348 = vmatprep.subr.bf16.mxu0 0
    %2349 = vmatpush1.bf16.msra.mxu0 0
    %2350 = vmatprep.subr.bf16.mxu0 0
    %2351 = vmatpush1.bf16.msra.mxu0 0
    %2352 = vmatprep.subr.bf16.mxu0 0
    %2353 = vmatpush1.bf16.msra.mxu0 0
    %2354 = vmatprep.mubr.bf16.mxu0 0
    %2355 = vmatmul.mubr.bf16.gmra.mrb[0].mxu0 %v2320
    %v2356 = vpop.f32.mrb[0].mxu0
    %v2357 = vadd.f32 0.0, %v2356
    %v2358 = vpop.f32.mrb[0].mxu0
    %v2359 = vpop.f32.mrb[0].mxu0
    %v2360 = vadd.f32 0.0, %v2359
    %v2361 = vpop.f32.mrb[0].mxu0
    %2362 = vdwg.mxu0
    %v2365 = vunpack.c.l.b16 %v2299
    %v2366 = vunpack.c.l.b16 %v2300
    %v2367 = vpack.c.b16 %v2366, %v2365
    %v2370 = vsel %vm524, %v2290, 0
    %2372 = vmatprep.subr.bf16.mxu0 0
    %2373 = vmatpush1.bf16.msra.mxu0 %v2367
    %2374 = vmatprep.subr.bf16.mxu0 0
    %2375 = vmatpush1.bf16.msra.mxu0 0
    %2376 = vmatprep.subr.bf16.mxu0 0
    %2377 = vmatpush1.bf16.msra.mxu0 0
    %2378 = vmatprep.subr.bf16.mxu0 0
    %2379 = vmatpush1.bf16.msra.mxu0 0
    %2380 = vmatprep.subr.bf16.mxu0 0
    %2381 = vmatpush1.bf16.msra.mxu0 0
    %2382 = vmatprep.subr.bf16.mxu0 0
    %2383 = vmatpush1.bf16.msra.mxu0 0
    %2384 = vmatprep.subr.bf16.mxu0 0
    %2385 = vmatpush1.bf16.msra.mxu0 0
    %2386 = vmatprep.subr.bf16.mxu0 0
    %2387 = vmatpush1.bf16.msra.mxu0 0
    %2388 = vmatprep.subr.bf16.mxu0 0
    %2389 = vmatpush1.bf16.msra.mxu0 0
    %2390 = vmatprep.subr.bf16.mxu0 0
    %2391 = vmatpush1.bf16.msra.mxu0 0
    %2392 = vmatprep.subr.bf16.mxu0 0
    %2393 = vmatpush1.bf16.msra.mxu0 0
    %2394 = vmatprep.subr.bf16.mxu0 0
    %2395 = vmatpush1.bf16.msra.mxu0 0
    %2396 = vmatprep.subr.bf16.mxu0 0
    %2397 = vmatpush1.bf16.msra.mxu0 0
    %2398 = vmatprep.subr.bf16.mxu0 0
    %2399 = vmatpush1.bf16.msra.mxu0 0
    %2400 = vmatprep.subr.bf16.mxu0 0
    %2401 = vmatpush1.bf16.msra.mxu0 0
    %2402 = vmatprep.subr.bf16.mxu0 0
    %2403 = vmatpush1.bf16.msra.mxu0 0
    %2404 = vmatprep.mubr.bf16.mxu0 0
    %2405 = vmatmul.mubr.bf16.gmra.mrb[0].mxu0 %v2370
    %v2406 = vpop.f32.mrb[0].mxu0
    %v2407 = vadd.f32 0.0, %v2406
    %v2408 = vpop.f32.mrb[0].mxu0
    %v2409 = vpop.f32.mrb[0].mxu0
    %v2410 = vadd.f32 0.0, %v2409
    %v2411 = vpop.f32.mrb[0].mxu0
    %2412 = vdwg.mxu0
    %v2415 = vunpack.c.l.b16 %v2301
    %v2416 = vunpack.c.l.b16 %v2302
    %v2417 = vpack.c.b16 %v2416, %v2415
    %v2420 = vsel %vm524, %v2291, 0
    %2422 = vmatprep.subr.bf16.mxu0 0
    %2423 = vmatpush1.bf16.msra.mxu0 %v2417
    %2424 = vmatprep.subr.bf16.mxu0 0
    %2425 = vmatpush1.bf16.msra.mxu0 0
    %2426 = vmatprep.subr.bf16.mxu0 0
    %2427 = vmatpush1.bf16.msra.mxu0 0
    %2428 = vmatprep.subr.bf16.mxu0 0
    %2429 = vmatpush1.bf16.msra.mxu0 0
    %2430 = vmatprep.subr.bf16.mxu0 0
    %2431 = vmatpush1.bf16.msra.mxu0 0
    %2432 = vmatprep.subr.bf16.mxu0 0
    %2433 = vmatpush1.bf16.msra.mxu0 0
    %2434 = vmatprep.subr.bf16.mxu0 0
    %2435 = vmatpush1.bf16.msra.mxu0 0
    %2436 = vmatprep.subr.bf16.mxu0 0
    %2437 = vmatpush1.bf16.msra.mxu0 0
    %2438 = vmatprep.subr.bf16.mxu0 0
    %2439 = vmatpush1.bf16.msra.mxu0 0
    %2440 = vmatprep.subr.bf16.mxu0 0
    %2441 = vmatpush1.bf16.msra.mxu0 0
    %2442 = vmatprep.subr.bf16.mxu0 0
    %2443 = vmatpush1.bf16.msra.mxu0 0
    %2444 = vmatprep.subr.bf16.mxu0 0
    %2445 = vmatpush1.bf16.msra.mxu0 0
    %2446 = vmatprep.subr.bf16.mxu0 0
    %2447 = vmatpush1.bf16.msra.mxu0 0
    %2448 = vmatprep.subr.bf16.mxu0 0
    %2449 = vmatpush1.bf16.msra.mxu0 0
    %2450 = vmatprep.subr.bf16.mxu0 0
    %2451 = vmatpush1.bf16.msra.mxu0 0
    %2452 = vmatprep.subr.bf16.mxu0 0
    %2453 = vmatpush1.bf16.msra.mxu0 0
    %2454 = vmatprep.mubr.bf16.mxu0 0
    %2455 = vmatmul.mubr.bf16.gmra.mrb[0].mxu0 %v2420
    %v2456 = vpop.f32.mrb[0].mxu0
    %v2457 = vadd.f32 0.0, %v2456
    %v2458 = vpop.f32.mrb[0].mxu0
    %v2459 = vpop.f32.mrb[0].mxu0
    %v2460 = vadd.f32 0.0, %v2459
    %v2461 = vpop.f32.mrb[0].mxu0
    %2462 = vdwg.mxu0
    %v2465 = vunpack.c.l.b16 %v2303
    %v2466 = vunpack.c.l.b16 %v2304
    %v2467 = vpack.c.b16 %v2466, %v2465
    %v2470 = vsel %vm524, %v2292, 0
    %2472 = vmatprep.subr.bf16.mxu0 0
    %2473 = vmatpush1.bf16.msra.mxu0 %v2467
    %2474 = vmatprep.subr.bf16.mxu0 0
    %2475 = vmatpush1.bf16.msra.mxu0 0
    %2476 = vmatprep.subr.bf16.mxu0 0
    %2477 = vmatpush1.bf16.msra.mxu0 0
    %2478 = vmatprep.subr.bf16.mxu0 0
    %2479 = vmatpush1.bf16.msra.mxu0 0
    %2480 = vmatprep.subr.bf16.mxu0 0
    %2481 = vmatpush1.bf16.msra.mxu0 0
    %2482 = vmatprep.subr.bf16.mxu0 0
    %2483 = vmatpush1.bf16.msra.mxu0 0
    %2484 = vmatprep.subr.bf16.mxu0 0
    %2485 = vmatpush1.bf16.msra.mxu0 0
    %2486 = vmatprep.subr.bf16.mxu0 0
    %2487 = vmatpush1.bf16.msra.mxu0 0
    %2488 = vmatprep.subr.bf16.mxu0 0
    %2489 = vmatpush1.bf16.msra.mxu0 0
    %2490 = vmatprep.subr.bf16.mxu0 0
    %2491 = vmatpush1.bf16.msra.mxu0 0
    %2492 = vmatprep.subr.bf16.mxu0 0
    %2493 = vmatpush1.bf16.msra.mxu0 0
    %2494 = vmatprep.subr.bf16.mxu0 0
    %2495 = vmatpush1.bf16.msra.mxu0 0
    %2496 = vmatprep.subr.bf16.mxu0 0
    %2497 = vmatpush1.bf16.msra.mxu0 0
    %2498 = vmatprep.subr.bf16.mxu0 0
    %2499 = vmatpush1.bf16.msra.mxu0 0
    %2500 = vmatprep.subr.bf16.mxu0 0
    %2501 = vmatpush1.bf16.msra.mxu0 0
    %2502 = vmatprep.subr.bf16.mxu0 0
    %2503 = vmatpush1.bf16.msra.mxu0 0
    %2504 = vmatprep.mubr.bf16.mxu0 0
    %2505 = vmatmul.mubr.bf16.gmra.mrb[0].mxu0 %v2470
    %v2506 = vpop.f32.mrb[0].mxu0
    %v2507 = vadd.f32 0.0, %v2506
    %v2508 = vpop.f32.mrb[0].mxu0
    %v2509 = vpop.f32.mrb[0].mxu0
    %v2510 = vadd.f32 0.0, %v2509
    %v2511 = vpop.f32.mrb[0].mxu0
    %2512 = vdwg.mxu0
    %v2515 = vunpack.c.l.b16 %v2305
    %v2516 = vunpack.c.l.b16 %v2306
    %v2517 = vpack.c.b16 %v2516, %v2515
    %v2520 = vsel %vm524, %v2293, 0
    %2522 = vmatprep.subr.bf16.mxu0 0
    %2523 = vmatpush1.bf16.msra.mxu0 %v2517
    %2524 = vmatprep.subr.bf16.mxu0 0
    %2525 = vmatpush1.bf16.msra.mxu0 0
    %2526 = vmatprep.subr.bf16.mxu0 0
    %2527 = vmatpush1.bf16.msra.mxu0 0
    %2528 = vmatprep.subr.bf16.mxu0 0
    %2529 = vmatpush1.bf16.msra.mxu0 0
    %2530 = vmatprep.subr.bf16.mxu0 0
    %2531 = vmatpush1.bf16.msra.mxu0 0
    %2532 = vmatprep.subr.bf16.mxu0 0
    %2533 = vmatpush1.bf16.msra.mxu0 0
    %2534 = vmatprep.subr.bf16.mxu0 0
    %2535 = vmatpush1.bf16.msra.mxu0 0
    %2536 = vmatprep.subr.bf16.mxu0 0
    %2537 = vmatpush1.bf16.msra.mxu0 0
    %2538 = vmatprep.subr.bf16.mxu0 0
    %2539 = vmatpush1.bf16.msra.mxu0 0
    %2540 = vmatprep.subr.bf16.mxu0 0
    %2541 = vmatpush1.bf16.msra.mxu0 0
    %2542 = vmatprep.subr.bf16.mxu0 0
    %2543 = vmatpush1.bf16.msra.mxu0 0
    %2544 = vmatprep.subr.bf16.mxu0 0
    %2545 = vmatpush1.bf16.msra.mxu0 0
    %2546 = vmatprep.subr.bf16.mxu0 0
    %2547 = vmatpush1.bf16.msra.mxu0 0
    %2548 = vmatprep.subr.bf16.mxu0 0
    %2549 = vmatpush1.bf16.msra.mxu0 0
    %2550 = vmatprep.subr.bf16.mxu0 0
    %2551 = vmatpush1.bf16.msra.mxu0 0
    %2552 = vmatprep.subr.bf16.mxu0 0
    %2553 = vmatpush1.bf16.msra.mxu0 0
    %2554 = vmatprep.mubr.bf16.mxu0 0
    %2555 = vmatmul.mubr.bf16.gmra.mrb[0].mxu0 %v2520
    %v2556 = vpop.f32.mrb[0].mxu0
    %v2557 = vadd.f32 0.0, %v2556
    %v2558 = vpop.f32.mrb[0].mxu0
    %v2559 = vpop.f32.mrb[0].mxu0
    %v2560 = vadd.f32 0.0, %v2559
    %v2561 = vpop.f32.mrb[0].mxu0
    %2562 = vdwg.mxu0
    %v2565 = vunpack.c.l.b16 %v2307
    %v2566 = vunpack.c.l.b16 %v2308
    %v2567 = vpack.c.b16 %v2566, %v2565
    %v2570 = vsel %vm524, %v2294, 0
    %2572 = vmatprep.subr.bf16.mxu0 0
    %2573 = vmatpush1.bf16.msra.mxu0 %v2567
    %2574 = vmatprep.subr.bf16.mxu0 0
    %2575 = vmatpush1.bf16.msra.mxu0 0
    %2576 = vmatprep.subr.bf16.mxu0 0
    %2577 = vmatpush1.bf16.msra.mxu0 0
    %2578 = vmatprep.subr.bf16.mxu0 0
    %2579 = vmatpush1.bf16.msra.mxu0 0
    %2580 = vmatprep.subr.bf16.mxu0 0
    %2581 = vmatpush1.bf16.msra.mxu0 0
    %2582 = vmatprep.subr.bf16.mxu0 0
    %2583 = vmatpush1.bf16.msra.mxu0 0
    %2584 = vmatprep.subr.bf16.mxu0 0
    %2585 = vmatpush1.bf16.msra.mxu0 0
    %2586 = vmatprep.subr.bf16.mxu0 0
    %2587 = vmatpush1.bf16.msra.mxu0 0
    %2588 = vmatprep.subr.bf16.mxu0 0
    %2589 = vmatpush1.bf16.msra.mxu0 0
    %2590 = vmatprep.subr.bf16.mxu0 0
    %2591 = vmatpush1.bf16.msra.mxu0 0
    %2592 = vmatprep.subr.bf16.mxu0 0
    %2593 = vmatpush1.bf16.msra.mxu0 0
    %2594 = vmatprep.subr.bf16.mxu0 0
    %2595 = vmatpush1.bf16.msra.mxu0 0
    %2596 = vmatprep.subr.bf16.mxu0 0
    %2597 = vmatpush1.bf16.msra.mxu0 0
    %2598 = vmatprep.subr.bf16.mxu0 0
    %2599 = vmatpush1.bf16.msra.mxu0 0
    %2600 = vmatprep.subr.bf16.mxu0 0
    %2601 = vmatpush1.bf16.msra.mxu0 0
    %2602 = vmatprep.subr.bf16.mxu0 0
    %2603 = vmatpush1.bf16.msra.mxu0 0
    %2604 = vmatprep.mubr.bf16.mxu0 0
    %2605 = vmatmul.mubr.bf16.gmra.mrb[0].mxu0 %v2570
    %v2606 = vpop.f32.mrb[0].mxu0
    %v2607 = vadd.f32 0.0, %v2606
    %v2608 = vpop.f32.mrb[0].mxu0
    %v2609 = vpop.f32.mrb[0].mxu0
    %v2610 = vadd.f32 0.0, %v2609
    %v2611 = vpop.f32.mrb[0].mxu0
    %2612 = vdwg.mxu0
    %v2615 = vunpack.c.l.b16 %v2309
    %v2616 = vunpack.c.l.b16 %v2310
    %v2617 = vpack.c.b16 %v2616, %v2615
    %v2620 = vsel %vm524, %v2295, 0
    %2622 = vmatprep.subr.bf16.mxu0 0
    %2623 = vmatpush1.bf16.msra.mxu0 %v2617
    %2624 = vmatprep.subr.bf16.mxu0 0
    %2625 = vmatpush1.bf16.msra.mxu0 0
    %2626 = vmatprep.subr.bf16.mxu0 0
    %2627 = vmatpush1.bf16.msra.mxu0 0
    %2628 = vmatprep.subr.bf16.mxu0 0
    %2629 = vmatpush1.bf16.msra.mxu0 0
    %2630 = vmatprep.subr.bf16.mxu0 0
    %2631 = vmatpush1.bf16.msra.mxu0 0
    %2632 = vmatprep.subr.bf16.mxu0 0
    %2633 = vmatpush1.bf16.msra.mxu0 0
    %2634 = vmatprep.subr.bf16.mxu0 0
    %2635 = vmatpush1.bf16.msra.mxu0 0
    %2636 = vmatprep.subr.bf16.mxu0 0
    %2637 = vmatpush1.bf16.msra.mxu0 0
    %2638 = vmatprep.subr.bf16.mxu0 0
    %2639 = vmatpush1.bf16.msra.mxu0 0
    %2640 = vmatprep.subr.bf16.mxu0 0
    %2641 = vmatpush1.bf16.msra.mxu0 0
    %2642 = vmatprep.subr.bf16.mxu0 0
    %2643 = vmatpush1.bf16.msra.mxu0 0
    %2644 = vmatprep.subr.bf16.mxu0 0
    %2645 = vmatpush1.bf16.msra.mxu0 0
    %2646 = vmatprep.subr.bf16.mxu0 0
    %2647 = vmatpush1.bf16.msra.mxu0 0
    %2648 = vmatprep.subr.bf16.mxu0 0
    %2649 = vmatpush1.bf16.msra.mxu0 0
    %2650 = vmatprep.subr.bf16.mxu0 0
    %2651 = vmatpush1.bf16.msra.mxu0 0
    %2652 = vmatprep.subr.bf16.mxu0 0
    %2653 = vmatpush1.bf16.msra.mxu0 0
    %2654 = vmatprep.mubr.bf16.mxu0 0
    %2655 = vmatmul.mubr.bf16.gmra.mrb[0].mxu0 %v2620
    %v2656 = vpop.f32.mrb[0].mxu0
    %v2657 = vadd.f32 0.0, %v2656
    %v2658 = vpop.f32.mrb[0].mxu0
    %v2659 = vpop.f32.mrb[0].mxu0
    %v2660 = vadd.f32 0.0, %v2659
    %v2661 = vpop.f32.mrb[0].mxu0
    %2662 = vdwg.mxu0
    %v2665 = vunpack.c.l.b16 %v2311
    %v2666 = vunpack.c.l.b16 %v2312
    %v2667 = vpack.c.b16 %v2666, %v2665
    %v2670 = vsel %vm524, %v2296, 0
    %2672 = vmatprep.subr.bf16.mxu0 0
    %2673 = vmatpush1.bf16.msra.mxu0 %v2667
    %2674 = vmatprep.subr.bf16.mxu0 0
    %2675 = vmatpush1.bf16.msra.mxu0 0
    %2676 = vmatprep.subr.bf16.mxu0 0
    %2677 = vmatpush1.bf16.msra.mxu0 0
    %2678 = vmatprep.subr.bf16.mxu0 0
    %2679 = vmatpush1.bf16.msra.mxu0 0
    %2680 = vmatprep.subr.bf16.mxu0 0
    %2681 = vmatpush1.bf16.msra.mxu0 0
    %2682 = vmatprep.subr.bf16.mxu0 0
    %2683 = vmatpush1.bf16.msra.mxu0 0
    %2684 = vmatprep.subr.bf16.mxu0 0
    %2685 = vmatpush1.bf16.msra.mxu0 0
    %2686 = vmatprep.subr.bf16.mxu0 0
    %2687 = vmatpush1.bf16.msra.mxu0 0
    %2688 = vmatprep.subr.bf16.mxu0 0
    %2689 = vmatpush1.bf16.msra.mxu0 0
    %2690 = vmatprep.subr.bf16.mxu0 0
    %2691 = vmatpush1.bf16.msra.mxu0 0
    %2692 = vmatprep.subr.bf16.mxu0 0
    %2693 = vmatpush1.bf16.msra.mxu0 0
    %2694 = vmatprep.subr.bf16.mxu0 0
    %2695 = vmatpush1.bf16.msra.mxu0 0
    %2696 = vmatprep.subr.bf16.mxu0 0
    %2697 = vmatpush1.bf16.msra.mxu0 0
    %2698 = vmatprep.subr.bf16.mxu0 0
    %2699 = vmatpush1.bf16.msra.mxu0 0
    %2700 = vmatprep.subr.bf16.mxu0 0
    %2701 = vmatpush1.bf16.msra.mxu0 0
    %2702 = vmatprep.subr.bf16.mxu0 0
    %2703 = vmatpush1.bf16.msra.mxu0 0
    %2704 = vmatprep.mubr.bf16.mxu0 0
    %2705 = vmatmul.mubr.bf16.gmra.mrb[0].mxu0 %v2670
    %v2706 = vpop.f32.mrb[0].mxu0
    %v2707 = vadd.f32 0.0, %v2706
    %v2708 = vpop.f32.mrb[0].mxu0
    %v2709 = vpop.f32.mrb[0].mxu0
    %v2710 = vadd.f32 0.0, %v2709
    %v2711 = vpop.f32.mrb[0].mxu0
    %2712 = vdwg.mxu0
    %v2713 = vadd.f32 %v2357, %v2407
    %v2714 = vadd.f32 %v2713, %v2457
    %v2715 = vadd.f32 %v2714, %v2507
    %v2716 = vadd.f32 %v2715, %v2557
    %v2717 = vadd.f32 %v2716, %v2607
    %v2718 = vadd.f32 %v2717, %v2657
    %v2719 = vadd.f32 %v2718, %v2707
    %v2720 = vadd.f32 %v2360, %v2410
    %v2721 = vadd.f32 %v2720, %v2460
    %v2722 = vadd.f32 %v2721, %v2510
    %v2723 = vadd.f32 %v2722, %v2560
    %v2724 = vadd.f32 %v2723, %v2610
    %v2725 = vadd.f32 %v2724, %v2660
    %v2726 = vadd.f32 %v2725, %v2710
    %v2727 = vld [vmem:[%s6] sm:$0x1]
    %v2729 = vlaneseq
    %v2730 = vshrl.u32 %v2729, 7
    %v2731 = vsub.s32 0, %v2730
    %v2732 = vrot.slane %v2727, %v2731
    %v2734 = vadd.f32 %v2719, %v2732
    %v2735 = vadd.f32 %v2726, %v2732
    %v2736 = vadd.f32 %v137, %v2734
    %v2737 = vadd.f32 %v138, %v2735
    %2738 = vadd.xlane.f32.xlu0 %v2736
    %v2739 = vpop.xlane.xlu0 %2738
    %2740 = vadd.xlane.f32.xlu0 %v2737
    %v2741 = vpop.xlane.xlu0 %2740
    %v2742 = vmul.f32 %v2739, %v143
    %v2743 = vmul.f32 %v2741, %v143
    %v2744 = vsub.f32 %v2736, %v2742
    %v2745 = vsub.f32 %v2737, %v2743
    %v2746 = vmul.f32 %v2744, %v2744
    %v2747 = vmul.f32 %v2745, %v2745
    %2748 = vadd.xlane.f32.xlu0 %v2746
    %v2749 = vpop.xlane.xlu0 %2748
    %2750 = vadd.xlane.f32.xlu0 %v2747
    %v2751 = vpop.xlane.xlu0 %2750
    %v2752 = vmul.f32 %v2749, %v143
    %v2753 = vmul.f32 %v2751, %v143
    %v2754 = vadd.f32 %v2752, 1e-05
    %v2755 = vadd.f32 %v2753, 1e-05
    %v2756 = vrsqrt.pop %v2754
    %v2757 = vrsqrt.pop %v2755
    %v2758 = vmul.f32 %v2744, %v2756
    %v2759 = vmul.f32 %v2745, %v2757
    %v2760 = vld [vmem:[%s7] sm:$0x1]
    %v2762 = vlaneseq
    %v2763 = vshrl.u32 %v2762, 7
    %v2764 = vsub.s32 0, %v2763
    %v2765 = vrot.slane %v2760, %v2764
    %v2767 = vmul.f32 %v2758, %v2765
    %v2768 = vmul.f32 %v2759, %v2765
    %v2769 = vld [vmem:[%s8] sm:$0x1]
    %v2771 = vlaneseq
    %v2772 = vshrl.u32 %v2771, 7
    %v2773 = vsub.s32 0, %v2772
    %v2774 = vrot.slane %v2769, %v2773
    %v2776 = vadd.f32 %v2767, %v2774
    %v2777 = vadd.f32 %v2768, %v2774
    %v2778 = vpack.c.bf16 %v2777, %v2776
    %v2779 = vld [vmem:[#allocation11] sm:$0xff]
    %v2780 = vld [vmem:[#allocation11 + $0x8] sm:$0xff]
    %v2781 = vld [vmem:[#allocation11 + $0x10] sm:$0xff]
    %v2782 = vld [vmem:[#allocation11 + $0x18] sm:$0xff]
    %v2783 = vld [vmem:[#allocation11 + $0x20] sm:$0xff]
    %v2784 = vld [vmem:[#allocation11 + $0x28] sm:$0xff]
    %v2785 = vld [vmem:[#allocation11 + $0x30] sm:$0xff]
    %v2786 = vld [vmem:[#allocation11 + $0x38] sm:$0xff]
    %v2787 = vld [vmem:[#allocation11 + $0x40] sm:$0xff]
    %v2788 = vld [vmem:[#allocation11 + $0x48] sm:$0xff]
    %v2789 = vld [vmem:[#allocation11 + $0x50] sm:$0xff]
    %v2790 = vld [vmem:[#allocation11 + $0x58] sm:$0xff]
    %v2791 = vld [vmem:[#allocation11 + $0x60] sm:$0xff]
    %v2792 = vld [vmem:[#allocation11 + $0x68] sm:$0xff]
    %v2793 = vld [vmem:[#allocation11 + $0x70] sm:$0xff]
    %v2794 = vld [vmem:[#allocation11 + $0x78] sm:$0xff]
    %v2795 = vld [vmem:[#allocation11 + $0x80] sm:$0xff]
    %v2796 = vld [vmem:[#allocation11 + $0x88] sm:$0xff]
    %v2797 = vld [vmem:[#allocation11 + $0x90] sm:$0xff]
    %v2798 = vld [vmem:[#allocation11 + $0x98] sm:$0xff]
    %v2799 = vld [vmem:[#allocation11 + $0xa0] sm:$0xff]
    %v2800 = vld [vmem:[#allocation11 + $0xa8] sm:$0xff]
    %v2801 = vld [vmem:[#allocation11 + $0xb0] sm:$0xff]
    %v2802 = vld [vmem:[#allocation11 + $0xb8] sm:$0xff]
    %v2803 = vld [vmem:[#allocation11 + $0xc0] sm:$0xff]
    %v2804 = vld [vmem:[#allocation11 + $0xc8] sm:$0xff]
    %v2805 = vld [vmem:[#allocation11 + $0xd0] sm:$0xff]
    %v2806 = vld [vmem:[#allocation11 + $0xd8] sm:$0xff]
    %v2807 = vld [vmem:[#allocation11 + $0xe0] sm:$0xff]
    %v2808 = vld [vmem:[#allocation11 + $0xe8] sm:$0xff]
    %v2809 = vld [vmem:[#allocation11 + $0xf0] sm:$0xff]
    %v2810 = vld [vmem:[#allocation11 + $0xf8] sm:$0xff]
    %v2811 = vld [vmem:[%s10] sm:$0xf]
    %v2813 = vlaneseq
    %v2814 = vshrl.u32 %v2813, 7
    %v2815 = vsub.s32 0, %v2814
    %v2816 = vrot.slane %v2811, %v2815
    %v2817 = vlaneseq
    %v2818 = vshrl.u32 %v2817, 7
    %v2819 = vsub.s32 1, %v2818
    %v2820 = vrot.slane %v2811, %v2819
    %v2821 = vlaneseq
    %v2822 = vshrl.u32 %v2821, 7
    %v2823 = vsub.s32 2, %v2822
    %v2824 = vrot.slane %v2811, %v2823
    %v2825 = vlaneseq
    %v2826 = vshrl.u32 %v2825, 7
    %v2827 = vsub.s32 3, %v2826
    %v2828 = vrot.slane %v2811, %v2827
    %v2865 = vunpack.c.l.b16 %v2779
    %v2866 = vunpack.c.h.b16 %v2779
    %v2867 = vunpack.c.l.b16 %v2780
    %v2868 = vunpack.c.h.b16 %v2780
    %v2869 = vunpack.c.l.b16 %v2781
    %v2870 = vunpack.c.h.b16 %v2781
    %v2871 = vunpack.c.l.b16 %v2782
    %v2872 = vunpack.c.h.b16 %v2782
    %v2873 = vunpack.c.l.b16 %v2783
    %v2874 = vunpack.c.h.b16 %v2783
    %v2875 = vunpack.c.l.b16 %v2784
    %v2876 = vunpack.c.h.b16 %v2784
    %v2877 = vunpack.c.l.b16 %v2785
    %v2878 = vunpack.c.h.b16 %v2785
    %v2879 = vunpack.c.l.b16 %v2786
    %v2880 = vunpack.c.h.b16 %v2786
    %v2881 = vunpack.c.l.b16 %v2787
    %v2882 = vunpack.c.h.b16 %v2787
    %v2883 = vunpack.c.l.b16 %v2788
    %v2884 = vunpack.c.h.b16 %v2788
    %v2885 = vunpack.c.l.b16 %v2789
    %v2886 = vunpack.c.h.b16 %v2789
    %v2887 = vunpack.c.l.b16 %v2790
    %v2888 = vunpack.c.h.b16 %v2790
    %v2889 = vunpack.c.l.b16 %v2791
    %v2890 = vunpack.c.h.b16 %v2791
    %v2891 = vunpack.c.l.b16 %v2792
    %v2892 = vunpack.c.h.b16 %v2792
    %v2893 = vunpack.c.l.b16 %v2793
    %v2894 = vunpack.c.h.b16 %v2793
    %v2895 = vunpack.c.l.b16 %v2794
    %v2896 = vunpack.c.h.b16 %v2794
    %v2897 = vunpack.c.l.b16 %v2795
    %v2898 = vunpack.c.h.b16 %v2795
    %v2899 = vunpack.c.l.b16 %v2796
    %v2900 = vunpack.c.h.b16 %v2796
    %v2901 = vunpack.c.l.b16 %v2797
    %v2902 = vunpack.c.h.b16 %v2797
    %v2903 = vunpack.c.l.b16 %v2798
    %v2904 = vunpack.c.h.b16 %v2798
    %v2905 = vunpack.c.l.b16 %v2799
    %v2906 = vunpack.c.h.b16 %v2799
    %v2907 = vunpack.c.l.b16 %v2800
    %v2908 = vunpack.c.h.b16 %v2800
    %v2909 = vunpack.c.l.b16 %v2801
    %v2910 = vunpack.c.h.b16 %v2801
    %v2911 = vunpack.c.l.b16 %v2802
    %v2912 = vunpack.c.h.b16 %v2802
    %v2913 = vunpack.c.l.b16 %v2803
    %v2914 = vunpack.c.h.b16 %v2803
    %v2915 = vunpack.c.l.b16 %v2804
    %v2916 = vunpack.c.h.b16 %v2804
    %v2917 = vunpack.c.l.b16 %v2805
    %v2918 = vunpack.c.h.b16 %v2805
    %v2919 = vunpack.c.l.b16 %v2806
    %v2920 = vunpack.c.h.b16 %v2806
    %v2921 = vunpack.c.l.b16 %v2807
    %v2922 = vunpack.c.h.b16 %v2807
    %v2923 = vunpack.c.l.b16 %v2808
    %v2924 = vunpack.c.h.b16 %v2808
    %v2925 = vunpack.c.l.b16 %v2809
    %v2926 = vunpack.c.h.b16 %v2809
    %v2927 = vunpack.c.l.b16 %v2810
    %v2928 = vunpack.c.h.b16 %v2810
    %v2929 = vpack.c.b16 %v2869, %v2865
    %v2930 = vpack.c.b16 %v2870, %v2866
    %v2931 = vpack.c.b16 %v2871, %v2867
    %v2932 = vpack.c.b16 %v2872, %v2868
    %v2933 = vpack.c.b16 %v2877, %v2873
    %v2934 = vpack.c.b16 %v2878, %v2874
    %v2935 = vpack.c.b16 %v2879, %v2875
    %v2936 = vpack.c.b16 %v2880, %v2876
    %v2937 = vpack.c.b16 %v2885, %v2881
    %v2938 = vpack.c.b16 %v2886, %v2882
    %v2939 = vpack.c.b16 %v2887, %v2883
    %v2940 = vpack.c.b16 %v2888, %v2884
    %v2941 = vpack.c.b16 %v2893, %v2889
    %v2942 = vpack.c.b16 %v2894, %v2890
    %v2943 = vpack.c.b16 %v2895, %v2891
    %v2944 = vpack.c.b16 %v2896, %v2892
    %v2945 = vpack.c.b16 %v2901, %v2897
    %v2946 = vpack.c.b16 %v2902, %v2898
    %v2947 = vpack.c.b16 %v2903, %v2899
    %v2948 = vpack.c.b16 %v2904, %v2900
    %v2949 = vpack.c.b16 %v2909, %v2905
    %v2950 = vpack.c.b16 %v2910, %v2906
    %v2951 = vpack.c.b16 %v2911, %v2907
    %v2952 = vpack.c.b16 %v2912, %v2908
    %v2953 = vpack.c.b16 %v2917, %v2913
    %v2954 = vpack.c.b16 %v2918, %v2914
    %v2955 = vpack.c.b16 %v2919, %v2915
    %v2956 = vpack.c.b16 %v2920, %v2916
    %v2957 = vpack.c.b16 %v2925, %v2921
    %v2958 = vpack.c.b16 %v2926, %v2922
    %v2959 = vpack.c.b16 %v2927, %v2923
    %v2960 = vpack.c.b16 %v2928, %v2924
    %2993 = vmatprep.subr.bf16.mxu0 %v2930
    %2994 = vmatpush1.bf16.msra.mxu0 %v2929
    %2995 = vmatprep.subr.bf16.mxu0 %v2934
    %2996 = vmatpush1.bf16.msra.mxu0 %v2933
    %2997 = vmatprep.subr.bf16.mxu0 %v2938
    %2998 = vmatpush1.bf16.msra.mxu0 %v2937
    %2999 = vmatprep.subr.bf16.mxu0 %v2942
    %3000 = vmatpush1.bf16.msra.mxu0 %v2941
    %3001 = vmatprep.subr.bf16.mxu0 %v2946
    %3002 = vmatpush1.bf16.msra.mxu0 %v2945
    %3003 = vmatprep.subr.bf16.mxu0 %v2950
    %3004 = vmatpush1.bf16.msra.mxu0 %v2949
    %3005 = vmatprep.subr.bf16.mxu0 %v2954
    %3006 = vmatpush1.bf16.msra.mxu0 %v2953
    %3007 = vmatprep.subr.bf16.mxu0 %v2958
    %3008 = vmatpush1.bf16.msra.mxu0 %v2957
    %3009 = vmatprep.subr.bf16.mxu0 0
    %3010 = vmatpush1.bf16.msra.mxu0 0
    %3011 = vmatprep.subr.bf16.mxu0 0
    %3012 = vmatpush1.bf16.msra.mxu0 0
    %3013 = vmatprep.subr.bf16.mxu0 0
    %3014 = vmatpush1.bf16.msra.mxu0 0
    %3015 = vmatprep.subr.bf16.mxu0 0
    %3016 = vmatpush1.bf16.msra.mxu0 0
    %3017 = vmatprep.subr.bf16.mxu0 0
    %3018 = vmatpush1.bf16.msra.mxu0 0
    %3019 = vmatprep.subr.bf16.mxu0 0
    %3020 = vmatpush1.bf16.msra.mxu0 0
    %3021 = vmatprep.subr.bf16.mxu0 0
    %3022 = vmatpush1.bf16.msra.mxu0 0
    %3023 = vmatprep.subr.bf16.mxu0 0
    %3024 = vmatpush1.bf16.msra.mxu0 0
    %3025 = vmatprep.mubr.bf16.mxu0 0
    %3026 = vmatmul.mubr.bf16.gmra.mrb[0].mxu0 %v2778
    %v3027 = vpop.f32.mrb[0].mxu0
    %v3028 = vadd.f32 %v2816, %v3027
    %v3029 = vpop.f32.mrb[0].mxu0
    %v3030 = vadd.f32 %v2820, %v3029
    %v3031 = vpop.f32.mrb[0].mxu0
    %v3032 = vadd.f32 %v2816, %v3031
    %v3033 = vpop.f32.mrb[0].mxu0
    %v3034 = vadd.f32 %v2820, %v3033
    %3035 = vdwg.mxu0
    %3036 = vmatprep.subr.bf16.mxu0 %v2932
    %3037 = vmatpush1.bf16.msra.mxu0 %v2931
    %3038 = vmatprep.subr.bf16.mxu0 %v2936
    %3039 = vmatpush1.bf16.msra.mxu0 %v2935
    %3040 = vmatprep.subr.bf16.mxu0 %v2940
    %3041 = vmatpush1.bf16.msra.mxu0 %v2939
    %3042 = vmatprep.subr.bf16.mxu0 %v2944
    %3043 = vmatpush1.bf16.msra.mxu0 %v2943
    %3044 = vmatprep.subr.bf16.mxu0 %v2948
    %3045 = vmatpush1.bf16.msra.mxu0 %v2947
    %3046 = vmatprep.subr.bf16.mxu0 %v2952
    %3047 = vmatpush1.bf16.msra.mxu0 %v2951
    %3048 = vmatprep.subr.bf16.mxu0 %v2956
    %3049 = vmatpush1.bf16.msra.mxu0 %v2955
    %3050 = vmatprep.subr.bf16.mxu0 %v2960
    %3051 = vmatpush1.bf16.msra.mxu0 %v2959
    %3052 = vmatprep.subr.bf16.mxu0 0
    %3053 = vmatpush1.bf16.msra.mxu0 0
    %3054 = vmatprep.subr.bf16.mxu0 0
    %3055 = vmatpush1.bf16.msra.mxu0 0
    %3056 = vmatprep.subr.bf16.mxu0 0
    %3057 = vmatpush1.bf16.msra.mxu0 0
    %3058 = vmatprep.subr.bf16.mxu0 0
    %3059 = vmatpush1.bf16.msra.mxu0 0
    %3060 = vmatprep.subr.bf16.mxu0 0
    %3061 = vmatpush1.bf16.msra.mxu0 0
    %3062 = vmatprep.subr.bf16.mxu0 0
    %3063 = vmatpush1.bf16.msra.mxu0 0
    %3064 = vmatprep.subr.bf16.mxu0 0
    %3065 = vmatpush1.bf16.msra.mxu0 0
    %3066 = vmatprep.subr.bf16.mxu0 0
    %3067 = vmatpush1.bf16.msra.mxu0 0
    %3068 = vmatprep.mubr.bf16.mxu0 0
    %3069 = vmatmul.mubr.bf16.gmra.mrb[0].mxu0 %v2778
    %v3070 = vpop.f32.mrb[0].mxu0
    %v3071 = vadd.f32 %v2824, %v3070
    %v3072 = vpop.f32.mrb[0].mxu0
    %v3073 = vadd.f32 %v2828, %v3072
    %v3074 = vpop.f32.mrb[0].mxu0
    %v3075 = vadd.f32 %v2824, %v3074
    %v3076 = vpop.f32.mrb[0].mxu0
    %v3077 = vadd.f32 %v2828, %v3076
    %3078 = vdwg.mxu0
    %v3079 = vmul.f32 %v3028, 0.5
    %v3080 = vmul.f32 %v3030, 0.5
    %v3081 = vmul.f32 %v3071, 0.5
    %v3082 = vmul.f32 %v3073, 0.5
    %v3083 = vmul.f32 %v3032, 0.5
    %v3084 = vmul.f32 %v3034, 0.5
    %v3085 = vmul.f32 %v3075, 0.5
    %v3086 = vmul.f32 %v3077, 0.5
    %v3087 = vmul.f32 %v3028, 0.044715
    %v3088 = vmul.f32 %v3030, 0.044715
    %v3089 = vmul.f32 %v3071, 0.044715
    %v3090 = vmul.f32 %v3073, 0.044715
    %v3091 = vmul.f32 %v3032, 0.044715
    %v3092 = vmul.f32 %v3034, 0.044715
    %v3093 = vmul.f32 %v3075, 0.044715
    %v3094 = vmul.f32 %v3077, 0.044715
    %v3095 = vmul.f32 %v3087, %v3028
    %v3096 = vmul.f32 %v3088, %v3030
    %v3097 = vmul.f32 %v3089, %v3071
    %v3098 = vmul.f32 %v3090, %v3073
    %v3099 = vmul.f32 %v3091, %v3032
    %v3100 = vmul.f32 %v3092, %v3034
    %v3101 = vmul.f32 %v3093, %v3075
    %v3102 = vmul.f32 %v3094, %v3077
    %v3103 = vmul.f32 %v3095, %v3028
    %v3104 = vmul.f32 %v3096, %v3030
    %v3105 = vmul.f32 %v3097, %v3071
    %v3106 = vmul.f32 %v3098, %v3073
    %v3107 = vmul.f32 %v3099, %v3032
    %v3108 = vmul.f32 %v3100, %v3034
    %v3109 = vmul.f32 %v3101, %v3075
    %v3110 = vmul.f32 %v3102, %v3077
    %v3111 = vadd.f32 %v3028, %v3103
    %v3112 = vadd.f32 %v3030, %v3104
    %v3113 = vadd.f32 %v3071, %v3105
    %v3114 = vadd.f32 %v3073, %v3106
    %v3115 = vadd.f32 %v3032, %v3107
    %v3116 = vadd.f32 %v3034, %v3108
    %v3117 = vadd.f32 %v3075, %v3109
    %v3118 = vadd.f32 %v3077, %v3110
    %v3119 = vmul.f32 %v3111, 0.7978846
    %v3120 = vmul.f32 %v3112, 0.7978846
    %v3121 = vmul.f32 %v3113, 0.7978846
    %v3122 = vmul.f32 %v3114, 0.7978846
    %v3123 = vmul.f32 %v3115, 0.7978846
    %v3124 = vmul.f32 %v3116, 0.7978846
    %v3125 = vmul.f32 %v3117, 0.7978846
    %v3126 = vmul.f32 %v3118, 0.7978846
    %v3127 = vtanh.pop %v3119
    %v3128 = vtanh.pop %v3120
    %v3129 = vtanh.pop %v3121
    %v3130 = vtanh.pop %v3122
    %v3131 = vtanh.pop %v3123
    %v3132 = vtanh.pop %v3124
    %v3133 = vtanh.pop %v3125
    %v3134 = vtanh.pop %v3126
    %v3135 = vadd.f32 %v3127, 1.0
    %v3136 = vadd.f32 %v3128, 1.0
    %v3137 = vadd.f32 %v3129, 1.0
    %v3138 = vadd.f32 %v3130, 1.0
    %v3139 = vadd.f32 %v3131, 1.0
    %v3140 = vadd.f32 %v3132, 1.0
    %v3141 = vadd.f32 %v3133, 1.0
    %v3142 = vadd.f32 %v3134, 1.0
    %v3143 = vmul.f32 %v3079, %v3135
    %v3144 = vmul.f32 %v3080, %v3136
    %v3145 = vmul.f32 %v3081, %v3137
    %v3146 = vmul.f32 %v3082, %v3138
    %v3147 = vmul.f32 %v3083, %v3139
    %v3148 = vmul.f32 %v3084, %v3140
    %v3149 = vmul.f32 %v3085, %v3141
    %v3150 = vmul.f32 %v3086, %v3142
    %v3151 = vpack.c.bf16 %v3147, %v3143
    %v3152 = vpack.c.bf16 %v3148, %v3144
    %v3153 = vpack.c.bf16 %v3149, %v3145
    %v3154 = vpack.c.bf16 %v3150, %v3146
    %v3155 = vld [vmem:[#allocation13] sm:$0xf]
    %v3156 = vld [vmem:[#allocation13 + $0x4] sm:$0xf]
    %v3157 = vld [vmem:[#allocation13 + $0x8] sm:$0xf]
    %v3158 = vld [vmem:[#allocation13 + $0xc] sm:$0xf]
    %v3159 = vld [vmem:[#allocation13 + $0x10] sm:$0xf]
    %v3160 = vld [vmem:[#allocation13 + $0x14] sm:$0xf]
    %v3161 = vld [vmem:[#allocation13 + $0x18] sm:$0xf]
    %v3162 = vld [vmem:[#allocation13 + $0x1c] sm:$0xf]
    %v3163 = vld [vmem:[#allocation13 + $0x20] sm:$0xf]
    %v3164 = vld [vmem:[#allocation13 + $0x24] sm:$0xf]
    %v3165 = vld [vmem:[#allocation13 + $0x28] sm:$0xf]
    %v3166 = vld [vmem:[#allocation13 + $0x2c] sm:$0xf]
    %v3167 = vld [vmem:[#allocation13 + $0x30] sm:$0xf]
    %v3168 = vld [vmem:[#allocation13 + $0x34] sm:$0xf]
    %v3169 = vld [vmem:[#allocation13 + $0x38] sm:$0xf]
    %v3170 = vld [vmem:[#allocation13 + $0x3c] sm:$0xf]
    %v3171 = vld [vmem:[#allocation13 + $0x40] sm:$0xf]
    %v3172 = vld [vmem:[#allocation13 + $0x44] sm:$0xf]
    %v3173 = vld [vmem:[#allocation13 + $0x48] sm:$0xf]
    %v3174 = vld [vmem:[#allocation13 + $0x4c] sm:$0xf]
    %v3175 = vld [vmem:[#allocation13 + $0x50] sm:$0xf]
    %v3176 = vld [vmem:[#allocation13 + $0x54] sm:$0xf]
    %v3177 = vld [vmem:[#allocation13 + $0x58] sm:$0xf]
    %v3178 = vld [vmem:[#allocation13 + $0x5c] sm:$0xf]
    %v3179 = vld [vmem:[#allocation13 + $0x60] sm:$0xf]
    %v3180 = vld [vmem:[#allocation13 + $0x64] sm:$0xf]
    %v3181 = vld [vmem:[#allocation13 + $0x68] sm:$0xf]
    %v3182 = vld [vmem:[#allocation13 + $0x6c] sm:$0xf]
    %v3183 = vld [vmem:[#allocation13 + $0x70] sm:$0xf]
    %v3184 = vld [vmem:[#allocation13 + $0x74] sm:$0xf]
    %v3185 = vld [vmem:[#allocation13 + $0x78] sm:$0xf]
    %v3186 = vld [vmem:[#allocation13 + $0x7c] sm:$0xf]
    %v3187 = vld [vmem:[#allocation13 + $0x80] sm:$0xf]
    %v3188 = vld [vmem:[#allocation13 + $0x84] sm:$0xf]
    %v3189 = vld [vmem:[#allocation13 + $0x88] sm:$0xf]
    %v3190 = vld [vmem:[#allocation13 + $0x8c] sm:$0xf]
    %v3191 = vld [vmem:[#allocation13 + $0x90] sm:$0xf]
    %v3192 = vld [vmem:[#allocation13 + $0x94] sm:$0xf]
    %v3193 = vld [vmem:[#allocation13 + $0x98] sm:$0xf]
    %v3194 = vld [vmem:[#allocation13 + $0x9c] sm:$0xf]
    %v3195 = vld [vmem:[#allocation13 + $0xa0] sm:$0xf]
    %v3196 = vld [vmem:[#allocation13 + $0xa4] sm:$0xf]
    %v3197 = vld [vmem:[#allocation13 + $0xa8] sm:$0xf]
    %v3198 = vld [vmem:[#allocation13 + $0xac] sm:$0xf]
    %v3199 = vld [vmem:[#allocation13 + $0xb0] sm:$0xf]
    %v3200 = vld [vmem:[#allocation13 + $0xb4] sm:$0xf]
    %v3201 = vld [vmem:[#allocation13 + $0xb8] sm:$0xf]
    %v3202 = vld [vmem:[#allocation13 + $0xbc] sm:$0xf]
    %v3203 = vld [vmem:[#allocation13 + $0xc0] sm:$0xf]
    %v3204 = vld [vmem:[#allocation13 + $0xc4] sm:$0xf]
    %v3205 = vld [vmem:[#allocation13 + $0xc8] sm:$0xf]
    %v3206 = vld [vmem:[#allocation13 + $0xcc] sm:$0xf]
    %v3207 = vld [vmem:[#allocation13 + $0xd0] sm:$0xf]
    %v3208 = vld [vmem:[#allocation13 + $0xd4] sm:$0xf]
    %v3209 = vld [vmem:[#allocation13 + $0xd8] sm:$0xf]
    %v3210 = vld [vmem:[#allocation13 + $0xdc] sm:$0xf]
    %v3211 = vld [vmem:[#allocation13 + $0xe0] sm:$0xf]
    %v3212 = vld [vmem:[#allocation13 + $0xe4] sm:$0xf]
    %v3213 = vld [vmem:[#allocation13 + $0xe8] sm:$0xf]
    %v3214 = vld [vmem:[#allocation13 + $0xec] sm:$0xf]
    %v3215 = vld [vmem:[#allocation13 + $0xf0] sm:$0xf]
    %v3216 = vld [vmem:[#allocation13 + $0xf4] sm:$0xf]
    %v3217 = vld [vmem:[#allocation13 + $0xf8] sm:$0xf]
    %v3218 = vld [vmem:[#allocation13 + $0xfc] sm:$0xf]
    %v3219 = vld [vmem:[%s12] sm:$0x1]
    %v3221 = vlaneseq
    %v3222 = vshrl.u32 %v3221, 7
    %v3223 = vsub.s32 0, %v3222
    %v3224 = vrot.slane %v3219, %v3223
    %v3290 = vunpack.c.l.b16 %v3155
    %v3291 = vunpack.c.l.b16 %v3156
    %v3292 = vunpack.c.l.b16 %v3157
    %v3293 = vunpack.c.l.b16 %v3158
    %v3294 = vunpack.c.l.b16 %v3159
    %v3295 = vunpack.c.l.b16 %v3160
    %v3296 = vunpack.c.l.b16 %v3161
    %v3297 = vunpack.c.l.b16 %v3162
    %v3298 = vunpack.c.l.b16 %v3163
    %v3299 = vunpack.c.l.b16 %v3164
    %v3300 = vunpack.c.l.b16 %v3165
    %v3301 = vunpack.c.l.b16 %v3166
    %v3302 = vunpack.c.l.b16 %v3167
    %v3303 = vunpack.c.l.b16 %v3168
    %v3304 = vunpack.c.l.b16 %v3169
    %v3305 = vunpack.c.l.b16 %v3170
    %v3306 = vunpack.c.l.b16 %v3171
    %v3307 = vunpack.c.l.b16 %v3172
    %v3308 = vunpack.c.l.b16 %v3173
    %v3309 = vunpack.c.l.b16 %v3174
    %v3310 = vunpack.c.l.b16 %v3175
    %v3311 = vunpack.c.l.b16 %v3176
    %v3312 = vunpack.c.l.b16 %v3177
    %v3313 = vunpack.c.l.b16 %v3178
    %v3314 = vunpack.c.l.b16 %v3179
    %v3315 = vunpack.c.l.b16 %v3180
    %v3316 = vunpack.c.l.b16 %v3181
    %v3317 = vunpack.c.l.b16 %v3182
    %v3318 = vunpack.c.l.b16 %v3183
    %v3319 = vunpack.c.l.b16 %v3184
    %v3320 = vunpack.c.l.b16 %v3185
    %v3321 = vunpack.c.l.b16 %v3186
    %v3322 = vunpack.c.l.b16 %v3187
    %v3323 = vunpack.c.l.b16 %v3188
    %v3324 = vunpack.c.l.b16 %v3189
    %v3325 = vunpack.c.l.b16 %v3190
    %v3326 = vunpack.c.l.b16 %v3191
    %v3327 = vunpack.c.l.b16 %v3192
    %v3328 = vunpack.c.l.b16 %v3193
    %v3329 = vunpack.c.l.b16 %v3194
    %v3330 = vunpack.c.l.b16 %v3195
    %v3331 = vunpack.c.l.b16 %v3196
    %v3332 = vunpack.c.l.b16 %v3197
    %v3333 = vunpack.c.l.b16 %v3198
    %v3334 = vunpack.c.l.b16 %v3199
    %v3335 = vunpack.c.l.b16 %v3200
    %v3336 = vunpack.c.l.b16 %v3201
    %v3337 = vunpack.c.l.b16 %v3202
    %v3338 = vunpack.c.l.b16 %v3203
    %v3339 = vunpack.c.l.b16 %v3204
    %v3340 = vunpack.c.l.b16 %v3205
    %v3341 = vunpack.c.l.b16 %v3206
    %v3342 = vunpack.c.l.b16 %v3207
    %v3343 = vunpack.c.l.b16 %v3208
    %v3344 = vunpack.c.l.b16 %v3209
    %v3345 = vunpack.c.l.b16 %v3210
    %v3346 = vunpack.c.l.b16 %v3211
    %v3347 = vunpack.c.l.b16 %v3212
    %v3348 = vunpack.c.l.b16 %v3213
    %v3349 = vunpack.c.l.b16 %v3214
    %v3350 = vunpack.c.l.b16 %v3215
    %v3351 = vunpack.c.l.b16 %v3216
    %v3352 = vunpack.c.l.b16 %v3217
    %v3353 = vunpack.c.l.b16 %v3218
    %v3354 = vpack.c.b16 %v3291, %v3290
    %v3355 = vpack.c.b16 %v3293, %v3292
    %v3356 = vpack.c.b16 %v3295, %v3294
    %v3357 = vpack.c.b16 %v3297, %v3296
    %v3358 = vpack.c.b16 %v3299, %v3298
    %v3359 = vpack.c.b16 %v3301, %v3300
    %v3360 = vpack.c.b16 %v3303, %v3302
    %v3361 = vpack.c.b16 %v3305, %v3304
    %v3362 = vpack.c.b16 %v3307, %v3306
    %v3363 = vpack.c.b16 %v3309, %v3308
    %v3364 = vpack.c.b16 %v3311, %v3310
    %v3365 = vpack.c.b16 %v3313, %v3312
    %v3366 = vpack.c.b16 %v3315, %v3314
    %v3367 = vpack.c.b16 %v3317, %v3316
    %v3368 = vpack.c.b16 %v3319, %v3318
    %v3369 = vpack.c.b16 %v3321, %v3320
    %v3370 = vpack.c.b16 %v3323, %v3322
    %v3371 = vpack.c.b16 %v3325, %v3324
    %v3372 = vpack.c.b16 %v3327, %v3326
    %v3373 = vpack.c.b16 %v3329, %v3328
    %v3374 = vpack.c.b16 %v3331, %v3330
    %v3375 = vpack.c.b16 %v3333, %v3332
    %v3376 = vpack.c.b16 %v3335, %v3334
    %v3377 = vpack.c.b16 %v3337, %v3336
    %v3378 = vpack.c.b16 %v3339, %v3338
    %v3379 = vpack.c.b16 %v3341, %v3340
    %v3380 = vpack.c.b16 %v3343, %v3342
    %v3381 = vpack.c.b16 %v3345, %v3344
    %v3382 = vpack.c.b16 %v3347, %v3346
    %v3383 = vpack.c.b16 %v3349, %v3348
    %v3384 = vpack.c.b16 %v3351, %v3350
    %v3385 = vpack.c.b16 %v3353, %v3352
    %3418 = vmatprep.subr.bf16.mxu0 0
    %3419 = vmatpush1.bf16.msra.mxu0 %v3354
    %3420 = vmatprep.subr.bf16.mxu0 0
    %3421 = vmatpush1.bf16.msra.mxu0 %v3355
    %3422 = vmatprep.subr.bf16.mxu0 0
    %3423 = vmatpush1.bf16.msra.mxu0 %v3356
    %3424 = vmatprep.subr.bf16.mxu0 0
    %3425 = vmatpush1.bf16.msra.mxu0 %v3357
    %3426 = vmatprep.subr.bf16.mxu0 0
    %3427 = vmatpush1.bf16.msra.mxu0 %v3358
    %3428 = vmatprep.subr.bf16.mxu0 0
    %3429 = vmatpush1.bf16.msra.mxu0 %v3359
    %3430 = vmatprep.subr.bf16.mxu0 0
    %3431 = vmatpush1.bf16.msra.mxu0 %v3360
    %3432 = vmatprep.subr.bf16.mxu0 0
    %3433 = vmatpush1.bf16.msra.mxu0 %v3361
    %3434 = vmatprep.subr.bf16.mxu0 0
    %3435 = vmatpush1.bf16.msra.mxu0 %v3362
    %3436 = vmatprep.subr.bf16.mxu0 0
    %3437 = vmatpush1.bf16.msra.mxu0 %v3363
    %3438 = vmatprep.subr.bf16.mxu0 0
    %3439 = vmatpush1.bf16.msra.mxu0 %v3364
    %3440 = vmatprep.subr.bf16.mxu0 0
    %3441 = vmatpush1.bf16.msra.mxu0 %v3365
    %3442 = vmatprep.subr.bf16.mxu0 0
    %3443 = vmatpush1.bf16.msra.mxu0 %v3366
    %3444 = vmatprep.subr.bf16.mxu0 0
    %3445 = vmatpush1.bf16.msra.mxu0 %v3367
    %3446 = vmatprep.subr.bf16.mxu0 0
    %3447 = vmatpush1.bf16.msra.mxu0 %v3368
    %3448 = vmatprep.subr.bf16.mxu0 0
    %3449 = vmatpush1.bf16.msra.mxu0 %v3369
    %3450 = vmatprep.mubr.bf16.mxu0 %v3152
    %3451 = vmatmul.mubr.bf16.gmra.mrb[0].mxu0 %v3151
    %v3452 = vpop.f32.mrb[0].mxu0
    %v3453 = vadd.f32 %v3224, %v3452
    %v3454 = vpop.f32.mrb[0].mxu0
    %v3455 = vpop.f32.mrb[0].mxu0
    %v3456 = vadd.f32 %v3224, %v3455
    %v3457 = vpop.f32.mrb[0].mxu0
    %3458 = vdwg.mxu0
    %3459 = vmatprep.subr.bf16.mxu0 0
    %3460 = vmatpush1.bf16.msra.mxu0 %v3370
    %3461 = vmatprep.subr.bf16.mxu0 0
    %3462 = vmatpush1.bf16.msra.mxu0 %v3371
    %3463 = vmatprep.subr.bf16.mxu0 0
    %3464 = vmatpush1.bf16.msra.mxu0 %v3372
    %3465 = vmatprep.subr.bf16.mxu0 0
    %3466 = vmatpush1.bf16.msra.mxu0 %v3373
    %3467 = vmatprep.subr.bf16.mxu0 0
    %3468 = vmatpush1.bf16.msra.mxu0 %v3374
    %3469 = vmatprep.subr.bf16.mxu0 0
    %3470 = vmatpush1.bf16.msra.mxu0 %v3375
    %3471 = vmatprep.subr.bf16.mxu0 0
    %3472 = vmatpush1.bf16.msra.mxu0 %v3376
    %3473 = vmatprep.subr.bf16.mxu0 0
    %3474 = vmatpush1.bf16.msra.mxu0 %v3377
    %3475 = vmatprep.subr.bf16.mxu0 0
    %3476 = vmatpush1.bf16.msra.mxu0 %v3378
    %3477 = vmatprep.subr.bf16.mxu0 0
    %3478 = vmatpush1.bf16.msra.mxu0 %v3379
    %3479 = vmatprep.subr.bf16.mxu0 0
    %3480 = vmatpush1.bf16.msra.mxu0 %v3380
    %3481 = vmatprep.subr.bf16.mxu0 0
    %3482 = vmatpush1.bf16.msra.mxu0 %v3381
    %3483 = vmatprep.subr.bf16.mxu0 0
    %3484 = vmatpush1.bf16.msra.mxu0 %v3382
    %3485 = vmatprep.subr.bf16.mxu0 0
    %3486 = vmatpush1.bf16.msra.mxu0 %v3383
    %3487 = vmatprep.subr.bf16.mxu0 0
    %3488 = vmatpush1.bf16.msra.mxu0 %v3384
    %3489 = vmatprep.subr.bf16.mxu0 0
    %3490 = vmatpush1.bf16.msra.mxu0 %v3385
    %3491 = vmatprep.mubr.bf16.mxu0 %v3154
    %3492 = vmatmul.mubr.bf16.gmra.mrb[0].mxu0 %v3153
    %v3493 = vpop.f32.mrb[0].mxu0
    %v3494 = vadd.f32 %v3453, %v3493
    %v3495 = vpop.f32.mrb[0].mxu0
    %v3496 = vpop.f32.mrb[0].mxu0
    %v3497 = vadd.f32 %v3456, %v3496
    %v3498 = vpop.f32.mrb[0].mxu0
    %3499 = vdwg.mxu0
    %v3500 = vadd.f32 %v2736, %v3494
    %v3501 = vadd.f32 %v2737, %v3497
    %3502 = vst [vmem:[#allocation14] sm:$0xff] %v3500
    %3503 = vst [vmem:[#allocation14 + $0x8] sm:$0xff] %v3501
    // Predicated region
    $region82: #{tpu_custom_call.1} parent=1 // pred_check
      _
    $region83: #{tpu_custom_call.1} parent=1 // pred_check_branch
      %3505 = sbr.rel (0) target = $region85
    $region84: #{tpu_custom_call.1} parent=1 // pred_region
      %s3507 = ssub.s32 256, 256
      %3508 = vsyncadd [#allocation4], %s3507
      %s3509 = sshll.u32 [#allocation14], 4
      %s3510 = int_to_ptr.vmem [resolvable:$true] %s3509
      %3515 = dma.vmem_to_hbm [thread:$0]  %s3510, 256, %s13, [#allocation4], 128, 128, 8
    $region85: #{tpu_custom_call.1} parent=1 // pred_fallthru
      _
    // Predicated region
    $region86: #{tpu_custom_call.1} parent=1 // pred_check
      _
    $region87: #{tpu_custom_call.1} parent=1 // pred_check_branch
      %3517 = sbr.rel (0) target = $region89
    $region88: #{tpu_custom_call.1} parent=1 // pred_region
      %3518 = dma.done [#allocation4], 256
    $region89: #{tpu_custom_call.1} parent=1 // pred_fallthru
      _
    %3519 = vsyncpa [#allocation3], 1
    %3520 = vsyncpa [#allocation6], 1
    %3521 = vsyncpa [#allocation9], 1
    %3522 = vsyncpa [#allocation12], 1
    %3523 = vsyncpa [#allocation4], 1

</llo_original>
